<compile_context>
chip_gen: v6e
topology: v6e:2x2x1
jax: 0.10.0
libtpu: 0.0.40
codegen_flags: <defaults>
</compile_context>

<pallas_src>
import functools
import numpy as np

import jax
import jax.numpy as jnp
from jax.experimental import pallas as pl
from jax.experimental.pallas import tpu as pltpu

F32 = jnp.float32
BF16 = jnp.bfloat16


def _layernorm_f32(x, gamma, beta, eps=1e-5):
    # One-pass stats: var = E[x^2] - mu^2 (saves a reduction + a pass over x).
    x = x.astype(F32)
    mu = jnp.mean(x, axis=-1, keepdims=True)
    var = jnp.maximum(jnp.mean(x * x, axis=-1, keepdims=True) - mu * mu, 0.0)
    return (x - mu) * jax.lax.rsqrt(var + eps) * gamma + beta


# --------------------------------------------------------------------------
# Pass 1: LN1 + fused QKV projection.  grid = (B, N // tq), both parallel.
# Outputs head-major bf16 q/k/v of shape (B, H, N, hd); Q is pre-scaled.
# --------------------------------------------------------------------------
def qkv_kernel(x_ref, g1_ref, b1_ref, wqkv_ref, q_ref, k_ref, v_ref, *, num_heads):
    x = x_ref[...]                                 # (tr, D)
    tr, D = x.shape
    hd = D // num_heads

    h = _layernorm_f32(x, g1_ref[0], b1_ref[0])
    # softmax scale already folded into the Q columns of w_qkv (wrapper-side)
    qkv = jnp.dot(h.astype(BF16), wqkv_ref[...], preferred_element_type=F32)   # (tr, 3D)

    def heads(t):                                  # cast to bf16 BEFORE the relayout
        return jnp.transpose(t.astype(BF16).reshape(tr, num_heads, hd), (1, 0, 2))

    q_ref[...] = heads(qkv[:, 0 * D:1 * D])
    k_ref[...] = heads(qkv[:, 1 * D:2 * D])
    v_ref[...] = heads(qkv[:, 2 * D:3 * D])


# --------------------------------------------------------------------------
# Pass 2: flash attention (online softmax over K/V tiles) + proj + residual
#         + LN2 + MLP + residual, per (batch, q-tile).  grid = (B, N // tq).
# --------------------------------------------------------------------------
def attn_mlp_kernel(q_ref, k_ref, v_ref, x_ref,
                    wproj_ref, bproj_ref, g2_ref, b2_ref,
                    wfc1_ref, bfc1_ref, wfc2_ref, bfc2_ref,
                    out_ref, *, tk, approx_gelu):
    H, tq, hd = q_ref.shape
    N = k_ref.shape[1]
    D = x_ref.shape[-1]
    n_kv = N // tk

    q = q_ref[...]                                 # (H, tq, hd) bf16, pre-scaled

    def kv_step(j, carry):
        m, l, acc = carry
        start = pl.multiple_of(j * tk, tk)
        k_t = k_ref[:, pl.ds(start, tk), :]        # (H, tk, hd) bf16
        v_t = v_ref[:, pl.ds(start, tk), :]
        s = jnp.einsum('hqd,hkd->hqk', q, k_t, preferred_element_type=F32)  # (H, tq, tk)
        m_new = jnp.maximum(m, jnp.max(s, axis=-1, keepdims=True))
        alpha = jnp.exp(m - m_new)
        p = jnp.exp(s - m_new)                     # un-normalized probabilities
        l = alpha * l + jnp.sum(p, axis=-1, keepdims=True)
        acc = alpha * acc + jnp.einsum('hqk,hkd->hqd', p.astype(BF16), v_t,
                                       preferred_element_type=F32)
        return m_new, l, acc

    m0 = jnp.full((H, tq, 1), -jnp.inf, F32)
    l0 = jnp.zeros((H, tq, 1), F32)
    a0 = jnp.zeros((H, tq, hd), F32)
    m, l, acc = jax.lax.fori_loop(0, n_kv, kv_step, (m0, l0, a0),
                                  unroll=(n_kv <= 4))

    # Deferred softmax normalization: scale the (H, tq, hd) accumulator,
    # not the (H, tq, N) probabilities.  EUP reciprocal, not VALU division.
    o = acc * pl.reciprocal(l, approx=True)
    o = jnp.transpose(o.astype(BF16), (1, 0, 2)).reshape(tq, D)   # bf16 relayout

    attn_out = jnp.dot(o, wproj_ref[...], preferred_element_type=F32) + bproj_ref[0]
    x1 = x_ref[...].astype(F32) + attn_out                         # f32 residual

    # ---------- MLP branch: x1 + fc2(GELU(fc1(LN2(x1)))) ----------
    h2 = _layernorm_f32(x1, g2_ref[0], b2_ref[0])
    h2 = jnp.dot(h2.astype(BF16), wfc1_ref[...], preferred_element_type=F32) + bfc1_ref[0]
    # tanh-approx GELU (EUP) per perf review; set approx_gelu=False for exact erf.
    h2 = jax.nn.gelu(h2, approximate=approx_gelu)
    h2 = jnp.dot(h2.astype(BF16), wfc2_ref[...], preferred_element_type=F32) + bfc2_ref[0]

    out_ref[...] = (x1 + h2).astype(out_ref.dtype)


# --------------------------------------------------------------------------
# Wrapper
# --------------------------------------------------------------------------
def _vmem_limit_bytes():
    # ~3/4 of physical VMEM: ~96 MiB on v5e/v6e (128 MiB), ~48 MiB on v7x (64 MiB).
    try:
        cap = getattr(pltpu.get_tpu_info(), "vmem_capacity_bytes", None)
        if cap:
            return int(min(cap * 3 // 4, 100 * 1024 * 1024))
    except Exception:
        pass
    return 48 * 1024 * 1024


def _rep(shape):
    zeros = (0,) * len(shape)
    # Constant index map -> stays resident; single-buffered (no re-DMA, so
    # double-buffering weights would only waste VMEM).
    return pl.BlockSpec(shape, lambda *_: zeros, pipeline_mode=pl.Buffered(1))


def vit_block(x, params, *, num_heads, tq=128, tk=128, approx_gelu=True):
    B, N, D = x.shape
    Hm = params["w_fc1"].shape[1]
    hd = D // num_heads
    scale = hd ** -0.5
    tq = min(tq, N)
    tk = min(tk, N)
    assert D % num_heads == 0 and N % tq == 0 and N % tk == 0

    # One-time parameter transforms (outside the kernel):
    #  - fold the softmax scale into the Q columns of w_qkv,
    #  - store all matmul weights in bf16 (MXU-native, halves resident VMEM).
    w_qkv = params["w_qkv"].astype(F32).at[:, :D].multiply(scale).astype(BF16)
    w_proj = params["w_proj"].astype(BF16)
    w_fc1 = params["w_fc1"].astype(BF16)
    w_fc2 = params["w_fc2"].astype(BF16)

    cparams = pltpu.CompilerParams(
        dimension_semantics=("parallel", "parallel"),
        vmem_limit_bytes=_vmem_limit_bytes(),
    )

    # ---- pass 1: LN1 + QKV projection -------------------------------------
    q, k, v = pl.pallas_call(
        functools.partial(qkv_kernel, num_heads=num_heads),
        out_shape=(
            jax.ShapeDtypeStruct((B, num_heads, N, hd), BF16),
            jax.ShapeDtypeStruct((B, num_heads, N, hd), BF16),
            jax.ShapeDtypeStruct((B, num_heads, N, hd), BF16),
        ),
        grid=(B, N // tq),
        in_specs=[
            pl.BlockSpec((None, tq, D), lambda b, i: (b, i, 0)),   # x row tile
            _rep((1, D)), _rep((1, D)),                            # norm1 gamma, beta
            _rep((D, 3 * D)),                                      # w_qkv (bf16, Q pre-scaled)
        ],
        out_specs=(
            pl.BlockSpec((None, num_heads, tq, hd), lambda b, i: (b, 0, i, 0)),
            pl.BlockSpec((None, num_heads, tq, hd), lambda b, i: (b, 0, i, 0)),
            pl.BlockSpec((None, num_heads, tq, hd), lambda b, i: (b, 0, i, 0)),
        ),
        compiler_params=cparams,
    )(x, params["g1"], params["beta1"], w_qkv)

    # ---- pass 2: flash attention + proj + residual + MLP + residual -------
    out = pl.pallas_call(
        functools.partial(attn_mlp_kernel, tk=tk, approx_gelu=approx_gelu),
        out_shape=jax.ShapeDtypeStruct((B, N, D), x.dtype),
        grid=(B, N // tq),
        in_specs=[
            pl.BlockSpec((None, num_heads, tq, hd), lambda b, i: (b, 0, i, 0)),  # q tile
            pl.BlockSpec((None, num_heads, N, hd), lambda b, i: (b, 0, 0, 0)),   # K (per-batch)
            pl.BlockSpec((None, num_heads, N, hd), lambda b, i: (b, 0, 0, 0)),   # V (per-batch)
            pl.BlockSpec((None, tq, D), lambda b, i: (b, i, 0)),                 # residual x tile
            _rep((D, D)), _rep((1, D)),                                          # w_proj, b_proj
            _rep((1, D)), _rep((1, D)),                                          # norm2 gamma, beta
            _rep((D, Hm)), _rep((1, Hm)),                                        # fc1 w, b
            _rep((Hm, D)), _rep((1, D)),                                         # fc2 w, b
        ],
        out_specs=pl.BlockSpec((None, tq, D), lambda b, i: (b, i, 0)),
        compiler_params=cparams,
    )(q, k, v, x,
      w_proj, params["b_proj"], params["g2"], params["beta2"],
      w_fc1, params["b_fc1"], w_fc2, params["b_fc2"])
    return out


# --------------------------------------------------------------------------
# Pure-JAX f32 reference of the module's forward (exact-erf GELU, full softmax)
# --------------------------------------------------------------------------
def vit_block_ref(x, params, *, num_heads):
    B, N, D = x.shape
    hd = D // num_heads
    scale = hd ** -0.5

    def ln(v, g, b):
        mu = jnp.mean(v, axis=-1, keepdims=True)
        var = jnp.mean((v - mu) ** 2, axis=-1, keepdims=True)
        return (v - mu) * jax.lax.rsqrt(var + 1e-5) * g + b

    h = ln(x, params["g1"][0], params["beta1"][0])
    qkv = h @ params["w_qkv"]
    q, k, v = jnp.split(qkv, 3, axis=-1)
    q = q.reshape(B, N, num_heads, hd).transpose(0, 2, 1, 3)
    k = k.reshape(B, N, num_heads, hd).transpose(0, 2, 1, 3)
    v = v.reshape(B, N, num_heads, hd).transpose(0, 2, 1, 3)
    attn = jax.nn.softmax((q * scale) @ k.transpose(0, 1, 3, 2), axis=-1)
    o = (attn @ v).transpose(0, 2, 1, 3).reshape(B, N, D)
    x = x + o @ params["w_proj"] + params["b_proj"][0]

    h2 = ln(x, params["g2"][0], params["beta2"][0])
    h2 = jax.nn.gelu(h2 @ params["w_fc1"] + params["b_fc1"][0], approximate=False)
    h2 = h2 @ params["w_fc2"] + params["b_fc2"][0]
    return x + h2


if __name__ == "__main__":
    # Small but lane-dense shapes: N and D multiples of 128, q-tile = 128 rows.
    B, N, D = 2, 256, 128
    num_heads = 2            # head dim = 64 (ViT-like)
    mlp_ratio = 4.0
    Hm = int(D * mlp_ratio)

    key = jax.random.PRNGKey(0)
    ks = jax.random.split(key, 6)
    params = {
        "w_qkv":  0.02 * jax.random.normal(ks[0], (D, 3 * D), jnp.float32),
        "w_proj": 0.02 * jax.random.normal(ks[1], (D, D), jnp.float32),
        "b_proj": jnp.zeros((1, D), jnp.float32),
        "g1":     jnp.ones((1, D), jnp.float32),
        "beta1":  jnp.zeros((1, D), jnp.float32),
        "g2":     jnp.ones((1, D), jnp.float32),
        "beta2":  jnp.zeros((1, D), jnp.float32),
        "w_fc1":  0.02 * jax.random.normal(ks[2], (D, Hm), jnp.float32),
        "b_fc1":  jnp.zeros((1, Hm), jnp.float32),
        "w_fc2":  0.02 * jax.random.normal(ks[3], (Hm, D), jnp.float32),
        "b_fc2":  jnp.zeros((1, D), jnp.float32),
    }
    x = jax.random.normal(ks[4], (B, N, D), jnp.float32)

    out = jax.block_until_ready(vit_block(x, params, num_heads=num_heads))
    ref = vit_block_ref(x, params, num_heads=num_heads)

    # bf16 matmuls + approx reciprocal + tanh GELU => bf16-appropriate tolerance
    # against the f32 / exact-erf reference.
    np.testing.assert_allclose(np.asarray(out), np.asarray(ref), rtol=2e-2, atol=2e-2)

    print("KERNEL_OK")
</pallas_src>

<mosaic_0001>
module attributes {stable_mosaic.version = 11 : i64} {
  func.func @qkv_kernel(%arg0: i32, %arg1: i32, %arg2: memref<1x128x128xf32, #tpu.memory_space<vmem>>, %arg3: memref<1x128xf32, #tpu.memory_space<vmem>>, %arg4: memref<1x128xf32, #tpu.memory_space<vmem>>, %arg5: memref<128x384xbf16, #tpu.memory_space<vmem>>, %arg6: memref<1x2x128x64xbf16, #tpu.memory_space<vmem>>, %arg7: memref<1x2x128x64xbf16, #tpu.memory_space<vmem>>, %arg8: memref<1x2x128x64xbf16, #tpu.memory_space<vmem>>) attributes {dimension_semantics = [#tpu.dimension_semantics<parallel>, #tpu.dimension_semantics<parallel>], iteration_bounds = array<i64: 2, 2>, scalar_prefetch = 0 : i64, scratch_operands = 0 : i64, tpu.core_type = #tpu.core_type<tc>, window_params = [{transform_indices = @transform_0, window_bounds = array<i64: 1, 128, 128>}, {pipeline_mode = #tpu.pipeline_mode<synchronous>, transform_indices = @transform_1, window_bounds = array<i64: 1, 128>}, {pipeline_mode = #tpu.pipeline_mode<synchronous>, transform_indices = @transform_2, window_bounds = array<i64: 1, 128>}, {pipeline_mode = #tpu.pipeline_mode<synchronous>, transform_indices = @transform_3, window_bounds = array<i64: 128, 384>}, {transform_indices = @transform_4, window_bounds = array<i64: 1, 2, 128, 64>}, {transform_indices = @transform_5, window_bounds = array<i64: 1, 2, 128, 64>}, {transform_indices = @transform_6, window_bounds = array<i64: 1, 2, 128, 64>}]} {
    %c0 = arith.constant 0 : index
    %c0_0 = arith.constant 0 : index
    %c0_1 = arith.constant 0 : index
    %0 = vector.load %arg2[%c0, %c0_0, %c0_1] : memref<1x128x128xf32, #tpu.memory_space<vmem>>, vector<1x128x128xf32>
    %1 = vector.shape_cast %0 : vector<1x128x128xf32> to vector<128x128xf32>
    %c0_2 = arith.constant 0 : index
    %c0_3 = arith.constant 0 : index
    %2 = vector.load %arg3[%c0_2, %c0_3] : memref<1x128xf32, #tpu.memory_space<vmem>>, vector<1x128xf32>
    %3 = vector.shape_cast %2 : vector<1x128xf32> to vector<128xf32>
    %c0_4 = arith.constant 0 : index
    %c0_5 = arith.constant 0 : index
    %4 = vector.load %arg4[%c0_4, %c0_5] : memref<1x128xf32, #tpu.memory_space<vmem>>, vector<1x128xf32>
    %5 = vector.shape_cast %4 : vector<1x128xf32> to vector<128xf32>
    %cst = arith.constant dense<0.000000e+00> : vector<128xf32>
    %6 = vector.multi_reduction <add>, %1, %cst [1] : vector<128x128xf32> to vector<128xf32>
    %7 = vector.shape_cast %6 : vector<128xf32> to vector<128x1xf32>
    %cst_6 = arith.constant 1.280000e+02 : f32
    %8 = vector.broadcast %cst_6 : f32 to vector<128x1xf32>
    %9 = arith.divf %7, %8 : vector<128x1xf32>
    %10 = arith.mulf %1, %1 : vector<128x128xf32>
    %cst_7 = arith.constant dense<0.000000e+00> : vector<128xf32>
    %11 = vector.multi_reduction <add>, %10, %cst_7 [1] : vector<128x128xf32> to vector<128xf32>
    %12 = vector.shape_cast %11 : vector<128xf32> to vector<128x1xf32>
    %cst_8 = arith.constant 1.280000e+02 : f32
    %13 = vector.broadcast %cst_8 : f32 to vector<128x1xf32>
    %14 = arith.divf %12, %13 : vector<128x1xf32>
    %15 = arith.mulf %9, %9 : vector<128x1xf32>
    %16 = arith.subf %14, %15 : vector<128x1xf32>
    %cst_9 = arith.constant 0.000000e+00 : f32
    %17 = vector.broadcast %cst_9 : f32 to vector<128x1xf32>
    %18 = arith.maximumf %16, %17 : vector<128x1xf32>
    %19 = vector.broadcast %9 : vector<128x1xf32> to vector<128x128xf32>
    %20 = arith.subf %1, %19 : vector<128x128xf32>
    %cst_10 = arith.constant 9.99999974E-6 : f32
    %21 = vector.broadcast %cst_10 : f32 to vector<128x1xf32>
    %22 = arith.addf %18, %21 : vector<128x1xf32>
    %23 = math.rsqrt %22 : vector<128x1xf32>
    %24 = vector.broadcast %23 : vector<128x1xf32> to vector<128x128xf32>
    %25 = arith.mulf %20, %24 : vector<128x128xf32>
    %26 = vector.shape_cast %3 : vector<128xf32> to vector<1x128xf32>
    %27 = vector.broadcast %26 : vector<1x128xf32> to vector<128x128xf32>
    %28 = arith.mulf %25, %27 : vector<128x128xf32>
    %29 = vector.shape_cast %5 : vector<128xf32> to vector<1x128xf32>
    %30 = vector.broadcast %29 : vector<1x128xf32> to vector<128x128xf32>
    %31 = arith.addf %28, %30 : vector<128x128xf32>
    %32 = arith.truncf %31 : vector<128x128xf32> to vector<128x128xbf16>
    %c0_11 = arith.constant 0 : index
    %c0_12 = arith.constant 0 : index
    %33 = vector.load %arg5[%c0_11, %c0_12] : memref<128x384xbf16, #tpu.memory_space<vmem>>, vector<128x384xbf16>
    %cst_13 = arith.constant dense<0.000000e+00> : vector<128x384xf32>
    %34 = tpu.matmul %32, %33, %cst_13 {dimension_numbers = #tpu.dot_dimension_numbers<[1], [0], [0], [1], [0, 0, 1, 1], [], []>} : vector<128x128xbf16>, vector<128x384xbf16>, vector<128x384xf32> -> vector<128x384xf32>
    %35 = vector.extract_strided_slice %34 {offsets = [0, 0], sizes = [128, 128], strides = [1, 1]} : vector<128x384xf32> to vector<128x128xf32>
    %36 = arith.truncf %35 : vector<128x128xf32> to vector<128x128xbf16>
    %37 = vector.shape_cast %36 : vector<128x128xbf16> to vector<128x2x64xbf16>
    %38 = tpu.transpose %37, [1, 0, 2] : vector<128x2x64xbf16> -> vector<2x128x64xbf16>
    %c0_14 = arith.constant 0 : index
    %c0_15 = arith.constant 0 : index
    %c0_16 = arith.constant 0 : index
    %c0_17 = arith.constant 0 : index
    %39 = vector.load %arg6[%c0_14, %c0_15, %c0_16, %c0_17] : memref<1x2x128x64xbf16, #tpu.memory_space<vmem>>, vector<1x2x128x64xbf16>
    %40 = vector.shape_cast %39 : vector<1x2x128x64xbf16> to vector<2x128x64xbf16>
    %41 = vector.shape_cast %38 : vector<2x128x64xbf16> to vector<1x2x128x64xbf16>
    tpu.vector_store %arg6[%c0_14, %c0_15, %c0_16, %c0_17], %41 {strides = array<i32>} : memref<1x2x128x64xbf16, #tpu.memory_space<vmem>>, vector<1x2x128x64xbf16>,
    %42 = vector.extract_strided_slice %34 {offsets = [0, 128], sizes = [128, 128], strides = [1, 1]} : vector<128x384xf32> to vector<128x128xf32>
    %43 = arith.truncf %42 : vector<128x128xf32> to vector<128x128xbf16>
    %44 = vector.shape_cast %43 : vector<128x128xbf16> to vector<128x2x64xbf16>
    %45 = tpu.transpose %44, [1, 0, 2] : vector<128x2x64xbf16> -> vector<2x128x64xbf16>
    %c0_18 = arith.constant 0 : index
    %c0_19 = arith.constant 0 : index
    %c0_20 = arith.constant 0 : index
    %c0_21 = arith.constant 0 : index
    %46 = vector.load %arg7[%c0_18, %c0_19, %c0_20, %c0_21] : memref<1x2x128x64xbf16, #tpu.memory_space<vmem>>, vector<1x2x128x64xbf16>
    %47 = vector.shape_cast %46 : vector<1x2x128x64xbf16> to vector<2x128x64xbf16>
    %48 = vector.shape_cast %45 : vector<2x128x64xbf16> to vector<1x2x128x64xbf16>
    tpu.vector_store %arg7[%c0_18, %c0_19, %c0_20, %c0_21], %48 {strides = array<i32>} : memref<1x2x128x64xbf16, #tpu.memory_space<vmem>>, vector<1x2x128x64xbf16>,
    %49 = vector.extract_strided_slice %34 {offsets = [0, 256], sizes = [128, 128], strides = [1, 1]} : vector<128x384xf32> to vector<128x128xf32>
    %50 = arith.truncf %49 : vector<128x128xf32> to vector<128x128xbf16>
    %51 = vector.shape_cast %50 : vector<128x128xbf16> to vector<128x2x64xbf16>
    %52 = tpu.transpose %51, [1, 0, 2] : vector<128x2x64xbf16> -> vector<2x128x64xbf16>
    %c0_22 = arith.constant 0 : index
    %c0_23 = arith.constant 0 : index
    %c0_24 = arith.constant 0 : index
    %c0_25 = arith.constant 0 : index
    %53 = vector.load %arg8[%c0_22, %c0_23, %c0_24, %c0_25] : memref<1x2x128x64xbf16, #tpu.memory_space<vmem>>, vector<1x2x128x64xbf16>
    %54 = vector.shape_cast %53 : vector<1x2x128x64xbf16> to vector<2x128x64xbf16>
    %55 = vector.shape_cast %52 : vector<2x128x64xbf16> to vector<1x2x128x64xbf16>
    tpu.vector_store %arg8[%c0_22, %c0_23, %c0_24, %c0_25], %55 {strides = array<i32>} : memref<1x2x128x64xbf16, #tpu.memory_space<vmem>>, vector<1x2x128x64xbf16>,
    return
  }
  func.func @transform_0(%arg0: i32, %arg1: i32) -> (i32, i32, i32) {
    %c0_i32 = arith.constant 0 : i32
    %c0_i32_0 = arith.constant 0 : i32
    return %arg0, %arg1, %c0_i32 : i32, i32, i32
  }
  func.func @transform_1(%arg0: i32, %arg1: i32) -> (i32, i32) {
    %c0_i32 = arith.constant 0 : i32
    %c0_i32_0 = arith.constant 0 : i32
    %c0_i32_1 = arith.constant 0 : i32
    return %c0_i32, %c0_i32_0 : i32, i32
  }
  func.func @transform_2(%arg0: i32, %arg1: i32) -> (i32, i32) {
    %c0_i32 = arith.constant 0 : i32
    %c0_i32_0 = arith.constant 0 : i32
    %c0_i32_1 = arith.constant 0 : i32
    return %c0_i32, %c0_i32_0 : i32, i32
  }
  func.func @transform_3(%arg0: i32, %arg1: i32) -> (i32, i32) {
    %c0_i32 = arith.constant 0 : i32
    %c0_i32_0 = arith.constant 0 : i32
    %c0_i32_1 = arith.constant 0 : i32
    return %c0_i32, %c0_i32_0 : i32, i32
  }
  func.func @transform_4(%arg0: i32, %arg1: i32) -> (i32, i32, i32, i32) {
    %c0_i32 = arith.constant 0 : i32
    %c0_i32_0 = arith.constant 0 : i32
    %c0_i32_1 = arith.constant 0 : i32
    return %arg0, %c0_i32, %arg1, %c0_i32_0 : i32, i32, i32, i32
  }
  func.func @transform_5(%arg0: i32, %arg1: i32) -> (i32, i32, i32, i32) {
    %c0_i32 = arith.constant 0 : i32
    %c0_i32_0 = arith.constant 0 : i32
    %c0_i32_1 = arith.constant 0 : i32
    return %arg0, %c0_i32, %arg1, %c0_i32_0 : i32, i32, i32, i32
  }
  func.func @transform_6(%arg0: i32, %arg1: i32) -> (i32, i32, i32, i32) {
    %c0_i32 = arith.constant 0 : i32
    %c0_i32_0 = arith.constant 0 : i32
    %c0_i32_1 = arith.constant 0 : i32
    return %arg0, %c0_i32, %arg1, %c0_i32_0 : i32, i32, i32, i32
  }
}

</mosaic_0001>

<llo_original>
// kernel: tpu_custom_call.1
$region0: #{tpu_custom_call.1}
  #allocation0 [shape = 'u32[]', space=smem, size = 0x4, offset = 0x4, fixed_abs, tag = 'smem constant byte address 0x4 - core index']
  #allocation1 [shape = 'u32[144,128]{1,0:T(1,128)}', space=vmem, size = 0x12000, scoped, tag = 'internal scratch']
  %s0 = inlined_call_operand.hbm [shape: f32[2,256,128], index: 0, kind: input, shape index: {}]
  %s1 = inlined_call_operand.vmem [shape: f32[1,128], index: 1, kind: input, shape index: {}]
  %s2 = inlined_call_operand.vmem [shape: f32[1,128], index: 2, kind: input, shape index: {}]
  %s3 = inlined_call_operand.hbm [shape: bf16[128,384], index: 3, kind: input, shape index: {}]
  %s4 = inlined_call_operand.vmem [shape: bf16[2,2,256,64], index: 4, kind: output, shape index: {0}]
  %s5 = inlined_call_operand.vmem [shape: bf16[2,2,256,64], index: 5, kind: output, shape index: {1}]
  %s6 = inlined_call_operand.vmem [shape: bf16[2,2,256,64], index: 6, kind: output, shape index: {2}]
  %7 = xla_tuple %s4, %s5, %s6
  %s8 = sld [smem:[#allocation0]]
  $region184: #{tpu_custom_call.1} parent=0
    _
  %s10 = ssub.s32 1, %s8
  %s11 = scalar_select 0, %s10, %s8
  $region1: #{tpu_custom_call.1} parent=0
    #allocation2 [shape = 'u8[131072]{0}', space=vmem, size = 0x20000, scoped, tag = 'input window, operand 0']
    #allocation3 [shape = 's32[2]{0}', space=sflag, size = 0x8, scoped, tag = 'scoped memory for tpu_custom_call.1']
    #allocation4 [shape = 'u8[98304]{0}', space=vmem, size = 0x18000, scoped, tag = 'input window, operand 3, single buffered']
    #allocation5 [shape = 's32[1]{0}', space=sflag, size = 0x4, scoped, tag = 'scoped memory for tpu_custom_call.1']
    #allocation6 [shape = 'u8[131072]{0}', space=vmem, size = 0x20000, scoped, tag = 'output window, operand 0']
    #allocation7 [shape = 'u8[131072]{0}', space=vmem, size = 0x20000, scoped, tag = 'output window, operand 1']
    #allocation8 [shape = 'u8[131072]{0}', space=vmem, size = 0x20000, scoped, tag = 'output window, operand 2']
    %12 = vsyncpa [#allocation3], 0
    %s13 = scalar_lea.sflag [#allocation3], 1
    %14 = vsyncpa %s13, 0
    %15 = vsyncpa [#allocation5], 0
    loop: start=0, step=1, limit=6
    $region2: #{tpu_custom_call.1} parent=1 // loop_pre_header
      _
    $region3: #{tpu_custom_call.1} parent=1 // loop_header
      %s17 = sphi 0, %s21
      %p18 = scmp.ge.s32.totalorder %s17, 6
      %s24 = sphi 0, %s36
      %s25 = sphi 0, %s32
      %s26 = sphi 0, %s24
      %s27 = sphi 0, %s25
      %s28 = sphi 0, %s26
      %s29 = sphi 0, %s27
      %s41 = sphi 0, %s43
      %s44 = sphi 0, %s41
      %s45 = sphi 0, %s44
      %s61 = sphi 0, %s45
      %s65 = sphi 0, %s65
      %s67 = sphi 0, %s65
      %s68 = sphi 0, %s67
      %s82 = sphi 0, %s68
      %s86 = sphi 0, %s86
      %s88 = sphi 0, %s86
      %s89 = sphi 0, %s88
      %s103 = sphi 0, %s89
      %s107 = sphi 0, %s107
      %s109 = sphi 0, %s107
      %s110 = sphi 0, %s109
      %s124 = sphi 0, %s110
      %s132 = sphi 0, %s134
      %s135 = sphi 0, %s132
      %s136 = sphi 0, %s135
      %s152 = sphi 0, %s136
      %s160 = sphi 0, %s162
      %s163 = sphi 0, %s160
      %s164 = sphi 0, %s163
      %s180 = sphi 0, %s164
      %s188 = sphi 0, %s190
      %s191 = sphi 0, %s188
      %s192 = sphi 0, %s191
      %s208 = sphi 0, %s192
    $region4: #{tpu_custom_call.1} parent=1 // loop_header_branch
      %20 = sbr.rel (%p18) target = $region8
    $region5: #{tpu_custom_call.1} parent=1 // loop_body
      %s22 = ssub.s32 %s17, 1
      %s23 = ssub.s32 %s17, 2
      %s30 = sadd.s32 1, %s25
      %p31 = scmp.ge.s32.totalorder %s30, 2
      %s32 = scalar_select %p31, 0, %s30
      %s33 = sadd.s32 1, %s24
      %s34 = scalar_select %p31, %s33, %s24
      %p35 = scmp.ge.s32.totalorder %s34, 2
      %s36 = scalar_select %p35, 0, %s34
      %s37 = ssub.s32 %s24, %s36
      %s38 = ssub.s32 %s25, %s32
      %s39 = sor.u32 %s37, %s38
      %p40 = scmp.eq.s32.totalorder %s39, 0
      %s42 = sadd.s32 %s41, 1
      %s43 = scalar_select %p40, %s41, %s42
      %p46 = pneg %p40
      %p47 = scmp.eq.s32.totalorder %s17, 3
      %p48 = por %p46, %p47
      %p49 = scmp.ne.s32.totalorder %s41, %s44
      %p50 = scmp.eq.s32.totalorder %s17, 0
      %p51 = por %p49, %p50
      %p52 = scmp.ne.s32.totalorder %s41, %s44
      %p53 = scmp.eq.s32.totalorder %s22, 3
      %p54 = por %p52, %p53
      %p55 = scmp.ne.s32.totalorder %s44, %s45
      %p56 = scmp.eq.s32.totalorder %s22, 0
      %p57 = por %p55, %p56
      %p58 = scmp.ne.s32.totalorder %s44, %s45
      %p59 = scmp.eq.s32.totalorder %s23, 3
      %p60 = por %p58, %p59
      %p62 = scmp.ne.s32.totalorder %s45, %s61
      %p63 = scmp.eq.s32.totalorder %s23, 0
      %p64 = por %p62, %p63
      %s66 = sadd.s32 %s65, 1
      %p69 = scmp.eq.s32.totalorder %s17, 3
      %p70 = scmp.ne.s32.totalorder %s65, %s67
      %p71 = scmp.eq.s32.totalorder %s17, 0
      %p72 = por %p70, %p71
      %p73 = scmp.ne.s32.totalorder %s65, %s67
      %p74 = scmp.eq.s32.totalorder %s22, 3
      %p75 = por %p73, %p74
      %p76 = scmp.ne.s32.totalorder %s67, %s68
      %p77 = scmp.eq.s32.totalorder %s22, 0
      %p78 = por %p76, %p77
      %p79 = scmp.ne.s32.totalorder %s67, %s68
      %p80 = scmp.eq.s32.totalorder %s23, 3
      %p81 = por %p79, %p80
      %p83 = scmp.ne.s32.totalorder %s68, %s82
      %p84 = scmp.eq.s32.totalorder %s23, 0
      %p85 = por %p83, %p84
      %s87 = sadd.s32 %s86, 1
      %p90 = scmp.eq.s32.totalorder %s17, 3
      %p91 = scmp.ne.s32.totalorder %s86, %s88
      %p92 = scmp.eq.s32.totalorder %s17, 0
      %p93 = por %p91, %p92
      %p94 = scmp.ne.s32.totalorder %s86, %s88
      %p95 = scmp.eq.s32.totalorder %s22, 3
      %p96 = por %p94, %p95
      %p97 = scmp.ne.s32.totalorder %s88, %s89
      %p98 = scmp.eq.s32.totalorder %s22, 0
      %p99 = por %p97, %p98
      %p100 = scmp.ne.s32.totalorder %s88, %s89
      %p101 = scmp.eq.s32.totalorder %s23, 3
      %p102 = por %p100, %p101
      %p104 = scmp.ne.s32.totalorder %s89, %s103
      %p105 = scmp.eq.s32.totalorder %s23, 0
      %p106 = por %p104, %p105
      %s108 = sadd.s32 %s107, 1
      %p111 = scmp.eq.s32.totalorder %s17, 3
      %p112 = scmp.ne.s32.totalorder %s107, %s109
      %p113 = scmp.eq.s32.totalorder %s17, 0
      %p114 = por %p112, %p113
      %p115 = scmp.ne.s32.totalorder %s107, %s109
      %p116 = scmp.eq.s32.totalorder %s22, 3
      %p117 = por %p115, %p116
      %p118 = scmp.ne.s32.totalorder %s109, %s110
      %p119 = scmp.eq.s32.totalorder %s22, 0
      %p120 = por %p118, %p119
      %p121 = scmp.ne.s32.totalorder %s109, %s110
      %p122 = scmp.eq.s32.totalorder %s23, 3
      %p123 = por %p121, %p122
      %p125 = scmp.ne.s32.totalorder %s110, %s124
      %p126 = scmp.eq.s32.totalorder %s23, 0
      %p127 = por %p125, %p126
      %s128 = ssub.s32 %s24, %s36
      %s129 = ssub.s32 %s25, %s32
      %s130 = sor.u32 %s128, %s129
      %p131 = scmp.eq.s32.totalorder %s130, 0
      %s133 = sadd.s32 %s132, 1
      %s134 = scalar_select %p131, %s132, %s133
      %p137 = pneg %p131
      %p138 = scmp.eq.s32.totalorder %s17, 3
      %p139 = por %p137, %p138
      %p140 = scmp.ne.s32.totalorder %s132, %s135
      %p141 = scmp.eq.s32.totalorder %s17, 0
      %p142 = por %p140, %p141
      %p143 = scmp.ne.s32.totalorder %s132, %s135
      %p144 = scmp.eq.s32.totalorder %s22, 3
      %p145 = por %p143, %p144
      %p146 = scmp.ne.s32.totalorder %s135, %s136
      %p147 = scmp.eq.s32.totalorder %s22, 0
      %p148 = por %p146, %p147
      %p149 = scmp.ne.s32.totalorder %s135, %s136
      %p150 = scmp.eq.s32.totalorder %s23, 3
      %p151 = por %p149, %p150
      %p153 = scmp.ne.s32.totalorder %s136, %s152
      %p154 = scmp.eq.s32.totalorder %s23, 0
      %p155 = por %p153, %p154
      %s156 = ssub.s32 %s24, %s36
      %s157 = ssub.s32 %s25, %s32
      %s158 = sor.u32 %s156, %s157
      %p159 = scmp.eq.s32.totalorder %s158, 0
      %s161 = sadd.s32 %s160, 1
      %s162 = scalar_select %p159, %s160, %s161
      %p165 = pneg %p159
      %p166 = scmp.eq.s32.totalorder %s17, 3
      %p167 = por %p165, %p166
      %p168 = scmp.ne.s32.totalorder %s160, %s163
      %p169 = scmp.eq.s32.totalorder %s17, 0
      %p170 = por %p168, %p169
      %p171 = scmp.ne.s32.totalorder %s160, %s163
      %p172 = scmp.eq.s32.totalorder %s22, 3
      %p173 = por %p171, %p172
      %p174 = scmp.ne.s32.totalorder %s163, %s164
      %p175 = scmp.eq.s32.totalorder %s22, 0
      %p176 = por %p174, %p175
      %p177 = scmp.ne.s32.totalorder %s163, %s164
      %p178 = scmp.eq.s32.totalorder %s23, 3
      %p179 = por %p177, %p178
      %p181 = scmp.ne.s32.totalorder %s164, %s180
      %p182 = scmp.eq.s32.totalorder %s23, 0
      %p183 = por %p181, %p182
      %s184 = ssub.s32 %s24, %s36
      %s185 = ssub.s32 %s25, %s32
      %s186 = sor.u32 %s184, %s185
      %p187 = scmp.eq.s32.totalorder %s186, 0
      %s189 = sadd.s32 %s188, 1
      %s190 = scalar_select %p187, %s188, %s189
      %p193 = pneg %p187
      %p194 = scmp.eq.s32.totalorder %s17, 3
      %p195 = por %p193, %p194
      %p196 = scmp.ne.s32.totalorder %s188, %s191
      %p197 = scmp.eq.s32.totalorder %s17, 0
      %p198 = por %p196, %p197
      %p199 = scmp.ne.s32.totalorder %s188, %s191
      %p200 = scmp.eq.s32.totalorder %s22, 3
      %p201 = por %p199, %p200
      %p202 = scmp.ne.s32.totalorder %s191, %s192
      %p203 = scmp.eq.s32.totalorder %s22, 0
      %p204 = por %p202, %p203
      %p205 = scmp.ne.s32.totalorder %s191, %s192
      %p206 = scmp.eq.s32.totalorder %s23, 3
      %p207 = por %p205, %p206
      %p209 = scmp.ne.s32.totalorder %s192, %s208
      %p210 = scmp.eq.s32.totalorder %s23, 0
      %p211 = por %p209, %p210
      %p212 = scmp.le.s32.totalorder 1, %s17
      %p213 = scmp.lt.s32.totalorder %s17, 5
      %p214 = pnand %p212, %p213
      %p215 = pneg %p214
      // Predicated region
      $region9: #{tpu_custom_call.1} parent=5 // pred_check
        _
      $region10: #{tpu_custom_call.1} parent=5 // pred_check_branch
        %217 = sbr.rel (%p214) target = $region12
      $region11: #{tpu_custom_call.1} parent=5 // pred_region
        %s218 = ssub.s32 %s17, 1
        // Predicated region
        $region13: #{tpu_custom_call.1} parent=11 // pred_check
          %p219 = pneg %p78
        $region14: #{tpu_custom_call.1} parent=11 // pred_check_branch
          %221 = sbr.rel (%p219) target = $region16
        $region15: #{tpu_custom_call.1} parent=11 // pred_region
          _
        $region16: #{tpu_custom_call.1} parent=11 // pred_fallthru
          _
        // Predicated region
        $region17: #{tpu_custom_call.1} parent=11 // pred_check
          %p222 = pneg %p99
        $region18: #{tpu_custom_call.1} parent=11 // pred_check_branch
          %224 = sbr.rel (%p222) target = $region20
        $region19: #{tpu_custom_call.1} parent=11 // pred_region
          _
        $region20: #{tpu_custom_call.1} parent=11 // pred_fallthru
          _
        // Predicated region
        $region21: #{tpu_custom_call.1} parent=11 // pred_check
          %p225 = pneg %p120
        $region22: #{tpu_custom_call.1} parent=11 // pred_check_branch
          %227 = sbr.rel (%p225) target = $region24
        $region23: #{tpu_custom_call.1} parent=11 // pred_region
          %s229 = ssub.s32 3072, 3072
          %230 = vsyncadd [#allocation5], %s229
          %s231 = sshll.u32 [#allocation4], 4
          %s232 = int_to_ptr.vmem [resolvable:$true] %s231
          %237 = dma.hbm_to_vmem [thread:$0]  %s3, 3072, %s232, [#allocation5], 192, 192, 12
        $region24: #{tpu_custom_call.1} parent=11 // pred_fallthru
          _
      $region12: #{tpu_custom_call.1} parent=5 // pred_fallthru
        _
      %p238 = scmp.lt.s32.totalorder %s17, 4
      // Predicated region
      $region25: #{tpu_custom_call.1} parent=5 // pred_check
        %p239 = pneg %p238
      $region26: #{tpu_custom_call.1} parent=5 // pred_check_branch
        %241 = sbr.rel (%p239) target = $region28
      $region27: #{tpu_custom_call.1} parent=5 // pred_region
        // Predicated region
        $region29: #{tpu_custom_call.1} parent=27 // pred_check
          %p242 = pneg %p51
        $region30: #{tpu_custom_call.1} parent=27 // pred_check_branch
          %244 = sbr.rel (%p242) target = $region32
        $region31: #{tpu_custom_call.1} parent=27 // pred_region
          %s245 = sand.u32 %s41, 1
          %s246 = scalar_lea.sflag [#allocation3], %s245
          %s247 = sand.u32 %s41, 1
          %s248 = smul.addr %s247, 128
          %s249 = scalar_lea.vmem [#allocation2], %s248
          %s250 = smul.u32 16, %s25
          %s252 = ssub.s32 2048, 2048
          %253 = vsyncadd %s246, %s252
          %s254 = smul.addr %s24, 32
          %s255 = sadd.s32 %s250, %s254
          %s256 = smul.addr %s255, 128
          %s257 = scalar_lea.hbm %s0, %s256
          %s258 = sshll.u32 %s249, 4
          %s259 = int_to_ptr.vmem [resolvable:$true] %s258
          %264 = dma.hbm_to_vmem [thread:$0]  %s257, 2048, %s259, %s246, 128, 128, 8
        $region32: #{tpu_custom_call.1} parent=27 // pred_fallthru
          _
      $region28: #{tpu_custom_call.1} parent=5 // pred_fallthru
        _
      %p265 = scmp.le.s32.totalorder 1, %s17
      %p266 = scmp.lt.s32.totalorder %s17, 5
      %p267 = pnand %p265, %p266
      %p268 = pneg %p267
      // Predicated region
      $region33: #{tpu_custom_call.1} parent=5 // pred_check
        _
      $region34: #{tpu_custom_call.1} parent=5 // pred_check_branch
        %270 = sbr.rel (%p267) target = $region36
      $region35: #{tpu_custom_call.1} parent=5 // pred_region
        %s271 = ssub.s32 %s17, 1
        %s272 = sand.u32 %s44, 1
        %s273 = scalar_lea.sflag [#allocation3], %s272
        %s274 = sand.u32 %s44, 1
        %s275 = smul.addr %s274, 128
        %s276 = scalar_lea.vmem [#allocation2], %s275
        // Predicated region
        $region37: #{tpu_custom_call.1} parent=35 // pred_check
          %p277 = pneg %p57
        $region38: #{tpu_custom_call.1} parent=35 // pred_check_branch
          %279 = sbr.rel (%p277) target = $region40
        $region39: #{tpu_custom_call.1} parent=35 // pred_region
          %280 = dma.done %s273, 2048
        $region40: #{tpu_custom_call.1} parent=35 // pred_fallthru
          _
        // Predicated region
        $region41: #{tpu_custom_call.1} parent=35 // pred_check
          %p281 = pneg %p120
        $region42: #{tpu_custom_call.1} parent=35 // pred_check_branch
          %283 = sbr.rel (%p281) target = $region44
        $region43: #{tpu_custom_call.1} parent=35 // pred_region
          %284 = dma.done [#allocation5], 3072
        $region44: #{tpu_custom_call.1} parent=35 // pred_fallthru
          _
        %s285 = sand.u32 %s44, 1
        %s286 = scalar_lea.sflag [#allocation3], %s285
        %s287 = sand.u32 %s44, 1
        %s288 = smul.addr %s287, 128
        %s289 = scalar_lea.vmem [#allocation2], %s288
        %p290 = pneg %p57
        %p291 = pneg %p54
        %p292 = pneg %p78
        %p293 = pneg %p75
        %p294 = pneg %p99
        %p295 = pneg %p96
        %p296 = pneg %p120
        %p297 = pneg %p117
        %p298 = pneg %p148
        %p299 = pneg %p145
        %s300 = sand.u32 %s135, 1
        %s301 = sand.u32 %s135, 1
        %s302 = smul.addr %s301, 128
        %s303 = scalar_lea.vmem [#allocation6], %s302
        %p304 = pneg %p176
        %p305 = pneg %p173
        %s306 = sand.u32 %s163, 1
        %s307 = sand.u32 %s163, 1
        %s308 = smul.addr %s307, 128
        %s309 = scalar_lea.vmem [#allocation7], %s308
        %p310 = pneg %p204
        %p311 = pneg %p201
        %s312 = sand.u32 %s191, 1
        %s313 = sand.u32 %s191, 1
        %s314 = smul.addr %s313, 128
        %s315 = scalar_lea.vmem [#allocation8], %s314
        %s316 = smul.u32 16, %s27
        %s317 = smul.u32 16, %s27
        %s318 = smul.u32 16, %s27
        %s319 = smul.u32 16, %s27
        %v321 = vld [vmem:[%s276] sm:$0xff]
        %v322 = vld [vmem:[%s276 + $0x8] sm:$0xff]
        %v323 = vld [vmem:[%s276 + $0x10] sm:$0xff]
        %v324 = vld [vmem:[%s276 + $0x18] sm:$0xff]
        %v325 = vld [vmem:[%s276 + $0x20] sm:$0xff]
        %v326 = vld [vmem:[%s276 + $0x28] sm:$0xff]
        %v327 = vld [vmem:[%s276 + $0x30] sm:$0xff]
        %v328 = vld [vmem:[%s276 + $0x38] sm:$0xff]
        %v329 = vld [vmem:[%s276 + $0x40] sm:$0xff]
        %v330 = vld [vmem:[%s276 + $0x48] sm:$0xff]
        %v331 = vld [vmem:[%s276 + $0x50] sm:$0xff]
        %v332 = vld [vmem:[%s276 + $0x58] sm:$0xff]
        %v333 = vld [vmem:[%s276 + $0x60] sm:$0xff]
        %v334 = vld [vmem:[%s276 + $0x68] sm:$0xff]
        %v335 = vld [vmem:[%s276 + $0x70] sm:$0xff]
        %v336 = vld [vmem:[%s276 + $0x78] sm:$0xff]
        %v337 = vld [vmem:[%s1] sm:$0x1]
        %v338 = vld [vmem:[%s2] sm:$0x1]
        %339 = vadd.xlane.f32.xlu0 %v321
        %v340 = vpop.xlane.xlu0 %339
        %341 = vadd.xlane.f32.xlu0 %v322
        %v342 = vpop.xlane.xlu0 %341
        %343 = vadd.xlane.f32.xlu0 %v323
        %v344 = vpop.xlane.xlu0 %343
        %345 = vadd.xlane.f32.xlu0 %v324
        %v346 = vpop.xlane.xlu0 %345
        %347 = vadd.xlane.f32.xlu0 %v325
        %v348 = vpop.xlane.xlu0 %347
        %349 = vadd.xlane.f32.xlu0 %v326
        %v350 = vpop.xlane.xlu0 %349
        %351 = vadd.xlane.f32.xlu0 %v327
        %v352 = vpop.xlane.xlu0 %351
        %353 = vadd.xlane.f32.xlu0 %v328
        %v354 = vpop.xlane.xlu0 %353
        %355 = vadd.xlane.f32.xlu0 %v329
        %v356 = vpop.xlane.xlu0 %355
        %357 = vadd.xlane.f32.xlu0 %v330
        %v358 = vpop.xlane.xlu0 %357
        %359 = vadd.xlane.f32.xlu0 %v331
        %v360 = vpop.xlane.xlu0 %359
        %361 = vadd.xlane.f32.xlu0 %v332
        %v362 = vpop.xlane.xlu0 %361
        %363 = vadd.xlane.f32.xlu0 %v333
        %v364 = vpop.xlane.xlu0 %363
        %365 = vadd.xlane.f32.xlu0 %v334
        %v366 = vpop.xlane.xlu0 %365
        %367 = vadd.xlane.f32.xlu0 %v335
        %v368 = vpop.xlane.xlu0 %367
        %369 = vadd.xlane.f32.xlu0 %v336
        %v370 = vpop.xlane.xlu0 %369
        %v371 = vrcp.pop 128.0
        %v372 = vmul.f32 %v340, %v371
        %v373 = vmul.f32 %v342, %v371
        %v374 = vmul.f32 %v344, %v371
        %v375 = vmul.f32 %v346, %v371
        %v376 = vmul.f32 %v348, %v371
        %v377 = vmul.f32 %v350, %v371
        %v378 = vmul.f32 %v352, %v371
        %v379 = vmul.f32 %v354, %v371
        %v380 = vmul.f32 %v356, %v371
        %v381 = vmul.f32 %v358, %v371
        %v382 = vmul.f32 %v360, %v371
        %v383 = vmul.f32 %v362, %v371
        %v384 = vmul.f32 %v364, %v371
        %v385 = vmul.f32 %v366, %v371
        %v386 = vmul.f32 %v368, %v371
        %v387 = vmul.f32 %v370, %v371
        %v388 = vmul.f32 %v321, %v321
        %v389 = vmul.f32 %v322, %v322
        %v390 = vmul.f32 %v323, %v323
        %v391 = vmul.f32 %v324, %v324
        %v392 = vmul.f32 %v325, %v325
        %v393 = vmul.f32 %v326, %v326
        %v394 = vmul.f32 %v327, %v327
        %v395 = vmul.f32 %v328, %v328
        %v396 = vmul.f32 %v329, %v329
        %v397 = vmul.f32 %v330, %v330
        %v398 = vmul.f32 %v331, %v331
        %v399 = vmul.f32 %v332, %v332
        %v400 = vmul.f32 %v333, %v333
        %v401 = vmul.f32 %v334, %v334
        %v402 = vmul.f32 %v335, %v335
        %v403 = vmul.f32 %v336, %v336
        %404 = vadd.xlane.f32.xlu0 %v388
        %v405 = vpop.xlane.xlu0 %404
        %406 = vadd.xlane.f32.xlu0 %v389
        %v407 = vpop.xlane.xlu0 %406
        %408 = vadd.xlane.f32.xlu0 %v390
        %v409 = vpop.xlane.xlu0 %408
        %410 = vadd.xlane.f32.xlu0 %v391
        %v411 = vpop.xlane.xlu0 %410
        %412 = vadd.xlane.f32.xlu0 %v392
        %v413 = vpop.xlane.xlu0 %412
        %414 = vadd.xlane.f32.xlu0 %v393
        %v415 = vpop.xlane.xlu0 %414
        %416 = vadd.xlane.f32.xlu0 %v394
        %v417 = vpop.xlane.xlu0 %416
        %418 = vadd.xlane.f32.xlu0 %v395
        %v419 = vpop.xlane.xlu0 %418
        %420 = vadd.xlane.f32.xlu0 %v396
        %v421 = vpop.xlane.xlu0 %420
        %422 = vadd.xlane.f32.xlu0 %v397
        %v423 = vpop.xlane.xlu0 %422
        %424 = vadd.xlane.f32.xlu0 %v398
        %v425 = vpop.xlane.xlu0 %424
        %426 = vadd.xlane.f32.xlu0 %v399
        %v427 = vpop.xlane.xlu0 %426
        %428 = vadd.xlane.f32.xlu0 %v400
        %v429 = vpop.xlane.xlu0 %428
        %430 = vadd.xlane.f32.xlu0 %v401
        %v431 = vpop.xlane.xlu0 %430
        %432 = vadd.xlane.f32.xlu0 %v402
        %v433 = vpop.xlane.xlu0 %432
        %434 = vadd.xlane.f32.xlu0 %v403
        %v435 = vpop.xlane.xlu0 %434
        %v436 = vmul.f32 %v405, %v371
        %v437 = vmul.f32 %v407, %v371
        %v438 = vmul.f32 %v409, %v371
        %v439 = vmul.f32 %v411, %v371
        %v440 = vmul.f32 %v413, %v371
        %v441 = vmul.f32 %v415, %v371
        %v442 = vmul.f32 %v417, %v371
        %v443 = vmul.f32 %v419, %v371
        %v444 = vmul.f32 %v421, %v371
        %v445 = vmul.f32 %v423, %v371
        %v446 = vmul.f32 %v425, %v371
        %v447 = vmul.f32 %v427, %v371
        %v448 = vmul.f32 %v429, %v371
        %v449 = vmul.f32 %v431, %v371
        %v450 = vmul.f32 %v433, %v371
        %v451 = vmul.f32 %v435, %v371
        %v452 = vmul.f32 %v372, %v372
        %v453 = vmul.f32 %v373, %v373
        %v454 = vmul.f32 %v374, %v374
        %v455 = vmul.f32 %v375, %v375
        %v456 = vmul.f32 %v376, %v376
        %v457 = vmul.f32 %v377, %v377
        %v458 = vmul.f32 %v378, %v378
        %v459 = vmul.f32 %v379, %v379
        %v460 = vmul.f32 %v380, %v380
        %v461 = vmul.f32 %v381, %v381
        %v462 = vmul.f32 %v382, %v382
        %v463 = vmul.f32 %v383, %v383
        %v464 = vmul.f32 %v384, %v384
        %v465 = vmul.f32 %v385, %v385
        %v466 = vmul.f32 %v386, %v386
        %v467 = vmul.f32 %v387, %v387
        %v468 = vsub.f32 %v436, %v452
        %v469 = vsub.f32 %v437, %v453
        %v470 = vsub.f32 %v438, %v454
        %v471 = vsub.f32 %v439, %v455
        %v472 = vsub.f32 %v440, %v456
        %v473 = vsub.f32 %v441, %v457
        %v474 = vsub.f32 %v442, %v458
        %v475 = vsub.f32 %v443, %v459
        %v476 = vsub.f32 %v444, %v460
        %v477 = vsub.f32 %v445, %v461
        %v478 = vsub.f32 %v446, %v462
        %v479 = vsub.f32 %v447, %v463
        %v480 = vsub.f32 %v448, %v464
        %v481 = vsub.f32 %v449, %v465
        %v482 = vsub.f32 %v450, %v466
        %v483 = vsub.f32 %v451, %v467
        %v484 = vmax.f32 %v468, 0.0
        %v485 = vmax.f32 %v469, 0.0
        %v486 = vmax.f32 %v470, 0.0
        %v487 = vmax.f32 %v471, 0.0
        %v488 = vmax.f32 %v472, 0.0
        %v489 = vmax.f32 %v473, 0.0
        %v490 = vmax.f32 %v474, 0.0
        %v491 = vmax.f32 %v475, 0.0
        %v492 = vmax.f32 %v476, 0.0
        %v493 = vmax.f32 %v477, 0.0
        %v494 = vmax.f32 %v478, 0.0
        %v495 = vmax.f32 %v479, 0.0
        %v496 = vmax.f32 %v480, 0.0
        %v497 = vmax.f32 %v481, 0.0
        %v498 = vmax.f32 %v482, 0.0
        %v499 = vmax.f32 %v483, 0.0
        %v500 = vsub.f32 %v321, %v372
        %v501 = vsub.f32 %v322, %v373
        %v502 = vsub.f32 %v323, %v374
        %v503 = vsub.f32 %v324, %v375
        %v504 = vsub.f32 %v325, %v376
        %v505 = vsub.f32 %v326, %v377
        %v506 = vsub.f32 %v327, %v378
        %v507 = vsub.f32 %v328, %v379
        %v508 = vsub.f32 %v329, %v380
        %v509 = vsub.f32 %v330, %v381
        %v510 = vsub.f32 %v331, %v382
        %v511 = vsub.f32 %v332, %v383
        %v512 = vsub.f32 %v333, %v384
        %v513 = vsub.f32 %v334, %v385
        %v514 = vsub.f32 %v335, %v386
        %v515 = vsub.f32 %v336, %v387
        %v516 = vadd.f32 %v484, 1e-05
        %v517 = vadd.f32 %v485, 1e-05
        %v518 = vadd.f32 %v486, 1e-05
        %v519 = vadd.f32 %v487, 1e-05
        %v520 = vadd.f32 %v488, 1e-05
        %v521 = vadd.f32 %v489, 1e-05
        %v522 = vadd.f32 %v490, 1e-05
        %v523 = vadd.f32 %v491, 1e-05
        %v524 = vadd.f32 %v492, 1e-05
        %v525 = vadd.f32 %v493, 1e-05
        %v526 = vadd.f32 %v494, 1e-05
        %v527 = vadd.f32 %v495, 1e-05
        %v528 = vadd.f32 %v496, 1e-05
        %v529 = vadd.f32 %v497, 1e-05
        %v530 = vadd.f32 %v498, 1e-05
        %v531 = vadd.f32 %v499, 1e-05
        %v532 = vrsqrt.pop %v516
        %v533 = vrsqrt.pop %v517
        %v534 = vrsqrt.pop %v518
        %v535 = vrsqrt.pop %v519
        %v536 = vrsqrt.pop %v520
        %v537 = vrsqrt.pop %v521
        %v538 = vrsqrt.pop %v522
        %v539 = vrsqrt.pop %v523
        %v540 = vrsqrt.pop %v524
        %v541 = vrsqrt.pop %v525
        %v542 = vrsqrt.pop %v526
        %v543 = vrsqrt.pop %v527
        %v544 = vrsqrt.pop %v528
        %v545 = vrsqrt.pop %v529
        %v546 = vrsqrt.pop %v530
        %v547 = vrsqrt.pop %v531
        %v548 = vmul.f32 %v500, %v532
        %v549 = vmul.f32 %v501, %v533
        %v550 = vmul.f32 %v502, %v534
        %v551 = vmul.f32 %v503, %v535
        %v552 = vmul.f32 %v504, %v536
        %v553 = vmul.f32 %v505, %v537
        %v554 = vmul.f32 %v506, %v538
        %v555 = vmul.f32 %v507, %v539
        %v556 = vmul.f32 %v508, %v540
        %v557 = vmul.f32 %v509, %v541
        %v558 = vmul.f32 %v510, %v542
        %v559 = vmul.f32 %v511, %v543
        %v560 = vmul.f32 %v512, %v544
        %v561 = vmul.f32 %v513, %v545
        %v562 = vmul.f32 %v514, %v546
        %v563 = vmul.f32 %v515, %v547
        %v565 = vlaneseq
        %v566 = vshrl.u32 %v565, 7
        %v567 = vsub.s32 0, %v566
        %v568 = vrot.slane %v337, %v567
        %v570 = vmul.f32 %v548, %v568
        %v571 = vmul.f32 %v549, %v568
        %v572 = vmul.f32 %v550, %v568
        %v573 = vmul.f32 %v551, %v568
        %v574 = vmul.f32 %v552, %v568
        %v575 = vmul.f32 %v553, %v568
        %v576 = vmul.f32 %v554, %v568
        %v577 = vmul.f32 %v555, %v568
        %v578 = vmul.f32 %v556, %v568
        %v579 = vmul.f32 %v557, %v568
        %v580 = vmul.f32 %v558, %v568
        %v581 = vmul.f32 %v559, %v568
        %v582 = vmul.f32 %v560, %v568
        %v583 = vmul.f32 %v561, %v568
        %v584 = vmul.f32 %v562, %v568
        %v585 = vmul.f32 %v563, %v568
        %v587 = vlaneseq
        %v588 = vshrl.u32 %v587, 7
        %v589 = vsub.s32 0, %v588
        %v590 = vrot.slane %v338, %v589
        %v592 = vadd.f32 %v570, %v590
        %v593 = vadd.f32 %v571, %v590
        %v594 = vadd.f32 %v572, %v590
        %v595 = vadd.f32 %v573, %v590
        %v596 = vadd.f32 %v574, %v590
        %v597 = vadd.f32 %v575, %v590
        %v598 = vadd.f32 %v576, %v590
        %v599 = vadd.f32 %v577, %v590
        %v600 = vadd.f32 %v578, %v590
        %v601 = vadd.f32 %v579, %v590
        %v602 = vadd.f32 %v580, %v590
        %v603 = vadd.f32 %v581, %v590
        %v604 = vadd.f32 %v582, %v590
        %v605 = vadd.f32 %v583, %v590
        %v606 = vadd.f32 %v584, %v590
        %v607 = vadd.f32 %v585, %v590
        %v608 = vpack.c.bf16 %v593, %v592
        %v609 = vpack.c.bf16 %v595, %v594
        %v610 = vpack.c.bf16 %v597, %v596
        %v611 = vpack.c.bf16 %v599, %v598
        %v612 = vpack.c.bf16 %v601, %v600
        %v613 = vpack.c.bf16 %v603, %v602
        %v614 = vpack.c.bf16 %v605, %v604
        %v615 = vpack.c.bf16 %v607, %v606
        %v616 = vld [vmem:[#allocation4] sm:$0xff]
        %v617 = vld [vmem:[#allocation4 + $0x8] sm:$0xf]
        %v618 = vld [vmem:[#allocation4 + $0xc] sm:$0xff]
        %v619 = vld [vmem:[#allocation4 + $0x14] sm:$0xf]
        %v620 = vld [vmem:[#allocation4 + $0x18] sm:$0xff]
        %v621 = vld [vmem:[#allocation4 + $0x20] sm:$0xf]
        %v622 = vld [vmem:[#allocation4 + $0x24] sm:$0xff]
        %v623 = vld [vmem:[#allocation4 + $0x2c] sm:$0xf]
        %v624 = vld [vmem:[#allocation4 + $0x30] sm:$0xff]
        %v625 = vld [vmem:[#allocation4 + $0x38] sm:$0xf]
        %v626 = vld [vmem:[#allocation4 + $0x3c] sm:$0xff]
        %v627 = vld [vmem:[#allocation4 + $0x44] sm:$0xf]
        %v628 = vld [vmem:[#allocation4 + $0x48] sm:$0xff]
        %v629 = vld [vmem:[#allocation4 + $0x50] sm:$0xf]
        %v630 = vld [vmem:[#allocation4 + $0x54] sm:$0xff]
        %v631 = vld [vmem:[#allocation4 + $0x5c] sm:$0xf]
        %v632 = vld [vmem:[#allocation4 + $0x60] sm:$0xff]
        %v633 = vld [vmem:[#allocation4 + $0x68] sm:$0xf]
        %v634 = vld [vmem:[#allocation4 + $0x6c] sm:$0xff]
        %v635 = vld [vmem:[#allocation4 + $0x74] sm:$0xf]
        %v636 = vld [vmem:[#allocation4 + $0x78] sm:$0xff]
        %v637 = vld [vmem:[#allocation4 + $0x80] sm:$0xf]
        %v638 = vld [vmem:[#allocation4 + $0x84] sm:$0xff]
        %v639 = vld [vmem:[#allocation4 + $0x8c] sm:$0xf]
        %v640 = vld [vmem:[#allocation4 + $0x90] sm:$0xff]
        %v641 = vld [vmem:[#allocation4 + $0x98] sm:$0xf]
        %v642 = vld [vmem:[#allocation4 + $0x9c] sm:$0xff]
        %v643 = vld [vmem:[#allocation4 + $0xa4] sm:$0xf]
        %v644 = vld [vmem:[#allocation4 + $0xa8] sm:$0xff]
        %v645 = vld [vmem:[#allocation4 + $0xb0] sm:$0xf]
        %v646 = vld [vmem:[#allocation4 + $0xb4] sm:$0xff]
        %v647 = vld [vmem:[#allocation4 + $0xbc] sm:$0xf]
        %v680 = vunpack.c.l.b16 %v616
        %v681 = vunpack.c.h.b16 %v616
        %v682 = vunpack.c.l.b16 %v617
        %v683 = vunpack.c.l.b16 %v618
        %v684 = vunpack.c.h.b16 %v618
        %v685 = vunpack.c.l.b16 %v619
        %v686 = vunpack.c.l.b16 %v620
        %v687 = vunpack.c.h.b16 %v620
        %v688 = vunpack.c.l.b16 %v621
        %v689 = vunpack.c.l.b16 %v622
        %v690 = vunpack.c.h.b16 %v622
        %v691 = vunpack.c.l.b16 %v623
        %v692 = vunpack.c.l.b16 %v624
        %v693 = vunpack.c.h.b16 %v624
        %v694 = vunpack.c.l.b16 %v625
        %v695 = vunpack.c.l.b16 %v626
        %v696 = vunpack.c.h.b16 %v626
        %v697 = vunpack.c.l.b16 %v627
        %v698 = vunpack.c.l.b16 %v628
        %v699 = vunpack.c.h.b16 %v628
        %v700 = vunpack.c.l.b16 %v629
        %v701 = vunpack.c.l.b16 %v630
        %v702 = vunpack.c.h.b16 %v630
        %v703 = vunpack.c.l.b16 %v631
        %v704 = vunpack.c.l.b16 %v632
        %v705 = vunpack.c.h.b16 %v632
        %v706 = vunpack.c.l.b16 %v633
        %v707 = vunpack.c.l.b16 %v634
        %v708 = vunpack.c.h.b16 %v634
        %v709 = vunpack.c.l.b16 %v635
        %v710 = vunpack.c.l.b16 %v636
        %v711 = vunpack.c.h.b16 %v636
        %v712 = vunpack.c.l.b16 %v637
        %v713 = vunpack.c.l.b16 %v638
        %v714 = vunpack.c.h.b16 %v638
        %v715 = vunpack.c.l.b16 %v639
        %v716 = vunpack.c.l.b16 %v640
        %v717 = vunpack.c.h.b16 %v640
        %v718 = vunpack.c.l.b16 %v641
        %v719 = vunpack.c.l.b16 %v642
        %v720 = vunpack.c.h.b16 %v642
        %v721 = vunpack.c.l.b16 %v643
        %v722 = vunpack.c.l.b16 %v644
        %v723 = vunpack.c.h.b16 %v644
        %v724 = vunpack.c.l.b16 %v645
        %v725 = vunpack.c.l.b16 %v646
        %v726 = vunpack.c.h.b16 %v646
        %v727 = vunpack.c.l.b16 %v647
        %v728 = vpack.c.b16 %v683, %v680
        %v729 = vpack.c.b16 %v684, %v681
        %v730 = vpack.c.b16 %v685, %v682
        %v731 = vpack.c.b16 %v689, %v686
        %v732 = vpack.c.b16 %v690, %v687
        %v733 = vpack.c.b16 %v691, %v688
        %v734 = vpack.c.b16 %v695, %v692
        %v735 = vpack.c.b16 %v696, %v693
        %v736 = vpack.c.b16 %v697, %v694
        %v737 = vpack.c.b16 %v701, %v698
        %v738 = vpack.c.b16 %v702, %v699
        %v739 = vpack.c.b16 %v703, %v700
        %v740 = vpack.c.b16 %v707, %v704
        %v741 = vpack.c.b16 %v708, %v705
        %v742 = vpack.c.b16 %v709, %v706
        %v743 = vpack.c.b16 %v713, %v710
        %v744 = vpack.c.b16 %v714, %v711
        %v745 = vpack.c.b16 %v715, %v712
        %v746 = vpack.c.b16 %v719, %v716
        %v747 = vpack.c.b16 %v720, %v717
        %v748 = vpack.c.b16 %v721, %v718
        %v749 = vpack.c.b16 %v725, %v722
        %v750 = vpack.c.b16 %v726, %v723
        %v751 = vpack.c.b16 %v727, %v724
        %776 = vmatprep.subr.bf16.mxu0 %v750
        %777 = vmatpush1.bf16.msra.mxu0 %v749
        %778 = vmatprep.subr.bf16.mxu0 %v747
        %779 = vmatpush1.bf16.msra.mxu0 %v746
        %780 = vmatprep.subr.bf16.mxu0 %v744
        %781 = vmatpush1.bf16.msra.mxu0 %v743
        %782 = vmatprep.subr.bf16.mxu0 %v741
        %783 = vmatpush1.bf16.msra.mxu0 %v740
        %784 = vmatprep.subr.bf16.mxu0 %v738
        %785 = vmatpush1.bf16.msra.mxu0 %v737
        %786 = vmatprep.subr.bf16.mxu0 %v735
        %787 = vmatpush1.bf16.msra.mxu0 %v734
        %788 = vmatprep.subr.bf16.mxu0 %v732
        %789 = vmatpush1.bf16.msra.mxu0 %v731
        %790 = vmatprep.subr.bf16.mxu0 %v729
        %791 = vmatpush1.bf16.msra.mxu0 %v728
        %792 = vmatprep.subr.bf16.mxu0 0
        %793 = vmatpush2.bf16.msra.mxu0 0
        %794 = vmatprep.subr.bf16.mxu0 0
        %795 = vmatpush2.bf16.msra.mxu0 0
        %796 = vmatprep.subr.bf16.mxu0 0
        %797 = vmatpush2.bf16.msra.mxu0 0
        %798 = vmatprep.subr.bf16.mxu0 0
        %799 = vmatpush2.bf16.msra.mxu0 0
        %800 = vmatprep.subr.bf16.mxu0 0
        %801 = vmatpush2.bf16.msra.mxu0 0
        %802 = vmatprep.subr.bf16.mxu0 0
        %803 = vmatpush2.bf16.msra.mxu0 0
        %804 = vmatprep.subr.bf16.mxu0 0
        %805 = vmatpush2.bf16.msra.mxu0 0
        %806 = vmatprep.subr.bf16.mxu0 0
        %807 = vmatpush2.bf16.msra.mxu0 0
        %808 = vmatprep.mubr.bf16.mxu0 0
        %809 = vmatmul.mubr.bf16.gmra.mxu0 %v608
        %v810 = vpop.f32.mrf.mxu0
        %v811 = vadd.f32 0.0, %v810
        %v812 = vpop.f32.mrf.mxu0
        %v813 = vadd.f32 0.0, %v812
        %v814 = vpop.f32.mrf.mxu0
        %v815 = vadd.f32 0.0, %v814
        %v816 = vpop.f32.mrf.mxu0
        %v817 = vadd.f32 0.0, %v816
        %818 = vmatprep.mubr.bf16.mxu0 0
        %819 = vmatmul.mubr.bf16.gmra.mxu0 %v609
        %v820 = vpop.f32.mrf.mxu0
        %v821 = vadd.f32 0.0, %v820
        %v822 = vpop.f32.mrf.mxu0
        %v823 = vadd.f32 0.0, %v822
        %v824 = vpop.f32.mrf.mxu0
        %v825 = vadd.f32 0.0, %v824
        %v826 = vpop.f32.mrf.mxu0
        %v827 = vadd.f32 0.0, %v826
        %828 = vmatprep.mubr.bf16.mxu0 0
        %829 = vmatmul.mubr.bf16.gmra.mxu0 %v610
        %v830 = vpop.f32.mrf.mxu0
        %v831 = vadd.f32 0.0, %v830
        %v832 = vpop.f32.mrf.mxu0
        %v833 = vadd.f32 0.0, %v832
        %v834 = vpop.f32.mrf.mxu0
        %v835 = vadd.f32 0.0, %v834
        %v836 = vpop.f32.mrf.mxu0
        %v837 = vadd.f32 0.0, %v836
        %838 = vmatprep.mubr.bf16.mxu0 0
        %839 = vmatmul.mubr.bf16.gmra.mxu0 %v611
        %v840 = vpop.f32.mrf.mxu0
        %v841 = vadd.f32 0.0, %v840
        %v842 = vpop.f32.mrf.mxu0
        %v843 = vadd.f32 0.0, %v842
        %v844 = vpop.f32.mrf.mxu0
        %v845 = vadd.f32 0.0, %v844
        %v846 = vpop.f32.mrf.mxu0
        %v847 = vadd.f32 0.0, %v846
        %848 = vmatprep.mubr.bf16.mxu0 0
        %849 = vmatmul.mubr.bf16.gmra.mxu0 %v612
        %v850 = vpop.f32.mrf.mxu0
        %v851 = vadd.f32 0.0, %v850
        %v852 = vpop.f32.mrf.mxu0
        %v853 = vadd.f32 0.0, %v852
        %v854 = vpop.f32.mrf.mxu0
        %v855 = vadd.f32 0.0, %v854
        %v856 = vpop.f32.mrf.mxu0
        %v857 = vadd.f32 0.0, %v856
        %858 = vmatprep.mubr.bf16.mxu0 0
        %859 = vmatmul.mubr.bf16.gmra.mxu0 %v613
        %v860 = vpop.f32.mrf.mxu0
        %v861 = vadd.f32 0.0, %v860
        %v862 = vpop.f32.mrf.mxu0
        %v863 = vadd.f32 0.0, %v862
        %v864 = vpop.f32.mrf.mxu0
        %v865 = vadd.f32 0.0, %v864
        %v866 = vpop.f32.mrf.mxu0
        %v867 = vadd.f32 0.0, %v866
        %868 = vmatprep.mubr.bf16.mxu0 0
        %869 = vmatmul.mubr.bf16.gmra.mxu0 %v614
        %v870 = vpop.f32.mrf.mxu0
        %v871 = vadd.f32 0.0, %v870
        %v872 = vpop.f32.mrf.mxu0
        %v873 = vadd.f32 0.0, %v872
        %v874 = vpop.f32.mrf.mxu0
        %v875 = vadd.f32 0.0, %v874
        %v876 = vpop.f32.mrf.mxu0
        %v877 = vadd.f32 0.0, %v876
        %878 = vmatprep.mubr.bf16.mxu0 0
        %879 = vmatmul.mubr.bf16.gmra.mxu0 %v615
        %v880 = vpop.f32.mrf.mxu0
        %v881 = vadd.f32 0.0, %v880
        %v882 = vpop.f32.mrf.mxu0
        %v883 = vadd.f32 0.0, %v882
        %v884 = vpop.f32.mrf.mxu0
        %v885 = vadd.f32 0.0, %v884
        %v886 = vpop.f32.mrf.mxu0
        %v887 = vadd.f32 0.0, %v886
        %888 = vdwg.mxu0
        %889 = vmatprep.subr.bf16.mxu0 0
        %890 = vmatpush1.bf16.msra.mxu0 %v751
        %891 = vmatprep.subr.bf16.mxu0 0
        %892 = vmatpush1.bf16.msra.mxu0 %v748
        %893 = vmatprep.subr.bf16.mxu0 0
        %894 = vmatpush1.bf16.msra.mxu0 %v745
        %895 = vmatprep.subr.bf16.mxu0 0
        %896 = vmatpush1.bf16.msra.mxu0 %v742
        %897 = vmatprep.subr.bf16.mxu0 0
        %898 = vmatpush1.bf16.msra.mxu0 %v739
        %899 = vmatprep.subr.bf16.mxu0 0
        %900 = vmatpush1.bf16.msra.mxu0 %v736
        %901 = vmatprep.subr.bf16.mxu0 0
        %902 = vmatpush1.bf16.msra.mxu0 %v733
        %903 = vmatprep.subr.bf16.mxu0 0
        %904 = vmatpush1.bf16.msra.mxu0 %v730
        %905 = vmatprep.subr.bf16.mxu0 0
        %906 = vmatpush2.bf16.msra.mxu0 0
        %907 = vmatprep.subr.bf16.mxu0 0
        %908 = vmatpush2.bf16.msra.mxu0 0
        %909 = vmatprep.subr.bf16.mxu0 0
        %910 = vmatpush2.bf16.msra.mxu0 0
        %911 = vmatprep.subr.bf16.mxu0 0
        %912 = vmatpush2.bf16.msra.mxu0 0
        %913 = vmatprep.subr.bf16.mxu0 0
        %914 = vmatpush2.bf16.msra.mxu0 0
        %915 = vmatprep.subr.bf16.mxu0 0
        %916 = vmatpush2.bf16.msra.mxu0 0
        %917 = vmatprep.subr.bf16.mxu0 0
        %918 = vmatpush2.bf16.msra.mxu0 0
        %919 = vmatprep.subr.bf16.mxu0 0
        %920 = vmatpush2.bf16.msra.mxu0 0
        %921 = vmatprep.mubr.bf16.mxu0 0
        %922 = vmatmul.mubr.bf16.gmra.mxu0 %v608
        %v923 = vpop.f32.mrf.mxu0
        %v924 = vadd.f32 0.0, %v923
        %v925 = vpop.f32.mrf.mxu0
        %v926 = vpop.f32.mrf.mxu0
        %v927 = vadd.f32 0.0, %v926
        %v928 = vpop.f32.mrf.mxu0
        %929 = vmatprep.mubr.bf16.mxu0 0
        %930 = vmatmul.mubr.bf16.gmra.mxu0 %v609
        %v931 = vpop.f32.mrf.mxu0
        %v932 = vadd.f32 0.0, %v931
        %v933 = vpop.f32.mrf.mxu0
        %v934 = vpop.f32.mrf.mxu0
        %v935 = vadd.f32 0.0, %v934
        %v936 = vpop.f32.mrf.mxu0
        %937 = vmatprep.mubr.bf16.mxu0 0
        %938 = vmatmul.mubr.bf16.gmra.mxu0 %v610
        %v939 = vpop.f32.mrf.mxu0
        %v940 = vadd.f32 0.0, %v939
        %v941 = vpop.f32.mrf.mxu0
        %v942 = vpop.f32.mrf.mxu0
        %v943 = vadd.f32 0.0, %v942
        %v944 = vpop.f32.mrf.mxu0
        %945 = vmatprep.mubr.bf16.mxu0 0
        %946 = vmatmul.mubr.bf16.gmra.mxu0 %v611
        %v947 = vpop.f32.mrf.mxu0
        %v948 = vadd.f32 0.0, %v947
        %v949 = vpop.f32.mrf.mxu0
        %v950 = vpop.f32.mrf.mxu0
        %v951 = vadd.f32 0.0, %v950
        %v952 = vpop.f32.mrf.mxu0
        %953 = vmatprep.mubr.bf16.mxu0 0
        %954 = vmatmul.mubr.bf16.gmra.mxu0 %v612
        %v955 = vpop.f32.mrf.mxu0
        %v956 = vadd.f32 0.0, %v955
        %v957 = vpop.f32.mrf.mxu0
        %v958 = vpop.f32.mrf.mxu0
        %v959 = vadd.f32 0.0, %v958
        %v960 = vpop.f32.mrf.mxu0
        %961 = vmatprep.mubr.bf16.mxu0 0
        %962 = vmatmul.mubr.bf16.gmra.mxu0 %v613
        %v963 = vpop.f32.mrf.mxu0
        %v964 = vadd.f32 0.0, %v963
        %v965 = vpop.f32.mrf.mxu0
        %v966 = vpop.f32.mrf.mxu0
        %v967 = vadd.f32 0.0, %v966
        %v968 = vpop.f32.mrf.mxu0
        %969 = vmatprep.mubr.bf16.mxu0 0
        %970 = vmatmul.mubr.bf16.gmra.mxu0 %v614
        %v971 = vpop.f32.mrf.mxu0
        %v972 = vadd.f32 0.0, %v971
        %v973 = vpop.f32.mrf.mxu0
        %v974 = vpop.f32.mrf.mxu0
        %v975 = vadd.f32 0.0, %v974
        %v976 = vpop.f32.mrf.mxu0
        %977 = vmatprep.mubr.bf16.mxu0 0
        %978 = vmatmul.mubr.bf16.gmra.mxu0 %v615
        %v979 = vpop.f32.mrf.mxu0
        %v980 = vadd.f32 0.0, %v979
        %v981 = vpop.f32.mrf.mxu0
        %v982 = vpop.f32.mrf.mxu0
        %v983 = vadd.f32 0.0, %v982
        %v984 = vpop.f32.mrf.mxu0
        %985 = vdwg.mxu0
        %v986 = vpack.c.bf16 %v815, %v811
        %v987 = vpack.c.bf16 %v825, %v821
        %v988 = vpack.c.bf16 %v835, %v831
        %v989 = vpack.c.bf16 %v845, %v841
        %v990 = vpack.c.bf16 %v855, %v851
        %v991 = vpack.c.bf16 %v865, %v861
        %v992 = vpack.c.bf16 %v875, %v871
        %v993 = vpack.c.bf16 %v885, %v881
        %1002 = vrot.lane.b32.xlu0 %v986, 64
        %v1003 = vpop.permute.xlu0 %1002
        %1004 = vrot.lane.b32.xlu0 %v987, 64
        %v1005 = vpop.permute.xlu0 %1004
        %1006 = vrot.lane.b32.xlu0 %v988, 64
        %v1007 = vpop.permute.xlu0 %1006
        %1008 = vrot.lane.b32.xlu0 %v989, 64
        %v1009 = vpop.permute.xlu0 %1008
        %1010 = vrot.lane.b32.xlu0 %v990, 64
        %v1011 = vpop.permute.xlu0 %1010
        %1012 = vrot.lane.b32.xlu0 %v991, 64
        %v1013 = vpop.permute.xlu0 %1012
        %1014 = vrot.lane.b32.xlu0 %v992, 64
        %v1015 = vpop.permute.xlu0 %1014
        %1016 = vrot.lane.b32.xlu0 %v993, 64
        %v1017 = vpop.permute.xlu0 %1016
        %v1020 = vpack.i.b16 %v1003, %v986
        %v1022 = vshrl.u32 %v986, 16
        %v1023 = vshrl.u32 %v1003, 16
        %v1024 = vpack.i.b16 %v1023, %v1022
        %v1027 = vpack.i.b16 0, 0
        %v1029 = vshrl.u32 0, 16
        %v1030 = vpack.i.b16 %v1029, %v1029
        %v1034 = vpack.i.b16 %v1005, %v987
        %v1036 = vshrl.u32 %v987, 16
        %v1037 = vshrl.u32 %v1005, 16
        %v1038 = vpack.i.b16 %v1037, %v1036
        %v1042 = vpack.i.b16 %v1007, %v988
        %v1044 = vshrl.u32 %v988, 16
        %v1045 = vshrl.u32 %v1007, 16
        %v1046 = vpack.i.b16 %v1045, %v1044
        %v1050 = vpack.i.b16 %v1009, %v989
        %v1052 = vshrl.u32 %v989, 16
        %v1053 = vshrl.u32 %v1009, 16
        %v1054 = vpack.i.b16 %v1053, %v1052
        %v1058 = vpack.i.b16 %v1011, %v990
        %v1060 = vshrl.u32 %v990, 16
        %v1061 = vshrl.u32 %v1011, 16
        %v1062 = vpack.i.b16 %v1061, %v1060
        %v1066 = vpack.i.b16 %v1013, %v991
        %v1068 = vshrl.u32 %v991, 16
        %v1069 = vshrl.u32 %v1013, 16
        %v1070 = vpack.i.b16 %v1069, %v1068
        %v1074 = vpack.i.b16 %v1015, %v992
        %v1076 = vshrl.u32 %v992, 16
        %v1077 = vshrl.u32 %v1015, 16
        %v1078 = vpack.i.b16 %v1077, %v1076
        %v1082 = vpack.i.b16 %v1017, %v993
        %v1084 = vshrl.u32 %v993, 16
        %v1085 = vshrl.u32 %v1017, 16
        %v1086 = vpack.i.b16 %v1085, %v1084
        %v1088 = vcombine.high %v1020, %v1027
        %v1090 = vunpack.c.l.s4 1983009808
        %v1091 = vunpack.c.0.s8 %v1090
        %v1092 = vlaneseq
        %v1093 = vshrl.u32 %v1092, 7
        %v1094 = vsub.s32 %v1091, %v1093
        %v1095 = vrot.slane %v1020, %v1094
        %v1097 = vunpack.c.l.s4 1983009808
        %v1098 = vunpack.c.0.s8 %v1097
        %v1099 = vlaneseq
        %v1100 = vshrl.u32 %v1099, 7
        %v1101 = vsub.s32 %v1098, %v1100
        %v1102 = vrot.slane %v1088, %v1101
        %v1103 = vcombine.high %v1095, 0
        %v1105 = vunpack.c.l.s4 1934713408
        %v1106 = vunpack.c.0.s8 %v1105
        %v1107 = vlaneseq
        %v1108 = vshrl.u32 %v1107, 7
        %v1109 = vsub.s32 %v1106, %v1108
        %v1110 = vrot.slane %v1095, %v1109
        %v1112 = vunpack.c.l.s4 1934713408
        %v1113 = vunpack.c.0.s8 %v1112
        %v1114 = vlaneseq
        %v1115 = vshrl.u32 %v1114, 7
        %v1116 = vsub.s32 %v1113, %v1115
        %v1117 = vrot.slane %v1103, %v1116
        %v1118 = vcombine.high %v1102, 0
        %v1120 = vunpack.c.l.s4 1934713408
        %v1121 = vunpack.c.0.s8 %v1120
        %v1122 = vlaneseq
        %v1123 = vshrl.u32 %v1122, 7
        %v1124 = vsub.s32 %v1121, %v1123
        %v1125 = vrot.slane %v1102, %v1124
        %v1127 = vunpack.c.l.s4 1934713408
        %v1128 = vunpack.c.0.s8 %v1127
        %v1129 = vlaneseq
        %v1130 = vshrl.u32 %v1129, 7
        %v1131 = vsub.s32 %v1128, %v1130
        %v1132 = vrot.slane %v1118, %v1131
        %v1133 = vcombine.high %v1110, 0
        %v1134 = vcombine.high %v1117, 0
        %v1135 = vcombine.high %v1125, 0
        %v1136 = vcombine.high %v1132, 0
        %v1137 = vcombine.high %v1024, %v1030
        %v1139 = vunpack.c.l.s4 1983009808
        %v1140 = vunpack.c.0.s8 %v1139
        %v1141 = vlaneseq
        %v1142 = vshrl.u32 %v1141, 7
        %v1143 = vsub.s32 %v1140, %v1142
        %v1144 = vrot.slane %v1024, %v1143
        %v1146 = vunpack.c.l.s4 1983009808
        %v1147 = vunpack.c.0.s8 %v1146
        %v1148 = vlaneseq
        %v1149 = vshrl.u32 %v1148, 7
        %v1150 = vsub.s32 %v1147, %v1149
        %v1151 = vrot.slane %v1137, %v1150
        %v1152 = vcombine.high %v1144, 0
        %v1154 = vunpack.c.l.s4 1934713408
        %v1155 = vunpack.c.0.s8 %v1154
        %v1156 = vlaneseq
        %v1157 = vshrl.u32 %v1156, 7
        %v1158 = vsub.s32 %v1155, %v1157
        %v1159 = vrot.slane %v1144, %v1158
        %v1161 = vunpack.c.l.s4 1934713408
        %v1162 = vunpack.c.0.s8 %v1161
        %v1163 = vlaneseq
        %v1164 = vshrl.u32 %v1163, 7
        %v1165 = vsub.s32 %v1162, %v1164
        %v1166 = vrot.slane %v1152, %v1165
        %v1167 = vcombine.high %v1151, 0
        %v1169 = vunpack.c.l.s4 1934713408
        %v1170 = vunpack.c.0.s8 %v1169
        %v1171 = vlaneseq
        %v1172 = vshrl.u32 %v1171, 7
        %v1173 = vsub.s32 %v1170, %v1172
        %v1174 = vrot.slane %v1151, %v1173
        %v1176 = vunpack.c.l.s4 1934713408
        %v1177 = vunpack.c.0.s8 %v1176
        %v1178 = vlaneseq
        %v1179 = vshrl.u32 %v1178, 7
        %v1180 = vsub.s32 %v1177, %v1179
        %v1181 = vrot.slane %v1167, %v1180
        %v1182 = vcombine.high %v1159, 0
        %v1183 = vcombine.high %v1166, 0
        %v1184 = vcombine.high %v1174, 0
        %v1185 = vcombine.high %v1181, 0
        %v1186 = vcombine.high %v1034, %v1027
        %v1188 = vunpack.c.l.s4 1983009808
        %v1189 = vunpack.c.0.s8 %v1188
        %v1190 = vlaneseq
        %v1191 = vshrl.u32 %v1190, 7
        %v1192 = vsub.s32 %v1189, %v1191
        %v1193 = vrot.slane %v1034, %v1192
        %v1195 = vunpack.c.l.s4 1983009808
        %v1196 = vunpack.c.0.s8 %v1195
        %v1197 = vlaneseq
        %v1198 = vshrl.u32 %v1197, 7
        %v1199 = vsub.s32 %v1196, %v1198
        %v1200 = vrot.slane %v1186, %v1199
        %v1201 = vcombine.high %v1193, 0
        %v1203 = vunpack.c.l.s4 1934713408
        %v1204 = vunpack.c.0.s8 %v1203
        %v1205 = vlaneseq
        %v1206 = vshrl.u32 %v1205, 7
        %v1207 = vsub.s32 %v1204, %v1206
        %v1208 = vrot.slane %v1193, %v1207
        %v1210 = vunpack.c.l.s4 1934713408
        %v1211 = vunpack.c.0.s8 %v1210
        %v1212 = vlaneseq
        %v1213 = vshrl.u32 %v1212, 7
        %v1214 = vsub.s32 %v1211, %v1213
        %v1215 = vrot.slane %v1201, %v1214
        %v1216 = vcombine.high %v1200, 0
        %v1218 = vunpack.c.l.s4 1934713408
        %v1219 = vunpack.c.0.s8 %v1218
        %v1220 = vlaneseq
        %v1221 = vshrl.u32 %v1220, 7
        %v1222 = vsub.s32 %v1219, %v1221
        %v1223 = vrot.slane %v1200, %v1222
        %v1225 = vunpack.c.l.s4 1934713408
        %v1226 = vunpack.c.0.s8 %v1225
        %v1227 = vlaneseq
        %v1228 = vshrl.u32 %v1227, 7
        %v1229 = vsub.s32 %v1226, %v1228
        %v1230 = vrot.slane %v1216, %v1229
        %v1231 = vcombine.high %v1208, 0
        %v1232 = vcombine.high %v1215, 0
        %v1233 = vcombine.high %v1223, 0
        %v1234 = vcombine.high %v1230, 0
        %v1235 = vcombine.high %v1038, %v1030
        %v1237 = vunpack.c.l.s4 1983009808
        %v1238 = vunpack.c.0.s8 %v1237
        %v1239 = vlaneseq
        %v1240 = vshrl.u32 %v1239, 7
        %v1241 = vsub.s32 %v1238, %v1240
        %v1242 = vrot.slane %v1038, %v1241
        %v1244 = vunpack.c.l.s4 1983009808
        %v1245 = vunpack.c.0.s8 %v1244
        %v1246 = vlaneseq
        %v1247 = vshrl.u32 %v1246, 7
        %v1248 = vsub.s32 %v1245, %v1247
        %v1249 = vrot.slane %v1235, %v1248
        %v1250 = vcombine.high %v1242, 0
        %v1252 = vunpack.c.l.s4 1934713408
        %v1253 = vunpack.c.0.s8 %v1252
        %v1254 = vlaneseq
        %v1255 = vshrl.u32 %v1254, 7
        %v1256 = vsub.s32 %v1253, %v1255
        %v1257 = vrot.slane %v1242, %v1256
        %v1259 = vunpack.c.l.s4 1934713408
        %v1260 = vunpack.c.0.s8 %v1259
        %v1261 = vlaneseq
        %v1262 = vshrl.u32 %v1261, 7
        %v1263 = vsub.s32 %v1260, %v1262
        %v1264 = vrot.slane %v1250, %v1263
        %v1265 = vcombine.high %v1249, 0
        %v1267 = vunpack.c.l.s4 1934713408
        %v1268 = vunpack.c.0.s8 %v1267
        %v1269 = vlaneseq
        %v1270 = vshrl.u32 %v1269, 7
        %v1271 = vsub.s32 %v1268, %v1270
        %v1272 = vrot.slane %v1249, %v1271
        %v1274 = vunpack.c.l.s4 1934713408
        %v1275 = vunpack.c.0.s8 %v1274
        %v1276 = vlaneseq
        %v1277 = vshrl.u32 %v1276, 7
        %v1278 = vsub.s32 %v1275, %v1277
        %v1279 = vrot.slane %v1265, %v1278
        %v1280 = vcombine.high %v1257, 0
        %v1281 = vcombine.high %v1264, 0
        %v1282 = vcombine.high %v1272, 0
        %v1283 = vcombine.high %v1279, 0
        %v1284 = vcombine.high %v1042, %v1027
        %v1286 = vunpack.c.l.s4 1983009808
        %v1287 = vunpack.c.0.s8 %v1286
        %v1288 = vlaneseq
        %v1289 = vshrl.u32 %v1288, 7
        %v1290 = vsub.s32 %v1287, %v1289
        %v1291 = vrot.slane %v1042, %v1290
        %v1293 = vunpack.c.l.s4 1983009808
        %v1294 = vunpack.c.0.s8 %v1293
        %v1295 = vlaneseq
        %v1296 = vshrl.u32 %v1295, 7
        %v1297 = vsub.s32 %v1294, %v1296
        %v1298 = vrot.slane %v1284, %v1297
        %v1299 = vcombine.high %v1291, 0
        %v1301 = vunpack.c.l.s4 1934713408
        %v1302 = vunpack.c.0.s8 %v1301
        %v1303 = vlaneseq
        %v1304 = vshrl.u32 %v1303, 7
        %v1305 = vsub.s32 %v1302, %v1304
        %v1306 = vrot.slane %v1291, %v1305
        %v1308 = vunpack.c.l.s4 1934713408
        %v1309 = vunpack.c.0.s8 %v1308
        %v1310 = vlaneseq
        %v1311 = vshrl.u32 %v1310, 7
        %v1312 = vsub.s32 %v1309, %v1311
        %v1313 = vrot.slane %v1299, %v1312
        %v1314 = vcombine.high %v1298, 0
        %v1316 = vunpack.c.l.s4 1934713408
        %v1317 = vunpack.c.0.s8 %v1316
        %v1318 = vlaneseq
        %v1319 = vshrl.u32 %v1318, 7
        %v1320 = vsub.s32 %v1317, %v1319
        %v1321 = vrot.slane %v1298, %v1320
        %v1323 = vunpack.c.l.s4 1934713408
        %v1324 = vunpack.c.0.s8 %v1323
        %v1325 = vlaneseq
        %v1326 = vshrl.u32 %v1325, 7
        %v1327 = vsub.s32 %v1324, %v1326
        %v1328 = vrot.slane %v1314, %v1327
        %v1329 = vcombine.high %v1306, 0
        %v1330 = vcombine.high %v1313, 0
        %v1331 = vcombine.high %v1321, 0
        %v1332 = vcombine.high %v1328, 0
        %v1333 = vcombine.high %v1046, %v1030
        %v1335 = vunpack.c.l.s4 1983009808
        %v1336 = vunpack.c.0.s8 %v1335
        %v1337 = vlaneseq
        %v1338 = vshrl.u32 %v1337, 7
        %v1339 = vsub.s32 %v1336, %v1338
        %v1340 = vrot.slane %v1046, %v1339
        %v1342 = vunpack.c.l.s4 1983009808
        %v1343 = vunpack.c.0.s8 %v1342
        %v1344 = vlaneseq
        %v1345 = vshrl.u32 %v1344, 7
        %v1346 = vsub.s32 %v1343, %v1345
        %v1347 = vrot.slane %v1333, %v1346
        %v1348 = vcombine.high %v1340, 0
        %v1350 = vunpack.c.l.s4 1934713408
        %v1351 = vunpack.c.0.s8 %v1350
        %v1352 = vlaneseq
        %v1353 = vshrl.u32 %v1352, 7
        %v1354 = vsub.s32 %v1351, %v1353
        %v1355 = vrot.slane %v1340, %v1354
        %v1357 = vunpack.c.l.s4 1934713408
        %v1358 = vunpack.c.0.s8 %v1357
        %v1359 = vlaneseq
        %v1360 = vshrl.u32 %v1359, 7
        %v1361 = vsub.s32 %v1358, %v1360
        %v1362 = vrot.slane %v1348, %v1361
        %v1363 = vcombine.high %v1347, 0
        %v1365 = vunpack.c.l.s4 1934713408
        %v1366 = vunpack.c.0.s8 %v1365
        %v1367 = vlaneseq
        %v1368 = vshrl.u32 %v1367, 7
        %v1369 = vsub.s32 %v1366, %v1368
        %v1370 = vrot.slane %v1347, %v1369
        %v1372 = vunpack.c.l.s4 1934713408
        %v1373 = vunpack.c.0.s8 %v1372
        %v1374 = vlaneseq
        %v1375 = vshrl.u32 %v1374, 7
        %v1376 = vsub.s32 %v1373, %v1375
        %v1377 = vrot.slane %v1363, %v1376
        %v1378 = vcombine.high %v1355, 0
        %v1379 = vcombine.high %v1362, 0
        %v1380 = vcombine.high %v1370, 0
        %v1381 = vcombine.high %v1377, 0
        %v1382 = vcombine.high %v1050, %v1027
        %v1384 = vunpack.c.l.s4 1983009808
        %v1385 = vunpack.c.0.s8 %v1384
        %v1386 = vlaneseq
        %v1387 = vshrl.u32 %v1386, 7
        %v1388 = vsub.s32 %v1385, %v1387
        %v1389 = vrot.slane %v1050, %v1388
        %v1391 = vunpack.c.l.s4 1983009808
        %v1392 = vunpack.c.0.s8 %v1391
        %v1393 = vlaneseq
        %v1394 = vshrl.u32 %v1393, 7
        %v1395 = vsub.s32 %v1392, %v1394
        %v1396 = vrot.slane %v1382, %v1395
        %v1397 = vcombine.high %v1389, 0
        %v1399 = vunpack.c.l.s4 1934713408
        %v1400 = vunpack.c.0.s8 %v1399
        %v1401 = vlaneseq
        %v1402 = vshrl.u32 %v1401, 7
        %v1403 = vsub.s32 %v1400, %v1402
        %v1404 = vrot.slane %v1389, %v1403
        %v1406 = vunpack.c.l.s4 1934713408
        %v1407 = vunpack.c.0.s8 %v1406
        %v1408 = vlaneseq
        %v1409 = vshrl.u32 %v1408, 7
        %v1410 = vsub.s32 %v1407, %v1409
        %v1411 = vrot.slane %v1397, %v1410
        %v1412 = vcombine.high %v1396, 0
        %v1414 = vunpack.c.l.s4 1934713408
        %v1415 = vunpack.c.0.s8 %v1414
        %v1416 = vlaneseq
        %v1417 = vshrl.u32 %v1416, 7
        %v1418 = vsub.s32 %v1415, %v1417
        %v1419 = vrot.slane %v1396, %v1418
        %v1421 = vunpack.c.l.s4 1934713408
        %v1422 = vunpack.c.0.s8 %v1421
        %v1423 = vlaneseq
        %v1424 = vshrl.u32 %v1423, 7
        %v1425 = vsub.s32 %v1422, %v1424
        %v1426 = vrot.slane %v1412, %v1425
        %v1427 = vcombine.high %v1404, 0
        %v1428 = vcombine.high %v1411, 0
        %v1429 = vcombine.high %v1419, 0
        %v1430 = vcombine.high %v1426, 0
        %v1431 = vcombine.high %v1054, %v1030
        %v1433 = vunpack.c.l.s4 1983009808
        %v1434 = vunpack.c.0.s8 %v1433
        %v1435 = vlaneseq
        %v1436 = vshrl.u32 %v1435, 7
        %v1437 = vsub.s32 %v1434, %v1436
        %v1438 = vrot.slane %v1054, %v1437
        %v1440 = vunpack.c.l.s4 1983009808
        %v1441 = vunpack.c.0.s8 %v1440
        %v1442 = vlaneseq
        %v1443 = vshrl.u32 %v1442, 7
        %v1444 = vsub.s32 %v1441, %v1443
        %v1445 = vrot.slane %v1431, %v1444
        %v1446 = vcombine.high %v1438, 0
        %v1448 = vunpack.c.l.s4 1934713408
        %v1449 = vunpack.c.0.s8 %v1448
        %v1450 = vlaneseq
        %v1451 = vshrl.u32 %v1450, 7
        %v1452 = vsub.s32 %v1449, %v1451
        %v1453 = vrot.slane %v1438, %v1452
        %v1455 = vunpack.c.l.s4 1934713408
        %v1456 = vunpack.c.0.s8 %v1455
        %v1457 = vlaneseq
        %v1458 = vshrl.u32 %v1457, 7
        %v1459 = vsub.s32 %v1456, %v1458
        %v1460 = vrot.slane %v1446, %v1459
        %v1461 = vcombine.high %v1445, 0
        %v1463 = vunpack.c.l.s4 1934713408
        %v1464 = vunpack.c.0.s8 %v1463
        %v1465 = vlaneseq
        %v1466 = vshrl.u32 %v1465, 7
        %v1467 = vsub.s32 %v1464, %v1466
        %v1468 = vrot.slane %v1445, %v1467
        %v1470 = vunpack.c.l.s4 1934713408
        %v1471 = vunpack.c.0.s8 %v1470
        %v1472 = vlaneseq
        %v1473 = vshrl.u32 %v1472, 7
        %v1474 = vsub.s32 %v1471, %v1473
        %v1475 = vrot.slane %v1461, %v1474
        %v1476 = vcombine.high %v1453, 0
        %v1477 = vcombine.high %v1460, 0
        %v1478 = vcombine.high %v1468, 0
        %v1479 = vcombine.high %v1475, 0
        %v1480 = vcombine.high %v1058, %v1027
        %v1482 = vunpack.c.l.s4 1983009808
        %v1483 = vunpack.c.0.s8 %v1482
        %v1484 = vlaneseq
        %v1485 = vshrl.u32 %v1484, 7
        %v1486 = vsub.s32 %v1483, %v1485
        %v1487 = vrot.slane %v1058, %v1486
        %v1489 = vunpack.c.l.s4 1983009808
        %v1490 = vunpack.c.0.s8 %v1489
        %v1491 = vlaneseq
        %v1492 = vshrl.u32 %v1491, 7
        %v1493 = vsub.s32 %v1490, %v1492
        %v1494 = vrot.slane %v1480, %v1493
        %v1495 = vcombine.high %v1487, 0
        %v1497 = vunpack.c.l.s4 1934713408
        %v1498 = vunpack.c.0.s8 %v1497
        %v1499 = vlaneseq
        %v1500 = vshrl.u32 %v1499, 7
        %v1501 = vsub.s32 %v1498, %v1500
        %v1502 = vrot.slane %v1487, %v1501
        %v1504 = vunpack.c.l.s4 1934713408
        %v1505 = vunpack.c.0.s8 %v1504
        %v1506 = vlaneseq
        %v1507 = vshrl.u32 %v1506, 7
        %v1508 = vsub.s32 %v1505, %v1507
        %v1509 = vrot.slane %v1495, %v1508
        %v1510 = vcombine.high %v1494, 0
        %v1512 = vunpack.c.l.s4 1934713408
        %v1513 = vunpack.c.0.s8 %v1512
        %v1514 = vlaneseq
        %v1515 = vshrl.u32 %v1514, 7
        %v1516 = vsub.s32 %v1513, %v1515
        %v1517 = vrot.slane %v1494, %v1516
        %v1519 = vunpack.c.l.s4 1934713408
        %v1520 = vunpack.c.0.s8 %v1519
        %v1521 = vlaneseq
        %v1522 = vshrl.u32 %v1521, 7
        %v1523 = vsub.s32 %v1520, %v1522
        %v1524 = vrot.slane %v1510, %v1523
        %v1525 = vcombine.high %v1502, 0
        %v1526 = vcombine.high %v1509, 0
        %v1527 = vcombine.high %v1517, 0
        %v1528 = vcombine.high %v1524, 0
        %v1529 = vcombine.high %v1062, %v1030
        %v1531 = vunpack.c.l.s4 1983009808
        %v1532 = vunpack.c.0.s8 %v1531
        %v1533 = vlaneseq
        %v1534 = vshrl.u32 %v1533, 7
        %v1535 = vsub.s32 %v1532, %v1534
        %v1536 = vrot.slane %v1062, %v1535
        %v1538 = vunpack.c.l.s4 1983009808
        %v1539 = vunpack.c.0.s8 %v1538
        %v1540 = vlaneseq
        %v1541 = vshrl.u32 %v1540, 7
        %v1542 = vsub.s32 %v1539, %v1541
        %v1543 = vrot.slane %v1529, %v1542
        %v1544 = vcombine.high %v1536, 0
        %v1546 = vunpack.c.l.s4 1934713408
        %v1547 = vunpack.c.0.s8 %v1546
        %v1548 = vlaneseq
        %v1549 = vshrl.u32 %v1548, 7
        %v1550 = vsub.s32 %v1547, %v1549
        %v1551 = vrot.slane %v1536, %v1550
        %v1553 = vunpack.c.l.s4 1934713408
        %v1554 = vunpack.c.0.s8 %v1553
        %v1555 = vlaneseq
        %v1556 = vshrl.u32 %v1555, 7
        %v1557 = vsub.s32 %v1554, %v1556
        %v1558 = vrot.slane %v1544, %v1557
        %v1559 = vcombine.high %v1543, 0
        %v1561 = vunpack.c.l.s4 1934713408
        %v1562 = vunpack.c.0.s8 %v1561
        %v1563 = vlaneseq
        %v1564 = vshrl.u32 %v1563, 7
        %v1565 = vsub.s32 %v1562, %v1564
        %v1566 = vrot.slane %v1543, %v1565
        %v1568 = vunpack.c.l.s4 1934713408
        %v1569 = vunpack.c.0.s8 %v1568
        %v1570 = vlaneseq
        %v1571 = vshrl.u32 %v1570, 7
        %v1572 = vsub.s32 %v1569, %v1571
        %v1573 = vrot.slane %v1559, %v1572
        %v1574 = vcombine.high %v1551, 0
        %v1575 = vcombine.high %v1558, 0
        %v1576 = vcombine.high %v1566, 0
        %v1577 = vcombine.high %v1573, 0
        %v1578 = vcombine.high %v1066, %v1027
        %v1580 = vunpack.c.l.s4 1983009808
        %v1581 = vunpack.c.0.s8 %v1580
        %v1582 = vlaneseq
        %v1583 = vshrl.u32 %v1582, 7
        %v1584 = vsub.s32 %v1581, %v1583
        %v1585 = vrot.slane %v1066, %v1584
        %v1587 = vunpack.c.l.s4 1983009808
        %v1588 = vunpack.c.0.s8 %v1587
        %v1589 = vlaneseq
        %v1590 = vshrl.u32 %v1589, 7
        %v1591 = vsub.s32 %v1588, %v1590
        %v1592 = vrot.slane %v1578, %v1591
        %v1593 = vcombine.high %v1585, 0
        %v1595 = vunpack.c.l.s4 1934713408
        %v1596 = vunpack.c.0.s8 %v1595
        %v1597 = vlaneseq
        %v1598 = vshrl.u32 %v1597, 7
        %v1599 = vsub.s32 %v1596, %v1598
        %v1600 = vrot.slane %v1585, %v1599
        %v1602 = vunpack.c.l.s4 1934713408
        %v1603 = vunpack.c.0.s8 %v1602
        %v1604 = vlaneseq
        %v1605 = vshrl.u32 %v1604, 7
        %v1606 = vsub.s32 %v1603, %v1605
        %v1607 = vrot.slane %v1593, %v1606
        %v1608 = vcombine.high %v1592, 0
        %v1610 = vunpack.c.l.s4 1934713408
        %v1611 = vunpack.c.0.s8 %v1610
        %v1612 = vlaneseq
        %v1613 = vshrl.u32 %v1612, 7
        %v1614 = vsub.s32 %v1611, %v1613
        %v1615 = vrot.slane %v1592, %v1614
        %v1617 = vunpack.c.l.s4 1934713408
        %v1618 = vunpack.c.0.s8 %v1617
        %v1619 = vlaneseq
        %v1620 = vshrl.u32 %v1619, 7
        %v1621 = vsub.s32 %v1618, %v1620
        %v1622 = vrot.slane %v1608, %v1621
        %v1623 = vcombine.high %v1600, 0
        %v1624 = vcombine.high %v1607, 0
        %v1625 = vcombine.high %v1615, 0
        %v1626 = vcombine.high %v1622, 0
        %v1627 = vcombine.high %v1070, %v1030
        %v1629 = vunpack.c.l.s4 1983009808
        %v1630 = vunpack.c.0.s8 %v1629
        %v1631 = vlaneseq
        %v1632 = vshrl.u32 %v1631, 7
        %v1633 = vsub.s32 %v1630, %v1632
        %v1634 = vrot.slane %v1070, %v1633
        %v1636 = vunpack.c.l.s4 1983009808
        %v1637 = vunpack.c.0.s8 %v1636
        %v1638 = vlaneseq
        %v1639 = vshrl.u32 %v1638, 7
        %v1640 = vsub.s32 %v1637, %v1639
        %v1641 = vrot.slane %v1627, %v1640
        %v1642 = vcombine.high %v1634, 0
        %v1644 = vunpack.c.l.s4 1934713408
        %v1645 = vunpack.c.0.s8 %v1644
        %v1646 = vlaneseq
        %v1647 = vshrl.u32 %v1646, 7
        %v1648 = vsub.s32 %v1645, %v1647
        %v1649 = vrot.slane %v1634, %v1648
        %v1651 = vunpack.c.l.s4 1934713408
        %v1652 = vunpack.c.0.s8 %v1651
        %v1653 = vlaneseq
        %v1654 = vshrl.u32 %v1653, 7
        %v1655 = vsub.s32 %v1652, %v1654
        %v1656 = vrot.slane %v1642, %v1655
        %v1657 = vcombine.high %v1641, 0
        %v1659 = vunpack.c.l.s4 1934713408
        %v1660 = vunpack.c.0.s8 %v1659
        %v1661 = vlaneseq
        %v1662 = vshrl.u32 %v1661, 7
        %v1663 = vsub.s32 %v1660, %v1662
        %v1664 = vrot.slane %v1641, %v1663
        %v1666 = vunpack.c.l.s4 1934713408
        %v1667 = vunpack.c.0.s8 %v1666
        %v1668 = vlaneseq
        %v1669 = vshrl.u32 %v1668, 7
        %v1670 = vsub.s32 %v1667, %v1669
        %v1671 = vrot.slane %v1657, %v1670
        %v1672 = vcombine.high %v1649, 0
        %v1673 = vcombine.high %v1656, 0
        %v1674 = vcombine.high %v1664, 0
        %v1675 = vcombine.high %v1671, 0
        %v1676 = vcombine.high %v1074, %v1027
        %v1678 = vunpack.c.l.s4 1983009808
        %v1679 = vunpack.c.0.s8 %v1678
        %v1680 = vlaneseq
        %v1681 = vshrl.u32 %v1680, 7
        %v1682 = vsub.s32 %v1679, %v1681
        %v1683 = vrot.slane %v1074, %v1682
        %v1685 = vunpack.c.l.s4 1983009808
        %v1686 = vunpack.c.0.s8 %v1685
        %v1687 = vlaneseq
        %v1688 = vshrl.u32 %v1687, 7
        %v1689 = vsub.s32 %v1686, %v1688
        %v1690 = vrot.slane %v1676, %v1689
        %v1691 = vcombine.high %v1683, 0
        %v1693 = vunpack.c.l.s4 1934713408
        %v1694 = vunpack.c.0.s8 %v1693
        %v1695 = vlaneseq
        %v1696 = vshrl.u32 %v1695, 7
        %v1697 = vsub.s32 %v1694, %v1696
        %v1698 = vrot.slane %v1683, %v1697
        %v1700 = vunpack.c.l.s4 1934713408
        %v1701 = vunpack.c.0.s8 %v1700
        %v1702 = vlaneseq
        %v1703 = vshrl.u32 %v1702, 7
        %v1704 = vsub.s32 %v1701, %v1703
        %v1705 = vrot.slane %v1691, %v1704
        %v1706 = vcombine.high %v1690, 0
        %v1708 = vunpack.c.l.s4 1934713408
        %v1709 = vunpack.c.0.s8 %v1708
        %v1710 = vlaneseq
        %v1711 = vshrl.u32 %v1710, 7
        %v1712 = vsub.s32 %v1709, %v1711
        %v1713 = vrot.slane %v1690, %v1712
        %v1715 = vunpack.c.l.s4 1934713408
        %v1716 = vunpack.c.0.s8 %v1715
        %v1717 = vlaneseq
        %v1718 = vshrl.u32 %v1717, 7
        %v1719 = vsub.s32 %v1716, %v1718
        %v1720 = vrot.slane %v1706, %v1719
        %v1721 = vcombine.high %v1698, 0
        %v1722 = vcombine.high %v1705, 0
        %v1723 = vcombine.high %v1713, 0
        %v1724 = vcombine.high %v1720, 0
        %v1725 = vcombine.high %v1078, %v1030
        %v1727 = vunpack.c.l.s4 1983009808
        %v1728 = vunpack.c.0.s8 %v1727
        %v1729 = vlaneseq
        %v1730 = vshrl.u32 %v1729, 7
        %v1731 = vsub.s32 %v1728, %v1730
        %v1732 = vrot.slane %v1078, %v1731
        %v1734 = vunpack.c.l.s4 1983009808
        %v1735 = vunpack.c.0.s8 %v1734
        %v1736 = vlaneseq
        %v1737 = vshrl.u32 %v1736, 7
        %v1738 = vsub.s32 %v1735, %v1737
        %v1739 = vrot.slane %v1725, %v1738
        %v1740 = vcombine.high %v1732, 0
        %v1742 = vunpack.c.l.s4 1934713408
        %v1743 = vunpack.c.0.s8 %v1742
        %v1744 = vlaneseq
        %v1745 = vshrl.u32 %v1744, 7
        %v1746 = vsub.s32 %v1743, %v1745
        %v1747 = vrot.slane %v1732, %v1746
        %v1749 = vunpack.c.l.s4 1934713408
        %v1750 = vunpack.c.0.s8 %v1749
        %v1751 = vlaneseq
        %v1752 = vshrl.u32 %v1751, 7
        %v1753 = vsub.s32 %v1750, %v1752
        %v1754 = vrot.slane %v1740, %v1753
        %v1755 = vcombine.high %v1739, 0
        %v1757 = vunpack.c.l.s4 1934713408
        %v1758 = vunpack.c.0.s8 %v1757
        %v1759 = vlaneseq
        %v1760 = vshrl.u32 %v1759, 7
        %v1761 = vsub.s32 %v1758, %v1760
        %v1762 = vrot.slane %v1739, %v1761
        %v1764 = vunpack.c.l.s4 1934713408
        %v1765 = vunpack.c.0.s8 %v1764
        %v1766 = vlaneseq
        %v1767 = vshrl.u32 %v1766, 7
        %v1768 = vsub.s32 %v1765, %v1767
        %v1769 = vrot.slane %v1755, %v1768
        %v1770 = vcombine.high %v1747, 0
        %v1771 = vcombine.high %v1754, 0
        %v1772 = vcombine.high %v1762, 0
        %v1773 = vcombine.high %v1769, 0
        %v1774 = vcombine.high %v1082, %v1027
        %v1776 = vunpack.c.l.s4 1983009808
        %v1777 = vunpack.c.0.s8 %v1776
        %v1778 = vlaneseq
        %v1779 = vshrl.u32 %v1778, 7
        %v1780 = vsub.s32 %v1777, %v1779
        %v1781 = vrot.slane %v1082, %v1780
        %v1783 = vunpack.c.l.s4 1983009808
        %v1784 = vunpack.c.0.s8 %v1783
        %v1785 = vlaneseq
        %v1786 = vshrl.u32 %v1785, 7
        %v1787 = vsub.s32 %v1784, %v1786
        %v1788 = vrot.slane %v1774, %v1787
        %v1789 = vcombine.high %v1781, 0
        %v1791 = vunpack.c.l.s4 1934713408
        %v1792 = vunpack.c.0.s8 %v1791
        %v1793 = vlaneseq
        %v1794 = vshrl.u32 %v1793, 7
        %v1795 = vsub.s32 %v1792, %v1794
        %v1796 = vrot.slane %v1781, %v1795
        %v1798 = vunpack.c.l.s4 1934713408
        %v1799 = vunpack.c.0.s8 %v1798
        %v1800 = vlaneseq
        %v1801 = vshrl.u32 %v1800, 7
        %v1802 = vsub.s32 %v1799, %v1801
        %v1803 = vrot.slane %v1789, %v1802
        %v1804 = vcombine.high %v1788, 0
        %v1806 = vunpack.c.l.s4 1934713408
        %v1807 = vunpack.c.0.s8 %v1806
        %v1808 = vlaneseq
        %v1809 = vshrl.u32 %v1808, 7
        %v1810 = vsub.s32 %v1807, %v1809
        %v1811 = vrot.slane %v1788, %v1810
        %v1813 = vunpack.c.l.s4 1934713408
        %v1814 = vunpack.c.0.s8 %v1813
        %v1815 = vlaneseq
        %v1816 = vshrl.u32 %v1815, 7
        %v1817 = vsub.s32 %v1814, %v1816
        %v1818 = vrot.slane %v1804, %v1817
        %v1819 = vcombine.high %v1796, 0
        %v1820 = vcombine.high %v1803, 0
        %v1821 = vcombine.high %v1811, 0
        %v1822 = vcombine.high %v1818, 0
        %v1823 = vcombine.high %v1086, %v1030
        %v1825 = vunpack.c.l.s4 1983009808
        %v1826 = vunpack.c.0.s8 %v1825
        %v1827 = vlaneseq
        %v1828 = vshrl.u32 %v1827, 7
        %v1829 = vsub.s32 %v1826, %v1828
        %v1830 = vrot.slane %v1086, %v1829
        %v1832 = vunpack.c.l.s4 1983009808
        %v1833 = vunpack.c.0.s8 %v1832
        %v1834 = vlaneseq
        %v1835 = vshrl.u32 %v1834, 7
        %v1836 = vsub.s32 %v1833, %v1835
        %v1837 = vrot.slane %v1823, %v1836
        %v1838 = vcombine.high %v1830, 0
        %v1840 = vunpack.c.l.s4 1934713408
        %v1841 = vunpack.c.0.s8 %v1840
        %v1842 = vlaneseq
        %v1843 = vshrl.u32 %v1842, 7
        %v1844 = vsub.s32 %v1841, %v1843
        %v1845 = vrot.slane %v1830, %v1844
        %v1847 = vunpack.c.l.s4 1934713408
        %v1848 = vunpack.c.0.s8 %v1847
        %v1849 = vlaneseq
        %v1850 = vshrl.u32 %v1849, 7
        %v1851 = vsub.s32 %v1848, %v1850
        %v1852 = vrot.slane %v1838, %v1851
        %v1853 = vcombine.high %v1837, 0
        %v1855 = vunpack.c.l.s4 1934713408
        %v1856 = vunpack.c.0.s8 %v1855
        %v1857 = vlaneseq
        %v1858 = vshrl.u32 %v1857, 7
        %v1859 = vsub.s32 %v1856, %v1858
        %v1860 = vrot.slane %v1837, %v1859
        %v1862 = vunpack.c.l.s4 1934713408
        %v1863 = vunpack.c.0.s8 %v1862
        %v1864 = vlaneseq
        %v1865 = vshrl.u32 %v1864, 7
        %v1866 = vsub.s32 %v1863, %v1865
        %v1867 = vrot.slane %v1853, %v1866
        %v1868 = vcombine.high %v1845, 0
        %v1869 = vcombine.high %v1852, 0
        %v1870 = vcombine.high %v1860, 0
        %v1871 = vcombine.high %v1867, 0
        %v1872 = vcombine.low %v1110, %v1117
        %v1874 = vunpack.c.l.s4 1983009808
        %v1875 = vunpack.c.0.s8 %v1874
        %v1876 = vlaneseq
        %v1877 = vshrl.u32 %v1876, 7
        %v1878 = vsub.s32 %v1875, %v1877
        %v1879 = vrot.slane %v1872, %v1878
        %v1880 = vcombine.low %v1133, %v1134
        %v1882 = vunpack.c.l.s4 1983009808
        %v1883 = vunpack.c.0.s8 %v1882
        %v1884 = vlaneseq
        %v1885 = vshrl.u32 %v1884, 7
        %v1886 = vsub.s32 %v1883, %v1885
        %v1887 = vrot.slane %v1880, %v1886
        %v1888 = vcombine.low %v1125, %v1132
        %v1890 = vunpack.c.l.s4 1983009808
        %v1891 = vunpack.c.0.s8 %v1890
        %v1892 = vlaneseq
        %v1893 = vshrl.u32 %v1892, 7
        %v1894 = vsub.s32 %v1891, %v1893
        %v1895 = vrot.slane %v1888, %v1894
        %v1896 = vcombine.low %v1135, %v1136
        %v1898 = vunpack.c.l.s4 1983009808
        %v1899 = vunpack.c.0.s8 %v1898
        %v1900 = vlaneseq
        %v1901 = vshrl.u32 %v1900, 7
        %v1902 = vsub.s32 %v1899, %v1901
        %v1903 = vrot.slane %v1896, %v1902
        %v1904 = vcombine.low %v1879, %v1887
        %v1906 = vunpack.c.l.s4 1934713408
        %v1907 = vunpack.c.0.s8 %v1906
        %v1908 = vlaneseq
        %v1909 = vshrl.u32 %v1908, 7
        %v1910 = vsub.s32 %v1907, %v1909
        %v1911 = vrot.slane %v1904, %v1910
        %v1912 = vcombine.low %v1895, %v1903
        %v1914 = vunpack.c.l.s4 1934713408
        %v1915 = vunpack.c.0.s8 %v1914
        %v1916 = vlaneseq
        %v1917 = vshrl.u32 %v1916, 7
        %v1918 = vsub.s32 %v1915, %v1917
        %v1919 = vrot.slane %v1912, %v1918
        %v1920 = vcombine.low %v1911, %v1919
        %v1921 = vcombine.low %v1159, %v1166
        %v1923 = vunpack.c.l.s4 1983009808
        %v1924 = vunpack.c.0.s8 %v1923
        %v1925 = vlaneseq
        %v1926 = vshrl.u32 %v1925, 7
        %v1927 = vsub.s32 %v1924, %v1926
        %v1928 = vrot.slane %v1921, %v1927
        %v1929 = vcombine.low %v1182, %v1183
        %v1931 = vunpack.c.l.s4 1983009808
        %v1932 = vunpack.c.0.s8 %v1931
        %v1933 = vlaneseq
        %v1934 = vshrl.u32 %v1933, 7
        %v1935 = vsub.s32 %v1932, %v1934
        %v1936 = vrot.slane %v1929, %v1935
        %v1937 = vcombine.low %v1174, %v1181
        %v1939 = vunpack.c.l.s4 1983009808
        %v1940 = vunpack.c.0.s8 %v1939
        %v1941 = vlaneseq
        %v1942 = vshrl.u32 %v1941, 7
        %v1943 = vsub.s32 %v1940, %v1942
        %v1944 = vrot.slane %v1937, %v1943
        %v1945 = vcombine.low %v1184, %v1185
        %v1947 = vunpack.c.l.s4 1983009808
        %v1948 = vunpack.c.0.s8 %v1947
        %v1949 = vlaneseq
        %v1950 = vshrl.u32 %v1949, 7
        %v1951 = vsub.s32 %v1948, %v1950
        %v1952 = vrot.slane %v1945, %v1951
        %v1953 = vcombine.low %v1928, %v1936
        %v1955 = vunpack.c.l.s4 1934713408
        %v1956 = vunpack.c.0.s8 %v1955
        %v1957 = vlaneseq
        %v1958 = vshrl.u32 %v1957, 7
        %v1959 = vsub.s32 %v1956, %v1958
        %v1960 = vrot.slane %v1953, %v1959
        %v1961 = vcombine.low %v1944, %v1952
        %v1963 = vunpack.c.l.s4 1934713408
        %v1964 = vunpack.c.0.s8 %v1963
        %v1965 = vlaneseq
        %v1966 = vshrl.u32 %v1965, 7
        %v1967 = vsub.s32 %v1964, %v1966
        %v1968 = vrot.slane %v1961, %v1967
        %v1969 = vcombine.low %v1960, %v1968
        %v1970 = vcombine.low %v1208, %v1215
        %v1972 = vunpack.c.l.s4 1983009808
        %v1973 = vunpack.c.0.s8 %v1972
        %v1974 = vlaneseq
        %v1975 = vshrl.u32 %v1974, 7
        %v1976 = vsub.s32 %v1973, %v1975
        %v1977 = vrot.slane %v1970, %v1976
        %v1978 = vcombine.low %v1231, %v1232
        %v1980 = vunpack.c.l.s4 1983009808
        %v1981 = vunpack.c.0.s8 %v1980
        %v1982 = vlaneseq
        %v1983 = vshrl.u32 %v1982, 7
        %v1984 = vsub.s32 %v1981, %v1983
        %v1985 = vrot.slane %v1978, %v1984
        %v1986 = vcombine.low %v1223, %v1230
        %v1988 = vunpack.c.l.s4 1983009808
        %v1989 = vunpack.c.0.s8 %v1988
        %v1990 = vlaneseq
        %v1991 = vshrl.u32 %v1990, 7
        %v1992 = vsub.s32 %v1989, %v1991
        %v1993 = vrot.slane %v1986, %v1992
        %v1994 = vcombine.low %v1233, %v1234
        %v1996 = vunpack.c.l.s4 1983009808
        %v1997 = vunpack.c.0.s8 %v1996
        %v1998 = vlaneseq
        %v1999 = vshrl.u32 %v1998, 7
        %v2000 = vsub.s32 %v1997, %v1999
        %v2001 = vrot.slane %v1994, %v2000
        %v2002 = vcombine.low %v1977, %v1985
        %v2004 = vunpack.c.l.s4 1934713408
        %v2005 = vunpack.c.0.s8 %v2004
        %v2006 = vlaneseq
        %v2007 = vshrl.u32 %v2006, 7
        %v2008 = vsub.s32 %v2005, %v2007
        %v2009 = vrot.slane %v2002, %v2008
        %v2010 = vcombine.low %v1993, %v2001
        %v2012 = vunpack.c.l.s4 1934713408
        %v2013 = vunpack.c.0.s8 %v2012
        %v2014 = vlaneseq
        %v2015 = vshrl.u32 %v2014, 7
        %v2016 = vsub.s32 %v2013, %v2015
        %v2017 = vrot.slane %v2010, %v2016
        %v2018 = vcombine.low %v2009, %v2017
        %v2019 = vcombine.low %v1257, %v1264
        %v2021 = vunpack.c.l.s4 1983009808
        %v2022 = vunpack.c.0.s8 %v2021
        %v2023 = vlaneseq
        %v2024 = vshrl.u32 %v2023, 7
        %v2025 = vsub.s32 %v2022, %v2024
        %v2026 = vrot.slane %v2019, %v2025
        %v2027 = vcombine.low %v1280, %v1281
        %v2029 = vunpack.c.l.s4 1983009808
        %v2030 = vunpack.c.0.s8 %v2029
        %v2031 = vlaneseq
        %v2032 = vshrl.u32 %v2031, 7
        %v2033 = vsub.s32 %v2030, %v2032
        %v2034 = vrot.slane %v2027, %v2033
        %v2035 = vcombine.low %v1272, %v1279
        %v2037 = vunpack.c.l.s4 1983009808
        %v2038 = vunpack.c.0.s8 %v2037
        %v2039 = vlaneseq
        %v2040 = vshrl.u32 %v2039, 7
        %v2041 = vsub.s32 %v2038, %v2040
        %v2042 = vrot.slane %v2035, %v2041
        %v2043 = vcombine.low %v1282, %v1283
        %v2045 = vunpack.c.l.s4 1983009808
        %v2046 = vunpack.c.0.s8 %v2045
        %v2047 = vlaneseq
        %v2048 = vshrl.u32 %v2047, 7
        %v2049 = vsub.s32 %v2046, %v2048
        %v2050 = vrot.slane %v2043, %v2049
        %v2051 = vcombine.low %v2026, %v2034
        %v2053 = vunpack.c.l.s4 1934713408
        %v2054 = vunpack.c.0.s8 %v2053
        %v2055 = vlaneseq
        %v2056 = vshrl.u32 %v2055, 7
        %v2057 = vsub.s32 %v2054, %v2056
        %v2058 = vrot.slane %v2051, %v2057
        %v2059 = vcombine.low %v2042, %v2050
        %v2061 = vunpack.c.l.s4 1934713408
        %v2062 = vunpack.c.0.s8 %v2061
        %v2063 = vlaneseq
        %v2064 = vshrl.u32 %v2063, 7
        %v2065 = vsub.s32 %v2062, %v2064
        %v2066 = vrot.slane %v2059, %v2065
        %v2067 = vcombine.low %v2058, %v2066
        %v2068 = vcombine.low %v1306, %v1313
        %v2070 = vunpack.c.l.s4 1983009808
        %v2071 = vunpack.c.0.s8 %v2070
        %v2072 = vlaneseq
        %v2073 = vshrl.u32 %v2072, 7
        %v2074 = vsub.s32 %v2071, %v2073
        %v2075 = vrot.slane %v2068, %v2074
        %v2076 = vcombine.low %v1329, %v1330
        %v2078 = vunpack.c.l.s4 1983009808
        %v2079 = vunpack.c.0.s8 %v2078
        %v2080 = vlaneseq
        %v2081 = vshrl.u32 %v2080, 7
        %v2082 = vsub.s32 %v2079, %v2081
        %v2083 = vrot.slane %v2076, %v2082
        %v2084 = vcombine.low %v1321, %v1328
        %v2086 = vunpack.c.l.s4 1983009808
        %v2087 = vunpack.c.0.s8 %v2086
        %v2088 = vlaneseq
        %v2089 = vshrl.u32 %v2088, 7
        %v2090 = vsub.s32 %v2087, %v2089
        %v2091 = vrot.slane %v2084, %v2090
        %v2092 = vcombine.low %v1331, %v1332
        %v2094 = vunpack.c.l.s4 1983009808
        %v2095 = vunpack.c.0.s8 %v2094
        %v2096 = vlaneseq
        %v2097 = vshrl.u32 %v2096, 7
        %v2098 = vsub.s32 %v2095, %v2097
        %v2099 = vrot.slane %v2092, %v2098
        %v2100 = vcombine.low %v2075, %v2083
        %v2102 = vunpack.c.l.s4 1934713408
        %v2103 = vunpack.c.0.s8 %v2102
        %v2104 = vlaneseq
        %v2105 = vshrl.u32 %v2104, 7
        %v2106 = vsub.s32 %v2103, %v2105
        %v2107 = vrot.slane %v2100, %v2106
        %v2108 = vcombine.low %v2091, %v2099
        %v2110 = vunpack.c.l.s4 1934713408
        %v2111 = vunpack.c.0.s8 %v2110
        %v2112 = vlaneseq
        %v2113 = vshrl.u32 %v2112, 7
        %v2114 = vsub.s32 %v2111, %v2113
        %v2115 = vrot.slane %v2108, %v2114
        %v2116 = vcombine.low %v2107, %v2115
        %v2117 = vcombine.low %v1355, %v1362
        %v2119 = vunpack.c.l.s4 1983009808
        %v2120 = vunpack.c.0.s8 %v2119
        %v2121 = vlaneseq
        %v2122 = vshrl.u32 %v2121, 7
        %v2123 = vsub.s32 %v2120, %v2122
        %v2124 = vrot.slane %v2117, %v2123
        %v2125 = vcombine.low %v1378, %v1379
        %v2127 = vunpack.c.l.s4 1983009808
        %v2128 = vunpack.c.0.s8 %v2127
        %v2129 = vlaneseq
        %v2130 = vshrl.u32 %v2129, 7
        %v2131 = vsub.s32 %v2128, %v2130
        %v2132 = vrot.slane %v2125, %v2131
        %v2133 = vcombine.low %v1370, %v1377
        %v2135 = vunpack.c.l.s4 1983009808
        %v2136 = vunpack.c.0.s8 %v2135
        %v2137 = vlaneseq
        %v2138 = vshrl.u32 %v2137, 7
        %v2139 = vsub.s32 %v2136, %v2138
        %v2140 = vrot.slane %v2133, %v2139
        %v2141 = vcombine.low %v1380, %v1381
        %v2143 = vunpack.c.l.s4 1983009808
        %v2144 = vunpack.c.0.s8 %v2143
        %v2145 = vlaneseq
        %v2146 = vshrl.u32 %v2145, 7
        %v2147 = vsub.s32 %v2144, %v2146
        %v2148 = vrot.slane %v2141, %v2147
        %v2149 = vcombine.low %v2124, %v2132
        %v2151 = vunpack.c.l.s4 1934713408
        %v2152 = vunpack.c.0.s8 %v2151
        %v2153 = vlaneseq
        %v2154 = vshrl.u32 %v2153, 7
        %v2155 = vsub.s32 %v2152, %v2154
        %v2156 = vrot.slane %v2149, %v2155
        %v2157 = vcombine.low %v2140, %v2148
        %v2159 = vunpack.c.l.s4 1934713408
        %v2160 = vunpack.c.0.s8 %v2159
        %v2161 = vlaneseq
        %v2162 = vshrl.u32 %v2161, 7
        %v2163 = vsub.s32 %v2160, %v2162
        %v2164 = vrot.slane %v2157, %v2163
        %v2165 = vcombine.low %v2156, %v2164
        %v2166 = vcombine.low %v1404, %v1411
        %v2168 = vunpack.c.l.s4 1983009808
        %v2169 = vunpack.c.0.s8 %v2168
        %v2170 = vlaneseq
        %v2171 = vshrl.u32 %v2170, 7
        %v2172 = vsub.s32 %v2169, %v2171
        %v2173 = vrot.slane %v2166, %v2172
        %v2174 = vcombine.low %v1427, %v1428
        %v2176 = vunpack.c.l.s4 1983009808
        %v2177 = vunpack.c.0.s8 %v2176
        %v2178 = vlaneseq
        %v2179 = vshrl.u32 %v2178, 7
        %v2180 = vsub.s32 %v2177, %v2179
        %v2181 = vrot.slane %v2174, %v2180
        %v2182 = vcombine.low %v1419, %v1426
        %v2184 = vunpack.c.l.s4 1983009808
        %v2185 = vunpack.c.0.s8 %v2184
        %v2186 = vlaneseq
        %v2187 = vshrl.u32 %v2186, 7
        %v2188 = vsub.s32 %v2185, %v2187
        %v2189 = vrot.slane %v2182, %v2188
        %v2190 = vcombine.low %v1429, %v1430
        %v2192 = vunpack.c.l.s4 1983009808
        %v2193 = vunpack.c.0.s8 %v2192
        %v2194 = vlaneseq
        %v2195 = vshrl.u32 %v2194, 7
        %v2196 = vsub.s32 %v2193, %v2195
        %v2197 = vrot.slane %v2190, %v2196
        %v2198 = vcombine.low %v2173, %v2181
        %v2200 = vunpack.c.l.s4 1934713408
        %v2201 = vunpack.c.0.s8 %v2200
        %v2202 = vlaneseq
        %v2203 = vshrl.u32 %v2202, 7
        %v2204 = vsub.s32 %v2201, %v2203
        %v2205 = vrot.slane %v2198, %v2204
        %v2206 = vcombine.low %v2189, %v2197
        %v2208 = vunpack.c.l.s4 1934713408
        %v2209 = vunpack.c.0.s8 %v2208
        %v2210 = vlaneseq
        %v2211 = vshrl.u32 %v2210, 7
        %v2212 = vsub.s32 %v2209, %v2211
        %v2213 = vrot.slane %v2206, %v2212
        %v2214 = vcombine.low %v2205, %v2213
        %v2215 = vcombine.low %v1453, %v1460
        %v2217 = vunpack.c.l.s4 1983009808
        %v2218 = vunpack.c.0.s8 %v2217
        %v2219 = vlaneseq
        %v2220 = vshrl.u32 %v2219, 7
        %v2221 = vsub.s32 %v2218, %v2220
        %v2222 = vrot.slane %v2215, %v2221
        %v2223 = vcombine.low %v1476, %v1477
        %v2225 = vunpack.c.l.s4 1983009808
        %v2226 = vunpack.c.0.s8 %v2225
        %v2227 = vlaneseq
        %v2228 = vshrl.u32 %v2227, 7
        %v2229 = vsub.s32 %v2226, %v2228
        %v2230 = vrot.slane %v2223, %v2229
        %v2231 = vcombine.low %v1468, %v1475
        %v2233 = vunpack.c.l.s4 1983009808
        %v2234 = vunpack.c.0.s8 %v2233
        %v2235 = vlaneseq
        %v2236 = vshrl.u32 %v2235, 7
        %v2237 = vsub.s32 %v2234, %v2236
        %v2238 = vrot.slane %v2231, %v2237
        %v2239 = vcombine.low %v1478, %v1479
        %v2241 = vunpack.c.l.s4 1983009808
        %v2242 = vunpack.c.0.s8 %v2241
        %v2243 = vlaneseq
        %v2244 = vshrl.u32 %v2243, 7
        %v2245 = vsub.s32 %v2242, %v2244
        %v2246 = vrot.slane %v2239, %v2245
        %v2247 = vcombine.low %v2222, %v2230
        %v2249 = vunpack.c.l.s4 1934713408
        %v2250 = vunpack.c.0.s8 %v2249
        %v2251 = vlaneseq
        %v2252 = vshrl.u32 %v2251, 7
        %v2253 = vsub.s32 %v2250, %v2252
        %v2254 = vrot.slane %v2247, %v2253
        %v2255 = vcombine.low %v2238, %v2246
        %v2257 = vunpack.c.l.s4 1934713408
        %v2258 = vunpack.c.0.s8 %v2257
        %v2259 = vlaneseq
        %v2260 = vshrl.u32 %v2259, 7
        %v2261 = vsub.s32 %v2258, %v2260
        %v2262 = vrot.slane %v2255, %v2261
        %v2263 = vcombine.low %v2254, %v2262
        %v2264 = vcombine.low %v1502, %v1509
        %v2266 = vunpack.c.l.s4 1983009808
        %v2267 = vunpack.c.0.s8 %v2266
        %v2268 = vlaneseq
        %v2269 = vshrl.u32 %v2268, 7
        %v2270 = vsub.s32 %v2267, %v2269
        %v2271 = vrot.slane %v2264, %v2270
        %v2272 = vcombine.low %v1525, %v1526
        %v2274 = vunpack.c.l.s4 1983009808
        %v2275 = vunpack.c.0.s8 %v2274
        %v2276 = vlaneseq
        %v2277 = vshrl.u32 %v2276, 7
        %v2278 = vsub.s32 %v2275, %v2277
        %v2279 = vrot.slane %v2272, %v2278
        %v2280 = vcombine.low %v1517, %v1524
        %v2282 = vunpack.c.l.s4 1983009808
        %v2283 = vunpack.c.0.s8 %v2282
        %v2284 = vlaneseq
        %v2285 = vshrl.u32 %v2284, 7
        %v2286 = vsub.s32 %v2283, %v2285
        %v2287 = vrot.slane %v2280, %v2286
        %v2288 = vcombine.low %v1527, %v1528
        %v2290 = vunpack.c.l.s4 1983009808
        %v2291 = vunpack.c.0.s8 %v2290
        %v2292 = vlaneseq
        %v2293 = vshrl.u32 %v2292, 7
        %v2294 = vsub.s32 %v2291, %v2293
        %v2295 = vrot.slane %v2288, %v2294
        %v2296 = vcombine.low %v2271, %v2279
        %v2298 = vunpack.c.l.s4 1934713408
        %v2299 = vunpack.c.0.s8 %v2298
        %v2300 = vlaneseq
        %v2301 = vshrl.u32 %v2300, 7
        %v2302 = vsub.s32 %v2299, %v2301
        %v2303 = vrot.slane %v2296, %v2302
        %v2304 = vcombine.low %v2287, %v2295
        %v2306 = vunpack.c.l.s4 1934713408
        %v2307 = vunpack.c.0.s8 %v2306
        %v2308 = vlaneseq
        %v2309 = vshrl.u32 %v2308, 7
        %v2310 = vsub.s32 %v2307, %v2309
        %v2311 = vrot.slane %v2304, %v2310
        %v2312 = vcombine.low %v2303, %v2311
        %v2313 = vcombine.low %v1551, %v1558
        %v2315 = vunpack.c.l.s4 1983009808
        %v2316 = vunpack.c.0.s8 %v2315
        %v2317 = vlaneseq
        %v2318 = vshrl.u32 %v2317, 7
        %v2319 = vsub.s32 %v2316, %v2318
        %v2320 = vrot.slane %v2313, %v2319
        %v2321 = vcombine.low %v1574, %v1575
        %v2323 = vunpack.c.l.s4 1983009808
        %v2324 = vunpack.c.0.s8 %v2323
        %v2325 = vlaneseq
        %v2326 = vshrl.u32 %v2325, 7
        %v2327 = vsub.s32 %v2324, %v2326
        %v2328 = vrot.slane %v2321, %v2327
        %v2329 = vcombine.low %v1566, %v1573
        %v2331 = vunpack.c.l.s4 1983009808
        %v2332 = vunpack.c.0.s8 %v2331
        %v2333 = vlaneseq
        %v2334 = vshrl.u32 %v2333, 7
        %v2335 = vsub.s32 %v2332, %v2334
        %v2336 = vrot.slane %v2329, %v2335
        %v2337 = vcombine.low %v1576, %v1577
        %v2339 = vunpack.c.l.s4 1983009808
        %v2340 = vunpack.c.0.s8 %v2339
        %v2341 = vlaneseq
        %v2342 = vshrl.u32 %v2341, 7
        %v2343 = vsub.s32 %v2340, %v2342
        %v2344 = vrot.slane %v2337, %v2343
        %v2345 = vcombine.low %v2320, %v2328
        %v2347 = vunpack.c.l.s4 1934713408
        %v2348 = vunpack.c.0.s8 %v2347
        %v2349 = vlaneseq
        %v2350 = vshrl.u32 %v2349, 7
        %v2351 = vsub.s32 %v2348, %v2350
        %v2352 = vrot.slane %v2345, %v2351
        %v2353 = vcombine.low %v2336, %v2344
        %v2355 = vunpack.c.l.s4 1934713408
        %v2356 = vunpack.c.0.s8 %v2355
        %v2357 = vlaneseq
        %v2358 = vshrl.u32 %v2357, 7
        %v2359 = vsub.s32 %v2356, %v2358
        %v2360 = vrot.slane %v2353, %v2359
        %v2361 = vcombine.low %v2352, %v2360
        %v2362 = vcombine.low %v1600, %v1607
        %v2364 = vunpack.c.l.s4 1983009808
        %v2365 = vunpack.c.0.s8 %v2364
        %v2366 = vlaneseq
        %v2367 = vshrl.u32 %v2366, 7
        %v2368 = vsub.s32 %v2365, %v2367
        %v2369 = vrot.slane %v2362, %v2368
        %v2370 = vcombine.low %v1623, %v1624
        %v2372 = vunpack.c.l.s4 1983009808
        %v2373 = vunpack.c.0.s8 %v2372
        %v2374 = vlaneseq
        %v2375 = vshrl.u32 %v2374, 7
        %v2376 = vsub.s32 %v2373, %v2375
        %v2377 = vrot.slane %v2370, %v2376
        %v2378 = vcombine.low %v1615, %v1622
        %v2380 = vunpack.c.l.s4 1983009808
        %v2381 = vunpack.c.0.s8 %v2380
        %v2382 = vlaneseq
        %v2383 = vshrl.u32 %v2382, 7
        %v2384 = vsub.s32 %v2381, %v2383
        %v2385 = vrot.slane %v2378, %v2384
        %v2386 = vcombine.low %v1625, %v1626
        %v2388 = vunpack.c.l.s4 1983009808
        %v2389 = vunpack.c.0.s8 %v2388
        %v2390 = vlaneseq
        %v2391 = vshrl.u32 %v2390, 7
        %v2392 = vsub.s32 %v2389, %v2391
        %v2393 = vrot.slane %v2386, %v2392
        %v2394 = vcombine.low %v2369, %v2377
        %v2396 = vunpack.c.l.s4 1934713408
        %v2397 = vunpack.c.0.s8 %v2396
        %v2398 = vlaneseq
        %v2399 = vshrl.u32 %v2398, 7
        %v2400 = vsub.s32 %v2397, %v2399
        %v2401 = vrot.slane %v2394, %v2400
        %v2402 = vcombine.low %v2385, %v2393
        %v2404 = vunpack.c.l.s4 1934713408
        %v2405 = vunpack.c.0.s8 %v2404
        %v2406 = vlaneseq
        %v2407 = vshrl.u32 %v2406, 7
        %v2408 = vsub.s32 %v2405, %v2407
        %v2409 = vrot.slane %v2402, %v2408
        %v2410 = vcombine.low %v2401, %v2409
        %v2411 = vcombine.low %v1649, %v1656
        %v2413 = vunpack.c.l.s4 1983009808
        %v2414 = vunpack.c.0.s8 %v2413
        %v2415 = vlaneseq
        %v2416 = vshrl.u32 %v2415, 7
        %v2417 = vsub.s32 %v2414, %v2416
        %v2418 = vrot.slane %v2411, %v2417
        %v2419 = vcombine.low %v1672, %v1673
        %v2421 = vunpack.c.l.s4 1983009808
        %v2422 = vunpack.c.0.s8 %v2421
        %v2423 = vlaneseq
        %v2424 = vshrl.u32 %v2423, 7
        %v2425 = vsub.s32 %v2422, %v2424
        %v2426 = vrot.slane %v2419, %v2425
        %v2427 = vcombine.low %v1664, %v1671
        %v2429 = vunpack.c.l.s4 1983009808
        %v2430 = vunpack.c.0.s8 %v2429
        %v2431 = vlaneseq
        %v2432 = vshrl.u32 %v2431, 7
        %v2433 = vsub.s32 %v2430, %v2432
        %v2434 = vrot.slane %v2427, %v2433
        %v2435 = vcombine.low %v1674, %v1675
        %v2437 = vunpack.c.l.s4 1983009808
        %v2438 = vunpack.c.0.s8 %v2437
        %v2439 = vlaneseq
        %v2440 = vshrl.u32 %v2439, 7
        %v2441 = vsub.s32 %v2438, %v2440
        %v2442 = vrot.slane %v2435, %v2441
        %v2443 = vcombine.low %v2418, %v2426
        %v2445 = vunpack.c.l.s4 1934713408
        %v2446 = vunpack.c.0.s8 %v2445
        %v2447 = vlaneseq
        %v2448 = vshrl.u32 %v2447, 7
        %v2449 = vsub.s32 %v2446, %v2448
        %v2450 = vrot.slane %v2443, %v2449
        %v2451 = vcombine.low %v2434, %v2442
        %v2453 = vunpack.c.l.s4 1934713408
        %v2454 = vunpack.c.0.s8 %v2453
        %v2455 = vlaneseq
        %v2456 = vshrl.u32 %v2455, 7
        %v2457 = vsub.s32 %v2454, %v2456
        %v2458 = vrot.slane %v2451, %v2457
        %v2459 = vcombine.low %v2450, %v2458
        %v2460 = vcombine.low %v1698, %v1705
        %v2462 = vunpack.c.l.s4 1983009808
        %v2463 = vunpack.c.0.s8 %v2462
        %v2464 = vlaneseq
        %v2465 = vshrl.u32 %v2464, 7
        %v2466 = vsub.s32 %v2463, %v2465
        %v2467 = vrot.slane %v2460, %v2466
        %v2468 = vcombine.low %v1721, %v1722
        %v2470 = vunpack.c.l.s4 1983009808
        %v2471 = vunpack.c.0.s8 %v2470
        %v2472 = vlaneseq
        %v2473 = vshrl.u32 %v2472, 7
        %v2474 = vsub.s32 %v2471, %v2473
        %v2475 = vrot.slane %v2468, %v2474
        %v2476 = vcombine.low %v1713, %v1720
        %v2478 = vunpack.c.l.s4 1983009808
        %v2479 = vunpack.c.0.s8 %v2478
        %v2480 = vlaneseq
        %v2481 = vshrl.u32 %v2480, 7
        %v2482 = vsub.s32 %v2479, %v2481
        %v2483 = vrot.slane %v2476, %v2482
        %v2484 = vcombine.low %v1723, %v1724
        %v2486 = vunpack.c.l.s4 1983009808
        %v2487 = vunpack.c.0.s8 %v2486
        %v2488 = vlaneseq
        %v2489 = vshrl.u32 %v2488, 7
        %v2490 = vsub.s32 %v2487, %v2489
        %v2491 = vrot.slane %v2484, %v2490
        %v2492 = vcombine.low %v2467, %v2475
        %v2494 = vunpack.c.l.s4 1934713408
        %v2495 = vunpack.c.0.s8 %v2494
        %v2496 = vlaneseq
        %v2497 = vshrl.u32 %v2496, 7
        %v2498 = vsub.s32 %v2495, %v2497
        %v2499 = vrot.slane %v2492, %v2498
        %v2500 = vcombine.low %v2483, %v2491
        %v2502 = vunpack.c.l.s4 1934713408
        %v2503 = vunpack.c.0.s8 %v2502
        %v2504 = vlaneseq
        %v2505 = vshrl.u32 %v2504, 7
        %v2506 = vsub.s32 %v2503, %v2505
        %v2507 = vrot.slane %v2500, %v2506
        %v2508 = vcombine.low %v2499, %v2507
        %v2509 = vcombine.low %v1747, %v1754
        %v2511 = vunpack.c.l.s4 1983009808
        %v2512 = vunpack.c.0.s8 %v2511
        %v2513 = vlaneseq
        %v2514 = vshrl.u32 %v2513, 7
        %v2515 = vsub.s32 %v2512, %v2514
        %v2516 = vrot.slane %v2509, %v2515
        %v2517 = vcombine.low %v1770, %v1771
        %v2519 = vunpack.c.l.s4 1983009808
        %v2520 = vunpack.c.0.s8 %v2519
        %v2521 = vlaneseq
        %v2522 = vshrl.u32 %v2521, 7
        %v2523 = vsub.s32 %v2520, %v2522
        %v2524 = vrot.slane %v2517, %v2523
        %v2525 = vcombine.low %v1762, %v1769
        %v2527 = vunpack.c.l.s4 1983009808
        %v2528 = vunpack.c.0.s8 %v2527
        %v2529 = vlaneseq
        %v2530 = vshrl.u32 %v2529, 7
        %v2531 = vsub.s32 %v2528, %v2530
        %v2532 = vrot.slane %v2525, %v2531
        %v2533 = vcombine.low %v1772, %v1773
        %v2535 = vunpack.c.l.s4 1983009808
        %v2536 = vunpack.c.0.s8 %v2535
        %v2537 = vlaneseq
        %v2538 = vshrl.u32 %v2537, 7
        %v2539 = vsub.s32 %v2536, %v2538
        %v2540 = vrot.slane %v2533, %v2539
        %v2541 = vcombine.low %v2516, %v2524
        %v2543 = vunpack.c.l.s4 1934713408
        %v2544 = vunpack.c.0.s8 %v2543
        %v2545 = vlaneseq
        %v2546 = vshrl.u32 %v2545, 7
        %v2547 = vsub.s32 %v2544, %v2546
        %v2548 = vrot.slane %v2541, %v2547
        %v2549 = vcombine.low %v2532, %v2540
        %v2551 = vunpack.c.l.s4 1934713408
        %v2552 = vunpack.c.0.s8 %v2551
        %v2553 = vlaneseq
        %v2554 = vshrl.u32 %v2553, 7
        %v2555 = vsub.s32 %v2552, %v2554
        %v2556 = vrot.slane %v2549, %v2555
        %v2557 = vcombine.low %v2548, %v2556
        %v2558 = vcombine.low %v1796, %v1803
        %v2560 = vunpack.c.l.s4 1983009808
        %v2561 = vunpack.c.0.s8 %v2560
        %v2562 = vlaneseq
        %v2563 = vshrl.u32 %v2562, 7
        %v2564 = vsub.s32 %v2561, %v2563
        %v2565 = vrot.slane %v2558, %v2564
        %v2566 = vcombine.low %v1819, %v1820
        %v2568 = vunpack.c.l.s4 1983009808
        %v2569 = vunpack.c.0.s8 %v2568
        %v2570 = vlaneseq
        %v2571 = vshrl.u32 %v2570, 7
        %v2572 = vsub.s32 %v2569, %v2571
        %v2573 = vrot.slane %v2566, %v2572
        %v2574 = vcombine.low %v1811, %v1818
        %v2576 = vunpack.c.l.s4 1983009808
        %v2577 = vunpack.c.0.s8 %v2576
        %v2578 = vlaneseq
        %v2579 = vshrl.u32 %v2578, 7
        %v2580 = vsub.s32 %v2577, %v2579
        %v2581 = vrot.slane %v2574, %v2580
        %v2582 = vcombine.low %v1821, %v1822
        %v2584 = vunpack.c.l.s4 1983009808
        %v2585 = vunpack.c.0.s8 %v2584
        %v2586 = vlaneseq
        %v2587 = vshrl.u32 %v2586, 7
        %v2588 = vsub.s32 %v2585, %v2587
        %v2589 = vrot.slane %v2582, %v2588
        %v2590 = vcombine.low %v2565, %v2573
        %v2592 = vunpack.c.l.s4 1934713408
        %v2593 = vunpack.c.0.s8 %v2592
        %v2594 = vlaneseq
        %v2595 = vshrl.u32 %v2594, 7
        %v2596 = vsub.s32 %v2593, %v2595
        %v2597 = vrot.slane %v2590, %v2596
        %v2598 = vcombine.low %v2581, %v2589
        %v2600 = vunpack.c.l.s4 1934713408
        %v2601 = vunpack.c.0.s8 %v2600
        %v2602 = vlaneseq
        %v2603 = vshrl.u32 %v2602, 7
        %v2604 = vsub.s32 %v2601, %v2603
        %v2605 = vrot.slane %v2598, %v2604
        %v2606 = vcombine.low %v2597, %v2605
        %v2607 = vcombine.low %v1845, %v1852
        %v2609 = vunpack.c.l.s4 1983009808
        %v2610 = vunpack.c.0.s8 %v2609
        %v2611 = vlaneseq
        %v2612 = vshrl.u32 %v2611, 7
        %v2613 = vsub.s32 %v2610, %v2612
        %v2614 = vrot.slane %v2607, %v2613
        %v2615 = vcombine.low %v1868, %v1869
        %v2617 = vunpack.c.l.s4 1983009808
        %v2618 = vunpack.c.0.s8 %v2617
        %v2619 = vlaneseq
        %v2620 = vshrl.u32 %v2619, 7
        %v2621 = vsub.s32 %v2618, %v2620
        %v2622 = vrot.slane %v2615, %v2621
        %v2623 = vcombine.low %v1860, %v1867
        %v2625 = vunpack.c.l.s4 1983009808
        %v2626 = vunpack.c.0.s8 %v2625
        %v2627 = vlaneseq
        %v2628 = vshrl.u32 %v2627, 7
        %v2629 = vsub.s32 %v2626, %v2628
        %v2630 = vrot.slane %v2623, %v2629
        %v2631 = vcombine.low %v1870, %v1871
        %v2633 = vunpack.c.l.s4 1983009808
        %v2634 = vunpack.c.0.s8 %v2633
        %v2635 = vlaneseq
        %v2636 = vshrl.u32 %v2635, 7
        %v2637 = vsub.s32 %v2634, %v2636
        %v2638 = vrot.slane %v2631, %v2637
        %v2639 = vcombine.low %v2614, %v2622
        %v2641 = vunpack.c.l.s4 1934713408
        %v2642 = vunpack.c.0.s8 %v2641
        %v2643 = vlaneseq
        %v2644 = vshrl.u32 %v2643, 7
        %v2645 = vsub.s32 %v2642, %v2644
        %v2646 = vrot.slane %v2639, %v2645
        %v2647 = vcombine.low %v2630, %v2638
        %v2649 = vunpack.c.l.s4 1934713408
        %v2650 = vunpack.c.0.s8 %v2649
        %v2651 = vlaneseq
        %v2652 = vshrl.u32 %v2651, 7
        %v2653 = vsub.s32 %v2650, %v2652
        %v2654 = vrot.slane %v2647, %v2653
        %v2655 = vcombine.low %v2646, %v2654
        %v2658 = vpack.i.b16 %v1969, %v1920
        %v2659 = vshrl.u32 %v1920, 16
        %v2660 = vshrl.u32 %v1969, 16
        %v2661 = vpack.i.b16 %v2660, %v2659
        %v2664 = vpack.i.b16 %v2067, %v2018
        %v2665 = vshrl.u32 %v2018, 16
        %v2666 = vshrl.u32 %v2067, 16
        %v2667 = vpack.i.b16 %v2666, %v2665
        %v2670 = vpack.i.b16 %v2165, %v2116
        %v2671 = vshrl.u32 %v2116, 16
        %v2672 = vshrl.u32 %v2165, 16
        %v2673 = vpack.i.b16 %v2672, %v2671
        %v2676 = vpack.i.b16 %v2263, %v2214
        %v2677 = vshrl.u32 %v2214, 16
        %v2678 = vshrl.u32 %v2263, 16
        %v2679 = vpack.i.b16 %v2678, %v2677
        %v2682 = vpack.i.b16 %v2361, %v2312
        %v2683 = vshrl.u32 %v2312, 16
        %v2684 = vshrl.u32 %v2361, 16
        %v2685 = vpack.i.b16 %v2684, %v2683
        %v2688 = vpack.i.b16 %v2459, %v2410
        %v2689 = vshrl.u32 %v2410, 16
        %v2690 = vshrl.u32 %v2459, 16
        %v2691 = vpack.i.b16 %v2690, %v2689
        %v2694 = vpack.i.b16 %v2557, %v2508
        %v2695 = vshrl.u32 %v2508, 16
        %v2696 = vshrl.u32 %v2557, 16
        %v2697 = vpack.i.b16 %v2696, %v2695
        %v2700 = vpack.i.b16 %v2655, %v2606
        %v2701 = vshrl.u32 %v2606, 16
        %v2702 = vshrl.u32 %v2655, 16
        %v2703 = vpack.i.b16 %v2702, %v2701
        %v2704 = vunpack.c.l.b16 %v2658
        %v2705 = vunpack.c.h.b16 %v2658
        %v2706 = vunpack.c.l.b16 %v2664
        %v2707 = vunpack.c.h.b16 %v2664
        %v2708 = vunpack.c.l.b16 %v2670
        %v2709 = vunpack.c.h.b16 %v2670
        %v2710 = vunpack.c.l.b16 %v2676
        %v2711 = vunpack.c.h.b16 %v2676
        %v2712 = vunpack.c.l.b16 %v2682
        %v2713 = vunpack.c.h.b16 %v2682
        %v2714 = vunpack.c.l.b16 %v2688
        %v2715 = vunpack.c.h.b16 %v2688
        %v2716 = vunpack.c.l.b16 %v2694
        %v2717 = vunpack.c.h.b16 %v2694
        %v2718 = vunpack.c.l.b16 %v2700
        %v2719 = vunpack.c.h.b16 %v2700
        %v2720 = vunpack.c.l.b16 %v2661
        %v2721 = vunpack.c.h.b16 %v2661
        %v2722 = vunpack.c.l.b16 %v2667
        %v2723 = vunpack.c.h.b16 %v2667
        %v2724 = vunpack.c.l.b16 %v2673
        %v2725 = vunpack.c.h.b16 %v2673
        %v2726 = vunpack.c.l.b16 %v2679
        %v2727 = vunpack.c.h.b16 %v2679
        %v2728 = vunpack.c.l.b16 %v2685
        %v2729 = vunpack.c.h.b16 %v2685
        %v2730 = vunpack.c.l.b16 %v2691
        %v2731 = vunpack.c.h.b16 %v2691
        %v2732 = vunpack.c.l.b16 %v2697
        %v2733 = vunpack.c.h.b16 %v2697
        %v2734 = vunpack.c.l.b16 %v2703
        %v2735 = vunpack.c.h.b16 %v2703
        %v2736 = vpack.c.b16 %v2704, %v2704
        %v2737 = vpack.c.b16 %v2705, %v2705
        %v2738 = vpack.c.b16 %v2706, %v2706
        %v2739 = vpack.c.b16 %v2707, %v2707
        %v2740 = vpack.c.b16 %v2708, %v2708
        %v2741 = vpack.c.b16 %v2709, %v2709
        %v2742 = vpack.c.b16 %v2710, %v2710
        %v2743 = vpack.c.b16 %v2711, %v2711
        %v2744 = vpack.c.b16 %v2712, %v2712
        %v2745 = vpack.c.b16 %v2713, %v2713
        %v2746 = vpack.c.b16 %v2714, %v2714
        %v2747 = vpack.c.b16 %v2715, %v2715
        %v2748 = vpack.c.b16 %v2716, %v2716
        %v2749 = vpack.c.b16 %v2717, %v2717
        %v2750 = vpack.c.b16 %v2718, %v2718
        %v2751 = vpack.c.b16 %v2719, %v2719
        %v2752 = vpack.c.b16 %v2720, %v2720
        %v2753 = vpack.c.b16 %v2721, %v2721
        %v2754 = vpack.c.b16 %v2722, %v2722
        %v2755 = vpack.c.b16 %v2723, %v2723
        %v2756 = vpack.c.b16 %v2724, %v2724
        %v2757 = vpack.c.b16 %v2725, %v2725
        %v2758 = vpack.c.b16 %v2726, %v2726
        %v2759 = vpack.c.b16 %v2727, %v2727
        %v2760 = vpack.c.b16 %v2728, %v2728
        %v2761 = vpack.c.b16 %v2729, %v2729
        %v2762 = vpack.c.b16 %v2730, %v2730
        %v2763 = vpack.c.b16 %v2731, %v2731
        %v2764 = vpack.c.b16 %v2732, %v2732
        %v2765 = vpack.c.b16 %v2733, %v2733
        %v2766 = vpack.c.b16 %v2734, %v2734
        %v2767 = vpack.c.b16 %v2735, %v2735
        %vm2800 = vcmask 519168
        %2801 = vst.msk [vmem:[%s303] sm:$0xf] %vm2800, %v2736
        %2802 = vst.msk [vmem:[%s303 + $0x4] sm:$0xf] %vm2800, %v2737
        %2803 = vst.msk [vmem:[%s303 + $0x8] sm:$0xf] %vm2800, %v2738
        %2804 = vst.msk [vmem:[%s303 + $0xc] sm:$0xf] %vm2800, %v2739
        %2805 = vst.msk [vmem:[%s303 + $0x10] sm:$0xf] %vm2800, %v2740
        %2806 = vst.msk [vmem:[%s303 + $0x14] sm:$0xf] %vm2800, %v2741
        %2807 = vst.msk [vmem:[%s303 + $0x18] sm:$0xf] %vm2800, %v2742
        %2808 = vst.msk [vmem:[%s303 + $0x1c] sm:$0xf] %vm2800, %v2743
        %2809 = vst.msk [vmem:[%s303 + $0x20] sm:$0xf] %vm2800, %v2744
        %2810 = vst.msk [vmem:[%s303 + $0x24] sm:$0xf] %vm2800, %v2745
        %2811 = vst.msk [vmem:[%s303 + $0x28] sm:$0xf] %vm2800, %v2746
        %2812 = vst.msk [vmem:[%s303 + $0x2c] sm:$0xf] %vm2800, %v2747
        %2813 = vst.msk [vmem:[%s303 + $0x30] sm:$0xf] %vm2800, %v2748
        %2814 = vst.msk [vmem:[%s303 + $0x34] sm:$0xf] %vm2800, %v2749
        %2815 = vst.msk [vmem:[%s303 + $0x38] sm:$0xf] %vm2800, %v2750
        %2816 = vst.msk [vmem:[%s303 + $0x3c] sm:$0xf] %vm2800, %v2751
        %2817 = vst.msk [vmem:[%s303 + $0x40] sm:$0xf] %vm2800, %v2752
        %2818 = vst.msk [vmem:[%s303 + $0x44] sm:$0xf] %vm2800, %v2753
        %2819 = vst.msk [vmem:[%s303 + $0x48] sm:$0xf] %vm2800, %v2754
        %2820 = vst.msk [vmem:[%s303 + $0x4c] sm:$0xf] %vm2800, %v2755
        %2821 = vst.msk [vmem:[%s303 + $0x50] sm:$0xf] %vm2800, %v2756
        %2822 = vst.msk [vmem:[%s303 + $0x54] sm:$0xf] %vm2800, %v2757
        %2823 = vst.msk [vmem:[%s303 + $0x58] sm:$0xf] %vm2800, %v2758
        %2824 = vst.msk [vmem:[%s303 + $0x5c] sm:$0xf] %vm2800, %v2759
        %2825 = vst.msk [vmem:[%s303 + $0x60] sm:$0xf] %vm2800, %v2760
        %2826 = vst.msk [vmem:[%s303 + $0x64] sm:$0xf] %vm2800, %v2761
        %2827 = vst.msk [vmem:[%s303 + $0x68] sm:$0xf] %vm2800, %v2762
        %2828 = vst.msk [vmem:[%s303 + $0x6c] sm:$0xf] %vm2800, %v2763
        %2829 = vst.msk [vmem:[%s303 + $0x70] sm:$0xf] %vm2800, %v2764
        %2830 = vst.msk [vmem:[%s303 + $0x74] sm:$0xf] %vm2800, %v2765
        %2831 = vst.msk [vmem:[%s303 + $0x78] sm:$0xf] %vm2800, %v2766
        %2832 = vst.msk [vmem:[%s303 + $0x7c] sm:$0xf] %vm2800, %v2767
        %v2833 = vpack.c.bf16 %v817, %v813
        %v2834 = vpack.c.bf16 %v827, %v823
        %v2835 = vpack.c.bf16 %v837, %v833
        %v2836 = vpack.c.bf16 %v847, %v843
        %v2837 = vpack.c.bf16 %v857, %v853
        %v2838 = vpack.c.bf16 %v867, %v863
        %v2839 = vpack.c.bf16 %v877, %v873
        %v2840 = vpack.c.bf16 %v887, %v883
        %2849 = vrot.lane.b32.xlu0 %v2833, 64
        %v2850 = vpop.permute.xlu0 %2849
        %2851 = vrot.lane.b32.xlu0 %v2834, 64
        %v2852 = vpop.permute.xlu0 %2851
        %2853 = vrot.lane.b32.xlu0 %v2835, 64
        %v2854 = vpop.permute.xlu0 %2853
        %2855 = vrot.lane.b32.xlu0 %v2836, 64
        %v2856 = vpop.permute.xlu0 %2855
        %2857 = vrot.lane.b32.xlu0 %v2837, 64
        %v2858 = vpop.permute.xlu0 %2857
        %2859 = vrot.lane.b32.xlu0 %v2838, 64
        %v2860 = vpop.permute.xlu0 %2859
        %2861 = vrot.lane.b32.xlu0 %v2839, 64
        %v2862 = vpop.permute.xlu0 %2861
        %2863 = vrot.lane.b32.xlu0 %v2840, 64
        %v2864 = vpop.permute.xlu0 %2863
        %v2867 = vpack.i.b16 %v2850, %v2833
        %v2869 = vshrl.u32 %v2833, 16
        %v2870 = vshrl.u32 %v2850, 16
        %v2871 = vpack.i.b16 %v2870, %v2869
        %v2875 = vpack.i.b16 %v2852, %v2834
        %v2877 = vshrl.u32 %v2834, 16
        %v2878 = vshrl.u32 %v2852, 16
        %v2879 = vpack.i.b16 %v2878, %v2877
        %v2883 = vpack.i.b16 %v2854, %v2835
        %v2885 = vshrl.u32 %v2835, 16
        %v2886 = vshrl.u32 %v2854, 16
        %v2887 = vpack.i.b16 %v2886, %v2885
        %v2891 = vpack.i.b16 %v2856, %v2836
        %v2893 = vshrl.u32 %v2836, 16
        %v2894 = vshrl.u32 %v2856, 16
        %v2895 = vpack.i.b16 %v2894, %v2893
        %v2899 = vpack.i.b16 %v2858, %v2837
        %v2901 = vshrl.u32 %v2837, 16
        %v2902 = vshrl.u32 %v2858, 16
        %v2903 = vpack.i.b16 %v2902, %v2901
        %v2907 = vpack.i.b16 %v2860, %v2838
        %v2909 = vshrl.u32 %v2838, 16
        %v2910 = vshrl.u32 %v2860, 16
        %v2911 = vpack.i.b16 %v2910, %v2909
        %v2915 = vpack.i.b16 %v2862, %v2839
        %v2917 = vshrl.u32 %v2839, 16
        %v2918 = vshrl.u32 %v2862, 16
        %v2919 = vpack.i.b16 %v2918, %v2917
        %v2923 = vpack.i.b16 %v2864, %v2840
        %v2925 = vshrl.u32 %v2840, 16
        %v2926 = vshrl.u32 %v2864, 16
        %v2927 = vpack.i.b16 %v2926, %v2925
        %v2929 = vcombine.high %v2867, %v1027
        %v2931 = vunpack.c.l.s4 1983009808
        %v2932 = vunpack.c.0.s8 %v2931
        %v2933 = vlaneseq
        %v2934 = vshrl.u32 %v2933, 7
        %v2935 = vsub.s32 %v2932, %v2934
        %v2936 = vrot.slane %v2867, %v2935
        %v2938 = vunpack.c.l.s4 1983009808
        %v2939 = vunpack.c.0.s8 %v2938
        %v2940 = vlaneseq
        %v2941 = vshrl.u32 %v2940, 7
        %v2942 = vsub.s32 %v2939, %v2941
        %v2943 = vrot.slane %v2929, %v2942
        %v2944 = vcombine.high %v2936, 0
        %v2946 = vunpack.c.l.s4 1934713408
        %v2947 = vunpack.c.0.s8 %v2946
        %v2948 = vlaneseq
        %v2949 = vshrl.u32 %v2948, 7
        %v2950 = vsub.s32 %v2947, %v2949
        %v2951 = vrot.slane %v2936, %v2950
        %v2953 = vunpack.c.l.s4 1934713408
        %v2954 = vunpack.c.0.s8 %v2953
        %v2955 = vlaneseq
        %v2956 = vshrl.u32 %v2955, 7
        %v2957 = vsub.s32 %v2954, %v2956
        %v2958 = vrot.slane %v2944, %v2957
        %v2959 = vcombine.high %v2943, 0
        %v2961 = vunpack.c.l.s4 1934713408
        %v2962 = vunpack.c.0.s8 %v2961
        %v2963 = vlaneseq
        %v2964 = vshrl.u32 %v2963, 7
        %v2965 = vsub.s32 %v2962, %v2964
        %v2966 = vrot.slane %v2943, %v2965
        %v2968 = vunpack.c.l.s4 1934713408
        %v2969 = vunpack.c.0.s8 %v2968
        %v2970 = vlaneseq
        %v2971 = vshrl.u32 %v2970, 7
        %v2972 = vsub.s32 %v2969, %v2971
        %v2973 = vrot.slane %v2959, %v2972
        %v2974 = vcombine.high %v2951, 0
        %v2975 = vcombine.high %v2958, 0
        %v2976 = vcombine.high %v2966, 0
        %v2977 = vcombine.high %v2973, 0
        %v2978 = vcombine.high %v2871, %v1030
        %v2980 = vunpack.c.l.s4 1983009808
        %v2981 = vunpack.c.0.s8 %v2980
        %v2982 = vlaneseq
        %v2983 = vshrl.u32 %v2982, 7
        %v2984 = vsub.s32 %v2981, %v2983
        %v2985 = vrot.slane %v2871, %v2984
        %v2987 = vunpack.c.l.s4 1983009808
        %v2988 = vunpack.c.0.s8 %v2987
        %v2989 = vlaneseq
        %v2990 = vshrl.u32 %v2989, 7
        %v2991 = vsub.s32 %v2988, %v2990
        %v2992 = vrot.slane %v2978, %v2991
        %v2993 = vcombine.high %v2985, 0
        %v2995 = vunpack.c.l.s4 1934713408
        %v2996 = vunpack.c.0.s8 %v2995
        %v2997 = vlaneseq
        %v2998 = vshrl.u32 %v2997, 7
        %v2999 = vsub.s32 %v2996, %v2998
        %v3000 = vrot.slane %v2985, %v2999
        %v3002 = vunpack.c.l.s4 1934713408
        %v3003 = vunpack.c.0.s8 %v3002
        %v3004 = vlaneseq
        %v3005 = vshrl.u32 %v3004, 7
        %v3006 = vsub.s32 %v3003, %v3005
        %v3007 = vrot.slane %v2993, %v3006
        %v3008 = vcombine.high %v2992, 0
        %v3010 = vunpack.c.l.s4 1934713408
        %v3011 = vunpack.c.0.s8 %v3010
        %v3012 = vlaneseq
        %v3013 = vshrl.u32 %v3012, 7
        %v3014 = vsub.s32 %v3011, %v3013
        %v3015 = vrot.slane %v2992, %v3014
        %v3017 = vunpack.c.l.s4 1934713408
        %v3018 = vunpack.c.0.s8 %v3017
        %v3019 = vlaneseq
        %v3020 = vshrl.u32 %v3019, 7
        %v3021 = vsub.s32 %v3018, %v3020
        %v3022 = vrot.slane %v3008, %v3021
        %v3023 = vcombine.high %v3000, 0
        %v3024 = vcombine.high %v3007, 0
        %v3025 = vcombine.high %v3015, 0
        %v3026 = vcombine.high %v3022, 0
        %v3027 = vcombine.high %v2875, %v1027
        %v3029 = vunpack.c.l.s4 1983009808
        %v3030 = vunpack.c.0.s8 %v3029
        %v3031 = vlaneseq
        %v3032 = vshrl.u32 %v3031, 7
        %v3033 = vsub.s32 %v3030, %v3032
        %v3034 = vrot.slane %v2875, %v3033
        %v3036 = vunpack.c.l.s4 1983009808
        %v3037 = vunpack.c.0.s8 %v3036
        %v3038 = vlaneseq
        %v3039 = vshrl.u32 %v3038, 7
        %v3040 = vsub.s32 %v3037, %v3039
        %v3041 = vrot.slane %v3027, %v3040
        %v3042 = vcombine.high %v3034, 0
        %v3044 = vunpack.c.l.s4 1934713408
        %v3045 = vunpack.c.0.s8 %v3044
        %v3046 = vlaneseq
        %v3047 = vshrl.u32 %v3046, 7
        %v3048 = vsub.s32 %v3045, %v3047
        %v3049 = vrot.slane %v3034, %v3048
        %v3051 = vunpack.c.l.s4 1934713408
        %v3052 = vunpack.c.0.s8 %v3051
        %v3053 = vlaneseq
        %v3054 = vshrl.u32 %v3053, 7
        %v3055 = vsub.s32 %v3052, %v3054
        %v3056 = vrot.slane %v3042, %v3055
        %v3057 = vcombine.high %v3041, 0
        %v3059 = vunpack.c.l.s4 1934713408
        %v3060 = vunpack.c.0.s8 %v3059
        %v3061 = vlaneseq
        %v3062 = vshrl.u32 %v3061, 7
        %v3063 = vsub.s32 %v3060, %v3062
        %v3064 = vrot.slane %v3041, %v3063
        %v3066 = vunpack.c.l.s4 1934713408
        %v3067 = vunpack.c.0.s8 %v3066
        %v3068 = vlaneseq
        %v3069 = vshrl.u32 %v3068, 7
        %v3070 = vsub.s32 %v3067, %v3069
        %v3071 = vrot.slane %v3057, %v3070
        %v3072 = vcombine.high %v3049, 0
        %v3073 = vcombine.high %v3056, 0
        %v3074 = vcombine.high %v3064, 0
        %v3075 = vcombine.high %v3071, 0
        %v3076 = vcombine.high %v2879, %v1030
        %v3078 = vunpack.c.l.s4 1983009808
        %v3079 = vunpack.c.0.s8 %v3078
        %v3080 = vlaneseq
        %v3081 = vshrl.u32 %v3080, 7
        %v3082 = vsub.s32 %v3079, %v3081
        %v3083 = vrot.slane %v2879, %v3082
        %v3085 = vunpack.c.l.s4 1983009808
        %v3086 = vunpack.c.0.s8 %v3085
        %v3087 = vlaneseq
        %v3088 = vshrl.u32 %v3087, 7
        %v3089 = vsub.s32 %v3086, %v3088
        %v3090 = vrot.slane %v3076, %v3089
        %v3091 = vcombine.high %v3083, 0
        %v3093 = vunpack.c.l.s4 1934713408
        %v3094 = vunpack.c.0.s8 %v3093
        %v3095 = vlaneseq
        %v3096 = vshrl.u32 %v3095, 7
        %v3097 = vsub.s32 %v3094, %v3096
        %v3098 = vrot.slane %v3083, %v3097
        %v3100 = vunpack.c.l.s4 1934713408
        %v3101 = vunpack.c.0.s8 %v3100
        %v3102 = vlaneseq
        %v3103 = vshrl.u32 %v3102, 7
        %v3104 = vsub.s32 %v3101, %v3103
        %v3105 = vrot.slane %v3091, %v3104
        %v3106 = vcombine.high %v3090, 0
        %v3108 = vunpack.c.l.s4 1934713408
        %v3109 = vunpack.c.0.s8 %v3108
        %v3110 = vlaneseq
        %v3111 = vshrl.u32 %v3110, 7
        %v3112 = vsub.s32 %v3109, %v3111
        %v3113 = vrot.slane %v3090, %v3112
        %v3115 = vunpack.c.l.s4 1934713408
        %v3116 = vunpack.c.0.s8 %v3115
        %v3117 = vlaneseq
        %v3118 = vshrl.u32 %v3117, 7
        %v3119 = vsub.s32 %v3116, %v3118
        %v3120 = vrot.slane %v3106, %v3119
        %v3121 = vcombine.high %v3098, 0
        %v3122 = vcombine.high %v3105, 0
        %v3123 = vcombine.high %v3113, 0
        %v3124 = vcombine.high %v3120, 0
        %v3125 = vcombine.high %v2883, %v1027
        %v3127 = vunpack.c.l.s4 1983009808
        %v3128 = vunpack.c.0.s8 %v3127
        %v3129 = vlaneseq
        %v3130 = vshrl.u32 %v3129, 7
        %v3131 = vsub.s32 %v3128, %v3130
        %v3132 = vrot.slane %v2883, %v3131
        %v3134 = vunpack.c.l.s4 1983009808
        %v3135 = vunpack.c.0.s8 %v3134
        %v3136 = vlaneseq
        %v3137 = vshrl.u32 %v3136, 7
        %v3138 = vsub.s32 %v3135, %v3137
        %v3139 = vrot.slane %v3125, %v3138
        %v3140 = vcombine.high %v3132, 0
        %v3142 = vunpack.c.l.s4 1934713408
        %v3143 = vunpack.c.0.s8 %v3142
        %v3144 = vlaneseq
        %v3145 = vshrl.u32 %v3144, 7
        %v3146 = vsub.s32 %v3143, %v3145
        %v3147 = vrot.slane %v3132, %v3146
        %v3149 = vunpack.c.l.s4 1934713408
        %v3150 = vunpack.c.0.s8 %v3149
        %v3151 = vlaneseq
        %v3152 = vshrl.u32 %v3151, 7
        %v3153 = vsub.s32 %v3150, %v3152
        %v3154 = vrot.slane %v3140, %v3153
        %v3155 = vcombine.high %v3139, 0
        %v3157 = vunpack.c.l.s4 1934713408
        %v3158 = vunpack.c.0.s8 %v3157
        %v3159 = vlaneseq
        %v3160 = vshrl.u32 %v3159, 7
        %v3161 = vsub.s32 %v3158, %v3160
        %v3162 = vrot.slane %v3139, %v3161
        %v3164 = vunpack.c.l.s4 1934713408
        %v3165 = vunpack.c.0.s8 %v3164
        %v3166 = vlaneseq
        %v3167 = vshrl.u32 %v3166, 7
        %v3168 = vsub.s32 %v3165, %v3167
        %v3169 = vrot.slane %v3155, %v3168
        %v3170 = vcombine.high %v3147, 0
        %v3171 = vcombine.high %v3154, 0
        %v3172 = vcombine.high %v3162, 0
        %v3173 = vcombine.high %v3169, 0
        %v3174 = vcombine.high %v2887, %v1030
        %v3176 = vunpack.c.l.s4 1983009808
        %v3177 = vunpack.c.0.s8 %v3176
        %v3178 = vlaneseq
        %v3179 = vshrl.u32 %v3178, 7
        %v3180 = vsub.s32 %v3177, %v3179
        %v3181 = vrot.slane %v2887, %v3180
        %v3183 = vunpack.c.l.s4 1983009808
        %v3184 = vunpack.c.0.s8 %v3183
        %v3185 = vlaneseq
        %v3186 = vshrl.u32 %v3185, 7
        %v3187 = vsub.s32 %v3184, %v3186
        %v3188 = vrot.slane %v3174, %v3187
        %v3189 = vcombine.high %v3181, 0
        %v3191 = vunpack.c.l.s4 1934713408
        %v3192 = vunpack.c.0.s8 %v3191
        %v3193 = vlaneseq
        %v3194 = vshrl.u32 %v3193, 7
        %v3195 = vsub.s32 %v3192, %v3194
        %v3196 = vrot.slane %v3181, %v3195
        %v3198 = vunpack.c.l.s4 1934713408
        %v3199 = vunpack.c.0.s8 %v3198
        %v3200 = vlaneseq
        %v3201 = vshrl.u32 %v3200, 7
        %v3202 = vsub.s32 %v3199, %v3201
        %v3203 = vrot.slane %v3189, %v3202
        %v3204 = vcombine.high %v3188, 0
        %v3206 = vunpack.c.l.s4 1934713408
        %v3207 = vunpack.c.0.s8 %v3206
        %v3208 = vlaneseq
        %v3209 = vshrl.u32 %v3208, 7
        %v3210 = vsub.s32 %v3207, %v3209
        %v3211 = vrot.slane %v3188, %v3210
        %v3213 = vunpack.c.l.s4 1934713408
        %v3214 = vunpack.c.0.s8 %v3213
        %v3215 = vlaneseq
        %v3216 = vshrl.u32 %v3215, 7
        %v3217 = vsub.s32 %v3214, %v3216
        %v3218 = vrot.slane %v3204, %v3217
        %v3219 = vcombine.high %v3196, 0
        %v3220 = vcombine.high %v3203, 0
        %v3221 = vcombine.high %v3211, 0
        %v3222 = vcombine.high %v3218, 0
        %v3223 = vcombine.high %v2891, %v1027
        %v3225 = vunpack.c.l.s4 1983009808
        %v3226 = vunpack.c.0.s8 %v3225
        %v3227 = vlaneseq
        %v3228 = vshrl.u32 %v3227, 7
        %v3229 = vsub.s32 %v3226, %v3228
        %v3230 = vrot.slane %v2891, %v3229
        %v3232 = vunpack.c.l.s4 1983009808
        %v3233 = vunpack.c.0.s8 %v3232
        %v3234 = vlaneseq
        %v3235 = vshrl.u32 %v3234, 7
        %v3236 = vsub.s32 %v3233, %v3235
        %v3237 = vrot.slane %v3223, %v3236
        %v3238 = vcombine.high %v3230, 0
        %v3240 = vunpack.c.l.s4 1934713408
        %v3241 = vunpack.c.0.s8 %v3240
        %v3242 = vlaneseq
        %v3243 = vshrl.u32 %v3242, 7
        %v3244 = vsub.s32 %v3241, %v3243
        %v3245 = vrot.slane %v3230, %v3244
        %v3247 = vunpack.c.l.s4 1934713408
        %v3248 = vunpack.c.0.s8 %v3247
        %v3249 = vlaneseq
        %v3250 = vshrl.u32 %v3249, 7
        %v3251 = vsub.s32 %v3248, %v3250
        %v3252 = vrot.slane %v3238, %v3251
        %v3253 = vcombine.high %v3237, 0
        %v3255 = vunpack.c.l.s4 1934713408
        %v3256 = vunpack.c.0.s8 %v3255
        %v3257 = vlaneseq
        %v3258 = vshrl.u32 %v3257, 7
        %v3259 = vsub.s32 %v3256, %v3258
        %v3260 = vrot.slane %v3237, %v3259
        %v3262 = vunpack.c.l.s4 1934713408
        %v3263 = vunpack.c.0.s8 %v3262
        %v3264 = vlaneseq
        %v3265 = vshrl.u32 %v3264, 7
        %v3266 = vsub.s32 %v3263, %v3265
        %v3267 = vrot.slane %v3253, %v3266
        %v3268 = vcombine.high %v3245, 0
        %v3269 = vcombine.high %v3252, 0
        %v3270 = vcombine.high %v3260, 0
        %v3271 = vcombine.high %v3267, 0
        %v3272 = vcombine.high %v2895, %v1030
        %v3274 = vunpack.c.l.s4 1983009808
        %v3275 = vunpack.c.0.s8 %v3274
        %v3276 = vlaneseq
        %v3277 = vshrl.u32 %v3276, 7
        %v3278 = vsub.s32 %v3275, %v3277
        %v3279 = vrot.slane %v2895, %v3278
        %v3281 = vunpack.c.l.s4 1983009808
        %v3282 = vunpack.c.0.s8 %v3281
        %v3283 = vlaneseq
        %v3284 = vshrl.u32 %v3283, 7
        %v3285 = vsub.s32 %v3282, %v3284
        %v3286 = vrot.slane %v3272, %v3285
        %v3287 = vcombine.high %v3279, 0
        %v3289 = vunpack.c.l.s4 1934713408
        %v3290 = vunpack.c.0.s8 %v3289
        %v3291 = vlaneseq
        %v3292 = vshrl.u32 %v3291, 7
        %v3293 = vsub.s32 %v3290, %v3292
        %v3294 = vrot.slane %v3279, %v3293
        %v3296 = vunpack.c.l.s4 1934713408
        %v3297 = vunpack.c.0.s8 %v3296
        %v3298 = vlaneseq
        %v3299 = vshrl.u32 %v3298, 7
        %v3300 = vsub.s32 %v3297, %v3299
        %v3301 = vrot.slane %v3287, %v3300
        %v3302 = vcombine.high %v3286, 0
        %v3304 = vunpack.c.l.s4 1934713408
        %v3305 = vunpack.c.0.s8 %v3304
        %v3306 = vlaneseq
        %v3307 = vshrl.u32 %v3306, 7
        %v3308 = vsub.s32 %v3305, %v3307
        %v3309 = vrot.slane %v3286, %v3308
        %v3311 = vunpack.c.l.s4 1934713408
        %v3312 = vunpack.c.0.s8 %v3311
        %v3313 = vlaneseq
        %v3314 = vshrl.u32 %v3313, 7
        %v3315 = vsub.s32 %v3312, %v3314
        %v3316 = vrot.slane %v3302, %v3315
        %v3317 = vcombine.high %v3294, 0
        %v3318 = vcombine.high %v3301, 0
        %v3319 = vcombine.high %v3309, 0
        %v3320 = vcombine.high %v3316, 0
        %v3321 = vcombine.high %v2899, %v1027
        %v3323 = vunpack.c.l.s4 1983009808
        %v3324 = vunpack.c.0.s8 %v3323
        %v3325 = vlaneseq
        %v3326 = vshrl.u32 %v3325, 7
        %v3327 = vsub.s32 %v3324, %v3326
        %v3328 = vrot.slane %v2899, %v3327
        %v3330 = vunpack.c.l.s4 1983009808
        %v3331 = vunpack.c.0.s8 %v3330
        %v3332 = vlaneseq
        %v3333 = vshrl.u32 %v3332, 7
        %v3334 = vsub.s32 %v3331, %v3333
        %v3335 = vrot.slane %v3321, %v3334
        %v3336 = vcombine.high %v3328, 0
        %v3338 = vunpack.c.l.s4 1934713408
        %v3339 = vunpack.c.0.s8 %v3338
        %v3340 = vlaneseq
        %v3341 = vshrl.u32 %v3340, 7
        %v3342 = vsub.s32 %v3339, %v3341
        %v3343 = vrot.slane %v3328, %v3342
        %v3345 = vunpack.c.l.s4 1934713408
        %v3346 = vunpack.c.0.s8 %v3345
        %v3347 = vlaneseq
        %v3348 = vshrl.u32 %v3347, 7
        %v3349 = vsub.s32 %v3346, %v3348
        %v3350 = vrot.slane %v3336, %v3349
        %v3351 = vcombine.high %v3335, 0
        %v3353 = vunpack.c.l.s4 1934713408
        %v3354 = vunpack.c.0.s8 %v3353
        %v3355 = vlaneseq
        %v3356 = vshrl.u32 %v3355, 7
        %v3357 = vsub.s32 %v3354, %v3356
        %v3358 = vrot.slane %v3335, %v3357
        %v3360 = vunpack.c.l.s4 1934713408
        %v3361 = vunpack.c.0.s8 %v3360
        %v3362 = vlaneseq
        %v3363 = vshrl.u32 %v3362, 7
        %v3364 = vsub.s32 %v3361, %v3363
        %v3365 = vrot.slane %v3351, %v3364
        %v3366 = vcombine.high %v3343, 0
        %v3367 = vcombine.high %v3350, 0
        %v3368 = vcombine.high %v3358, 0
        %v3369 = vcombine.high %v3365, 0
        %v3370 = vcombine.high %v2903, %v1030
        %v3372 = vunpack.c.l.s4 1983009808
        %v3373 = vunpack.c.0.s8 %v3372
        %v3374 = vlaneseq
        %v3375 = vshrl.u32 %v3374, 7
        %v3376 = vsub.s32 %v3373, %v3375
        %v3377 = vrot.slane %v2903, %v3376
        %v3379 = vunpack.c.l.s4 1983009808
        %v3380 = vunpack.c.0.s8 %v3379
        %v3381 = vlaneseq
        %v3382 = vshrl.u32 %v3381, 7
        %v3383 = vsub.s32 %v3380, %v3382
        %v3384 = vrot.slane %v3370, %v3383
        %v3385 = vcombine.high %v3377, 0
        %v3387 = vunpack.c.l.s4 1934713408
        %v3388 = vunpack.c.0.s8 %v3387
        %v3389 = vlaneseq
        %v3390 = vshrl.u32 %v3389, 7
        %v3391 = vsub.s32 %v3388, %v3390
        %v3392 = vrot.slane %v3377, %v3391
        %v3394 = vunpack.c.l.s4 1934713408
        %v3395 = vunpack.c.0.s8 %v3394
        %v3396 = vlaneseq
        %v3397 = vshrl.u32 %v3396, 7
        %v3398 = vsub.s32 %v3395, %v3397
        %v3399 = vrot.slane %v3385, %v3398
        %v3400 = vcombine.high %v3384, 0
        %v3402 = vunpack.c.l.s4 1934713408
        %v3403 = vunpack.c.0.s8 %v3402
        %v3404 = vlaneseq
        %v3405 = vshrl.u32 %v3404, 7
        %v3406 = vsub.s32 %v3403, %v3405
        %v3407 = vrot.slane %v3384, %v3406
        %v3409 = vunpack.c.l.s4 1934713408
        %v3410 = vunpack.c.0.s8 %v3409
        %v3411 = vlaneseq
        %v3412 = vshrl.u32 %v3411, 7
        %v3413 = vsub.s32 %v3410, %v3412
        %v3414 = vrot.slane %v3400, %v3413
        %v3415 = vcombine.high %v3392, 0
        %v3416 = vcombine.high %v3399, 0
        %v3417 = vcombine.high %v3407, 0
        %v3418 = vcombine.high %v3414, 0
        %v3419 = vcombine.high %v2907, %v1027
        %v3421 = vunpack.c.l.s4 1983009808
        %v3422 = vunpack.c.0.s8 %v3421
        %v3423 = vlaneseq
        %v3424 = vshrl.u32 %v3423, 7
        %v3425 = vsub.s32 %v3422, %v3424
        %v3426 = vrot.slane %v2907, %v3425
        %v3428 = vunpack.c.l.s4 1983009808
        %v3429 = vunpack.c.0.s8 %v3428
        %v3430 = vlaneseq
        %v3431 = vshrl.u32 %v3430, 7
        %v3432 = vsub.s32 %v3429, %v3431
        %v3433 = vrot.slane %v3419, %v3432
        %v3434 = vcombine.high %v3426, 0
        %v3436 = vunpack.c.l.s4 1934713408
        %v3437 = vunpack.c.0.s8 %v3436
        %v3438 = vlaneseq
        %v3439 = vshrl.u32 %v3438, 7
        %v3440 = vsub.s32 %v3437, %v3439
        %v3441 = vrot.slane %v3426, %v3440
        %v3443 = vunpack.c.l.s4 1934713408
        %v3444 = vunpack.c.0.s8 %v3443
        %v3445 = vlaneseq
        %v3446 = vshrl.u32 %v3445, 7
        %v3447 = vsub.s32 %v3444, %v3446
        %v3448 = vrot.slane %v3434, %v3447
        %v3449 = vcombine.high %v3433, 0
        %v3451 = vunpack.c.l.s4 1934713408
        %v3452 = vunpack.c.0.s8 %v3451
        %v3453 = vlaneseq
        %v3454 = vshrl.u32 %v3453, 7
        %v3455 = vsub.s32 %v3452, %v3454
        %v3456 = vrot.slane %v3433, %v3455
        %v3458 = vunpack.c.l.s4 1934713408
        %v3459 = vunpack.c.0.s8 %v3458
        %v3460 = vlaneseq
        %v3461 = vshrl.u32 %v3460, 7
        %v3462 = vsub.s32 %v3459, %v3461
        %v3463 = vrot.slane %v3449, %v3462
        %v3464 = vcombine.high %v3441, 0
        %v3465 = vcombine.high %v3448, 0
        %v3466 = vcombine.high %v3456, 0
        %v3467 = vcombine.high %v3463, 0
        %v3468 = vcombine.high %v2911, %v1030
        %v3470 = vunpack.c.l.s4 1983009808
        %v3471 = vunpack.c.0.s8 %v3470
        %v3472 = vlaneseq
        %v3473 = vshrl.u32 %v3472, 7
        %v3474 = vsub.s32 %v3471, %v3473
        %v3475 = vrot.slane %v2911, %v3474
        %v3477 = vunpack.c.l.s4 1983009808
        %v3478 = vunpack.c.0.s8 %v3477
        %v3479 = vlaneseq
        %v3480 = vshrl.u32 %v3479, 7
        %v3481 = vsub.s32 %v3478, %v3480
        %v3482 = vrot.slane %v3468, %v3481
        %v3483 = vcombine.high %v3475, 0
        %v3485 = vunpack.c.l.s4 1934713408
        %v3486 = vunpack.c.0.s8 %v3485
        %v3487 = vlaneseq
        %v3488 = vshrl.u32 %v3487, 7
        %v3489 = vsub.s32 %v3486, %v3488
        %v3490 = vrot.slane %v3475, %v3489
        %v3492 = vunpack.c.l.s4 1934713408
        %v3493 = vunpack.c.0.s8 %v3492
        %v3494 = vlaneseq
        %v3495 = vshrl.u32 %v3494, 7
        %v3496 = vsub.s32 %v3493, %v3495
        %v3497 = vrot.slane %v3483, %v3496
        %v3498 = vcombine.high %v3482, 0
        %v3500 = vunpack.c.l.s4 1934713408
        %v3501 = vunpack.c.0.s8 %v3500
        %v3502 = vlaneseq
        %v3503 = vshrl.u32 %v3502, 7
        %v3504 = vsub.s32 %v3501, %v3503
        %v3505 = vrot.slane %v3482, %v3504
        %v3507 = vunpack.c.l.s4 1934713408
        %v3508 = vunpack.c.0.s8 %v3507
        %v3509 = vlaneseq
        %v3510 = vshrl.u32 %v3509, 7
        %v3511 = vsub.s32 %v3508, %v3510
        %v3512 = vrot.slane %v3498, %v3511
        %v3513 = vcombine.high %v3490, 0
        %v3514 = vcombine.high %v3497, 0
        %v3515 = vcombine.high %v3505, 0
        %v3516 = vcombine.high %v3512, 0
        %v3517 = vcombine.high %v2915, %v1027
        %v3519 = vunpack.c.l.s4 1983009808
        %v3520 = vunpack.c.0.s8 %v3519
        %v3521 = vlaneseq
        %v3522 = vshrl.u32 %v3521, 7
        %v3523 = vsub.s32 %v3520, %v3522
        %v3524 = vrot.slane %v2915, %v3523
        %v3526 = vunpack.c.l.s4 1983009808
        %v3527 = vunpack.c.0.s8 %v3526
        %v3528 = vlaneseq
        %v3529 = vshrl.u32 %v3528, 7
        %v3530 = vsub.s32 %v3527, %v3529
        %v3531 = vrot.slane %v3517, %v3530
        %v3532 = vcombine.high %v3524, 0
        %v3534 = vunpack.c.l.s4 1934713408
        %v3535 = vunpack.c.0.s8 %v3534
        %v3536 = vlaneseq
        %v3537 = vshrl.u32 %v3536, 7
        %v3538 = vsub.s32 %v3535, %v3537
        %v3539 = vrot.slane %v3524, %v3538
        %v3541 = vunpack.c.l.s4 1934713408
        %v3542 = vunpack.c.0.s8 %v3541
        %v3543 = vlaneseq
        %v3544 = vshrl.u32 %v3543, 7
        %v3545 = vsub.s32 %v3542, %v3544
        %v3546 = vrot.slane %v3532, %v3545
        %v3547 = vcombine.high %v3531, 0
        %v3549 = vunpack.c.l.s4 1934713408
        %v3550 = vunpack.c.0.s8 %v3549
        %v3551 = vlaneseq
        %v3552 = vshrl.u32 %v3551, 7
        %v3553 = vsub.s32 %v3550, %v3552
        %v3554 = vrot.slane %v3531, %v3553
        %v3556 = vunpack.c.l.s4 1934713408
        %v3557 = vunpack.c.0.s8 %v3556
        %v3558 = vlaneseq
        %v3559 = vshrl.u32 %v3558, 7
        %v3560 = vsub.s32 %v3557, %v3559
        %v3561 = vrot.slane %v3547, %v3560
        %v3562 = vcombine.high %v3539, 0
        %v3563 = vcombine.high %v3546, 0
        %v3564 = vcombine.high %v3554, 0
        %v3565 = vcombine.high %v3561, 0
        %v3566 = vcombine.high %v2919, %v1030
        %v3568 = vunpack.c.l.s4 1983009808
        %v3569 = vunpack.c.0.s8 %v3568
        %v3570 = vlaneseq
        %v3571 = vshrl.u32 %v3570, 7
        %v3572 = vsub.s32 %v3569, %v3571
        %v3573 = vrot.slane %v2919, %v3572
        %v3575 = vunpack.c.l.s4 1983009808
        %v3576 = vunpack.c.0.s8 %v3575
        %v3577 = vlaneseq
        %v3578 = vshrl.u32 %v3577, 7
        %v3579 = vsub.s32 %v3576, %v3578
        %v3580 = vrot.slane %v3566, %v3579
        %v3581 = vcombine.high %v3573, 0
        %v3583 = vunpack.c.l.s4 1934713408
        %v3584 = vunpack.c.0.s8 %v3583
        %v3585 = vlaneseq
        %v3586 = vshrl.u32 %v3585, 7
        %v3587 = vsub.s32 %v3584, %v3586
        %v3588 = vrot.slane %v3573, %v3587
        %v3590 = vunpack.c.l.s4 1934713408
        %v3591 = vunpack.c.0.s8 %v3590
        %v3592 = vlaneseq
        %v3593 = vshrl.u32 %v3592, 7
        %v3594 = vsub.s32 %v3591, %v3593
        %v3595 = vrot.slane %v3581, %v3594
        %v3596 = vcombine.high %v3580, 0
        %v3598 = vunpack.c.l.s4 1934713408
        %v3599 = vunpack.c.0.s8 %v3598
        %v3600 = vlaneseq
        %v3601 = vshrl.u32 %v3600, 7
        %v3602 = vsub.s32 %v3599, %v3601
        %v3603 = vrot.slane %v3580, %v3602
        %v3605 = vunpack.c.l.s4 1934713408
        %v3606 = vunpack.c.0.s8 %v3605
        %v3607 = vlaneseq
        %v3608 = vshrl.u32 %v3607, 7
        %v3609 = vsub.s32 %v3606, %v3608
        %v3610 = vrot.slane %v3596, %v3609
        %v3611 = vcombine.high %v3588, 0
        %v3612 = vcombine.high %v3595, 0
        %v3613 = vcombine.high %v3603, 0
        %v3614 = vcombine.high %v3610, 0
        %v3615 = vcombine.high %v2923, %v1027
        %v3617 = vunpack.c.l.s4 1983009808
        %v3618 = vunpack.c.0.s8 %v3617
        %v3619 = vlaneseq
        %v3620 = vshrl.u32 %v3619, 7
        %v3621 = vsub.s32 %v3618, %v3620
        %v3622 = vrot.slane %v2923, %v3621
        %v3624 = vunpack.c.l.s4 1983009808
        %v3625 = vunpack.c.0.s8 %v3624
        %v3626 = vlaneseq
        %v3627 = vshrl.u32 %v3626, 7
        %v3628 = vsub.s32 %v3625, %v3627
        %v3629 = vrot.slane %v3615, %v3628
        %v3630 = vcombine.high %v3622, 0
        %v3632 = vunpack.c.l.s4 1934713408
        %v3633 = vunpack.c.0.s8 %v3632
        %v3634 = vlaneseq
        %v3635 = vshrl.u32 %v3634, 7
        %v3636 = vsub.s32 %v3633, %v3635
        %v3637 = vrot.slane %v3622, %v3636
        %v3639 = vunpack.c.l.s4 1934713408
        %v3640 = vunpack.c.0.s8 %v3639
        %v3641 = vlaneseq
        %v3642 = vshrl.u32 %v3641, 7
        %v3643 = vsub.s32 %v3640, %v3642
        %v3644 = vrot.slane %v3630, %v3643
        %v3645 = vcombine.high %v3629, 0
        %v3647 = vunpack.c.l.s4 1934713408
        %v3648 = vunpack.c.0.s8 %v3647
        %v3649 = vlaneseq
        %v3650 = vshrl.u32 %v3649, 7
        %v3651 = vsub.s32 %v3648, %v3650
        %v3652 = vrot.slane %v3629, %v3651
        %v3654 = vunpack.c.l.s4 1934713408
        %v3655 = vunpack.c.0.s8 %v3654
        %v3656 = vlaneseq
        %v3657 = vshrl.u32 %v3656, 7
        %v3658 = vsub.s32 %v3655, %v3657
        %v3659 = vrot.slane %v3645, %v3658
        %v3660 = vcombine.high %v3637, 0
        %v3661 = vcombine.high %v3644, 0
        %v3662 = vcombine.high %v3652, 0
        %v3663 = vcombine.high %v3659, 0
        %v3664 = vcombine.high %v2927, %v1030
        %v3666 = vunpack.c.l.s4 1983009808
        %v3667 = vunpack.c.0.s8 %v3666
        %v3668 = vlaneseq
        %v3669 = vshrl.u32 %v3668, 7
        %v3670 = vsub.s32 %v3667, %v3669
        %v3671 = vrot.slane %v2927, %v3670
        %v3673 = vunpack.c.l.s4 1983009808
        %v3674 = vunpack.c.0.s8 %v3673
        %v3675 = vlaneseq
        %v3676 = vshrl.u32 %v3675, 7
        %v3677 = vsub.s32 %v3674, %v3676
        %v3678 = vrot.slane %v3664, %v3677
        %v3679 = vcombine.high %v3671, 0
        %v3681 = vunpack.c.l.s4 1934713408
        %v3682 = vunpack.c.0.s8 %v3681
        %v3683 = vlaneseq
        %v3684 = vshrl.u32 %v3683, 7
        %v3685 = vsub.s32 %v3682, %v3684
        %v3686 = vrot.slane %v3671, %v3685
        %v3688 = vunpack.c.l.s4 1934713408
        %v3689 = vunpack.c.0.s8 %v3688
        %v3690 = vlaneseq
        %v3691 = vshrl.u32 %v3690, 7
        %v3692 = vsub.s32 %v3689, %v3691
        %v3693 = vrot.slane %v3679, %v3692
        %v3694 = vcombine.high %v3678, 0
        %v3696 = vunpack.c.l.s4 1934713408
        %v3697 = vunpack.c.0.s8 %v3696
        %v3698 = vlaneseq
        %v3699 = vshrl.u32 %v3698, 7
        %v3700 = vsub.s32 %v3697, %v3699
        %v3701 = vrot.slane %v3678, %v3700
        %v3703 = vunpack.c.l.s4 1934713408
        %v3704 = vunpack.c.0.s8 %v3703
        %v3705 = vlaneseq
        %v3706 = vshrl.u32 %v3705, 7
        %v3707 = vsub.s32 %v3704, %v3706
        %v3708 = vrot.slane %v3694, %v3707
        %v3709 = vcombine.high %v3686, 0
        %v3710 = vcombine.high %v3693, 0
        %v3711 = vcombine.high %v3701, 0
        %v3712 = vcombine.high %v3708, 0
        %v3713 = vcombine.low %v2951, %v2958
        %v3715 = vunpack.c.l.s4 1983009808
        %v3716 = vunpack.c.0.s8 %v3715
        %v3717 = vlaneseq
        %v3718 = vshrl.u32 %v3717, 7
        %v3719 = vsub.s32 %v3716, %v3718
        %v3720 = vrot.slane %v3713, %v3719
        %v3721 = vcombine.low %v2974, %v2975
        %v3723 = vunpack.c.l.s4 1983009808
        %v3724 = vunpack.c.0.s8 %v3723
        %v3725 = vlaneseq
        %v3726 = vshrl.u32 %v3725, 7
        %v3727 = vsub.s32 %v3724, %v3726
        %v3728 = vrot.slane %v3721, %v3727
        %v3729 = vcombine.low %v2966, %v2973
        %v3731 = vunpack.c.l.s4 1983009808
        %v3732 = vunpack.c.0.s8 %v3731
        %v3733 = vlaneseq
        %v3734 = vshrl.u32 %v3733, 7
        %v3735 = vsub.s32 %v3732, %v3734
        %v3736 = vrot.slane %v3729, %v3735
        %v3737 = vcombine.low %v2976, %v2977
        %v3739 = vunpack.c.l.s4 1983009808
        %v3740 = vunpack.c.0.s8 %v3739
        %v3741 = vlaneseq
        %v3742 = vshrl.u32 %v3741, 7
        %v3743 = vsub.s32 %v3740, %v3742
        %v3744 = vrot.slane %v3737, %v3743
        %v3745 = vcombine.low %v3720, %v3728
        %v3747 = vunpack.c.l.s4 1934713408
        %v3748 = vunpack.c.0.s8 %v3747
        %v3749 = vlaneseq
        %v3750 = vshrl.u32 %v3749, 7
        %v3751 = vsub.s32 %v3748, %v3750
        %v3752 = vrot.slane %v3745, %v3751
        %v3753 = vcombine.low %v3736, %v3744
        %v3755 = vunpack.c.l.s4 1934713408
        %v3756 = vunpack.c.0.s8 %v3755
        %v3757 = vlaneseq
        %v3758 = vshrl.u32 %v3757, 7
        %v3759 = vsub.s32 %v3756, %v3758
        %v3760 = vrot.slane %v3753, %v3759
        %v3761 = vcombine.low %v3752, %v3760
        %v3762 = vcombine.low %v3000, %v3007
        %v3764 = vunpack.c.l.s4 1983009808
        %v3765 = vunpack.c.0.s8 %v3764
        %v3766 = vlaneseq
        %v3767 = vshrl.u32 %v3766, 7
        %v3768 = vsub.s32 %v3765, %v3767
        %v3769 = vrot.slane %v3762, %v3768
        %v3770 = vcombine.low %v3023, %v3024
        %v3772 = vunpack.c.l.s4 1983009808
        %v3773 = vunpack.c.0.s8 %v3772
        %v3774 = vlaneseq
        %v3775 = vshrl.u32 %v3774, 7
        %v3776 = vsub.s32 %v3773, %v3775
        %v3777 = vrot.slane %v3770, %v3776
        %v3778 = vcombine.low %v3015, %v3022
        %v3780 = vunpack.c.l.s4 1983009808
        %v3781 = vunpack.c.0.s8 %v3780
        %v3782 = vlaneseq
        %v3783 = vshrl.u32 %v3782, 7
        %v3784 = vsub.s32 %v3781, %v3783
        %v3785 = vrot.slane %v3778, %v3784
        %v3786 = vcombine.low %v3025, %v3026
        %v3788 = vunpack.c.l.s4 1983009808
        %v3789 = vunpack.c.0.s8 %v3788
        %v3790 = vlaneseq
        %v3791 = vshrl.u32 %v3790, 7
        %v3792 = vsub.s32 %v3789, %v3791
        %v3793 = vrot.slane %v3786, %v3792
        %v3794 = vcombine.low %v3769, %v3777
        %v3796 = vunpack.c.l.s4 1934713408
        %v3797 = vunpack.c.0.s8 %v3796
        %v3798 = vlaneseq
        %v3799 = vshrl.u32 %v3798, 7
        %v3800 = vsub.s32 %v3797, %v3799
        %v3801 = vrot.slane %v3794, %v3800
        %v3802 = vcombine.low %v3785, %v3793
        %v3804 = vunpack.c.l.s4 1934713408
        %v3805 = vunpack.c.0.s8 %v3804
        %v3806 = vlaneseq
        %v3807 = vshrl.u32 %v3806, 7
        %v3808 = vsub.s32 %v3805, %v3807
        %v3809 = vrot.slane %v3802, %v3808
        %v3810 = vcombine.low %v3801, %v3809
        %v3811 = vcombine.low %v3049, %v3056
        %v3813 = vunpack.c.l.s4 1983009808
        %v3814 = vunpack.c.0.s8 %v3813
        %v3815 = vlaneseq
        %v3816 = vshrl.u32 %v3815, 7
        %v3817 = vsub.s32 %v3814, %v3816
        %v3818 = vrot.slane %v3811, %v3817
        %v3819 = vcombine.low %v3072, %v3073
        %v3821 = vunpack.c.l.s4 1983009808
        %v3822 = vunpack.c.0.s8 %v3821
        %v3823 = vlaneseq
        %v3824 = vshrl.u32 %v3823, 7
        %v3825 = vsub.s32 %v3822, %v3824
        %v3826 = vrot.slane %v3819, %v3825
        %v3827 = vcombine.low %v3064, %v3071
        %v3829 = vunpack.c.l.s4 1983009808
        %v3830 = vunpack.c.0.s8 %v3829
        %v3831 = vlaneseq
        %v3832 = vshrl.u32 %v3831, 7
        %v3833 = vsub.s32 %v3830, %v3832
        %v3834 = vrot.slane %v3827, %v3833
        %v3835 = vcombine.low %v3074, %v3075
        %v3837 = vunpack.c.l.s4 1983009808
        %v3838 = vunpack.c.0.s8 %v3837
        %v3839 = vlaneseq
        %v3840 = vshrl.u32 %v3839, 7
        %v3841 = vsub.s32 %v3838, %v3840
        %v3842 = vrot.slane %v3835, %v3841
        %v3843 = vcombine.low %v3818, %v3826
        %v3845 = vunpack.c.l.s4 1934713408
        %v3846 = vunpack.c.0.s8 %v3845
        %v3847 = vlaneseq
        %v3848 = vshrl.u32 %v3847, 7
        %v3849 = vsub.s32 %v3846, %v3848
        %v3850 = vrot.slane %v3843, %v3849
        %v3851 = vcombine.low %v3834, %v3842
        %v3853 = vunpack.c.l.s4 1934713408
        %v3854 = vunpack.c.0.s8 %v3853
        %v3855 = vlaneseq
        %v3856 = vshrl.u32 %v3855, 7
        %v3857 = vsub.s32 %v3854, %v3856
        %v3858 = vrot.slane %v3851, %v3857
        %v3859 = vcombine.low %v3850, %v3858
        %v3860 = vcombine.low %v3098, %v3105
        %v3862 = vunpack.c.l.s4 1983009808
        %v3863 = vunpack.c.0.s8 %v3862
        %v3864 = vlaneseq
        %v3865 = vshrl.u32 %v3864, 7
        %v3866 = vsub.s32 %v3863, %v3865
        %v3867 = vrot.slane %v3860, %v3866
        %v3868 = vcombine.low %v3121, %v3122
        %v3870 = vunpack.c.l.s4 1983009808
        %v3871 = vunpack.c.0.s8 %v3870
        %v3872 = vlaneseq
        %v3873 = vshrl.u32 %v3872, 7
        %v3874 = vsub.s32 %v3871, %v3873
        %v3875 = vrot.slane %v3868, %v3874
        %v3876 = vcombine.low %v3113, %v3120
        %v3878 = vunpack.c.l.s4 1983009808
        %v3879 = vunpack.c.0.s8 %v3878
        %v3880 = vlaneseq
        %v3881 = vshrl.u32 %v3880, 7
        %v3882 = vsub.s32 %v3879, %v3881
        %v3883 = vrot.slane %v3876, %v3882
        %v3884 = vcombine.low %v3123, %v3124
        %v3886 = vunpack.c.l.s4 1983009808
        %v3887 = vunpack.c.0.s8 %v3886
        %v3888 = vlaneseq
        %v3889 = vshrl.u32 %v3888, 7
        %v3890 = vsub.s32 %v3887, %v3889
        %v3891 = vrot.slane %v3884, %v3890
        %v3892 = vcombine.low %v3867, %v3875
        %v3894 = vunpack.c.l.s4 1934713408
        %v3895 = vunpack.c.0.s8 %v3894
        %v3896 = vlaneseq
        %v3897 = vshrl.u32 %v3896, 7
        %v3898 = vsub.s32 %v3895, %v3897
        %v3899 = vrot.slane %v3892, %v3898
        %v3900 = vcombine.low %v3883, %v3891
        %v3902 = vunpack.c.l.s4 1934713408
        %v3903 = vunpack.c.0.s8 %v3902
        %v3904 = vlaneseq
        %v3905 = vshrl.u32 %v3904, 7
        %v3906 = vsub.s32 %v3903, %v3905
        %v3907 = vrot.slane %v3900, %v3906
        %v3908 = vcombine.low %v3899, %v3907
        %v3909 = vcombine.low %v3147, %v3154
        %v3911 = vunpack.c.l.s4 1983009808
        %v3912 = vunpack.c.0.s8 %v3911
        %v3913 = vlaneseq
        %v3914 = vshrl.u32 %v3913, 7
        %v3915 = vsub.s32 %v3912, %v3914
        %v3916 = vrot.slane %v3909, %v3915
        %v3917 = vcombine.low %v3170, %v3171
        %v3919 = vunpack.c.l.s4 1983009808
        %v3920 = vunpack.c.0.s8 %v3919
        %v3921 = vlaneseq
        %v3922 = vshrl.u32 %v3921, 7
        %v3923 = vsub.s32 %v3920, %v3922
        %v3924 = vrot.slane %v3917, %v3923
        %v3925 = vcombine.low %v3162, %v3169
        %v3927 = vunpack.c.l.s4 1983009808
        %v3928 = vunpack.c.0.s8 %v3927
        %v3929 = vlaneseq
        %v3930 = vshrl.u32 %v3929, 7
        %v3931 = vsub.s32 %v3928, %v3930
        %v3932 = vrot.slane %v3925, %v3931
        %v3933 = vcombine.low %v3172, %v3173
        %v3935 = vunpack.c.l.s4 1983009808
        %v3936 = vunpack.c.0.s8 %v3935
        %v3937 = vlaneseq
        %v3938 = vshrl.u32 %v3937, 7
        %v3939 = vsub.s32 %v3936, %v3938
        %v3940 = vrot.slane %v3933, %v3939
        %v3941 = vcombine.low %v3916, %v3924
        %v3943 = vunpack.c.l.s4 1934713408
        %v3944 = vunpack.c.0.s8 %v3943
        %v3945 = vlaneseq
        %v3946 = vshrl.u32 %v3945, 7
        %v3947 = vsub.s32 %v3944, %v3946
        %v3948 = vrot.slane %v3941, %v3947
        %v3949 = vcombine.low %v3932, %v3940
        %v3951 = vunpack.c.l.s4 1934713408
        %v3952 = vunpack.c.0.s8 %v3951
        %v3953 = vlaneseq
        %v3954 = vshrl.u32 %v3953, 7
        %v3955 = vsub.s32 %v3952, %v3954
        %v3956 = vrot.slane %v3949, %v3955
        %v3957 = vcombine.low %v3948, %v3956
        %v3958 = vcombine.low %v3196, %v3203
        %v3960 = vunpack.c.l.s4 1983009808
        %v3961 = vunpack.c.0.s8 %v3960
        %v3962 = vlaneseq
        %v3963 = vshrl.u32 %v3962, 7
        %v3964 = vsub.s32 %v3961, %v3963
        %v3965 = vrot.slane %v3958, %v3964
        %v3966 = vcombine.low %v3219, %v3220
        %v3968 = vunpack.c.l.s4 1983009808
        %v3969 = vunpack.c.0.s8 %v3968
        %v3970 = vlaneseq
        %v3971 = vshrl.u32 %v3970, 7
        %v3972 = vsub.s32 %v3969, %v3971
        %v3973 = vrot.slane %v3966, %v3972
        %v3974 = vcombine.low %v3211, %v3218
        %v3976 = vunpack.c.l.s4 1983009808
        %v3977 = vunpack.c.0.s8 %v3976
        %v3978 = vlaneseq
        %v3979 = vshrl.u32 %v3978, 7
        %v3980 = vsub.s32 %v3977, %v3979
        %v3981 = vrot.slane %v3974, %v3980
        %v3982 = vcombine.low %v3221, %v3222
        %v3984 = vunpack.c.l.s4 1983009808
        %v3985 = vunpack.c.0.s8 %v3984
        %v3986 = vlaneseq
        %v3987 = vshrl.u32 %v3986, 7
        %v3988 = vsub.s32 %v3985, %v3987
        %v3989 = vrot.slane %v3982, %v3988
        %v3990 = vcombine.low %v3965, %v3973
        %v3992 = vunpack.c.l.s4 1934713408
        %v3993 = vunpack.c.0.s8 %v3992
        %v3994 = vlaneseq
        %v3995 = vshrl.u32 %v3994, 7
        %v3996 = vsub.s32 %v3993, %v3995
        %v3997 = vrot.slane %v3990, %v3996
        %v3998 = vcombine.low %v3981, %v3989
        %v4000 = vunpack.c.l.s4 1934713408
        %v4001 = vunpack.c.0.s8 %v4000
        %v4002 = vlaneseq
        %v4003 = vshrl.u32 %v4002, 7
        %v4004 = vsub.s32 %v4001, %v4003
        %v4005 = vrot.slane %v3998, %v4004
        %v4006 = vcombine.low %v3997, %v4005
        %v4007 = vcombine.low %v3245, %v3252
        %v4009 = vunpack.c.l.s4 1983009808
        %v4010 = vunpack.c.0.s8 %v4009
        %v4011 = vlaneseq
        %v4012 = vshrl.u32 %v4011, 7
        %v4013 = vsub.s32 %v4010, %v4012
        %v4014 = vrot.slane %v4007, %v4013
        %v4015 = vcombine.low %v3268, %v3269
        %v4017 = vunpack.c.l.s4 1983009808
        %v4018 = vunpack.c.0.s8 %v4017
        %v4019 = vlaneseq
        %v4020 = vshrl.u32 %v4019, 7
        %v4021 = vsub.s32 %v4018, %v4020
        %v4022 = vrot.slane %v4015, %v4021
        %v4023 = vcombine.low %v3260, %v3267
        %v4025 = vunpack.c.l.s4 1983009808
        %v4026 = vunpack.c.0.s8 %v4025
        %v4027 = vlaneseq
        %v4028 = vshrl.u32 %v4027, 7
        %v4029 = vsub.s32 %v4026, %v4028
        %v4030 = vrot.slane %v4023, %v4029
        %v4031 = vcombine.low %v3270, %v3271
        %v4033 = vunpack.c.l.s4 1983009808
        %v4034 = vunpack.c.0.s8 %v4033
        %v4035 = vlaneseq
        %v4036 = vshrl.u32 %v4035, 7
        %v4037 = vsub.s32 %v4034, %v4036
        %v4038 = vrot.slane %v4031, %v4037
        %v4039 = vcombine.low %v4014, %v4022
        %v4041 = vunpack.c.l.s4 1934713408
        %v4042 = vunpack.c.0.s8 %v4041
        %v4043 = vlaneseq
        %v4044 = vshrl.u32 %v4043, 7
        %v4045 = vsub.s32 %v4042, %v4044
        %v4046 = vrot.slane %v4039, %v4045
        %v4047 = vcombine.low %v4030, %v4038
        %v4049 = vunpack.c.l.s4 1934713408
        %v4050 = vunpack.c.0.s8 %v4049
        %v4051 = vlaneseq
        %v4052 = vshrl.u32 %v4051, 7
        %v4053 = vsub.s32 %v4050, %v4052
        %v4054 = vrot.slane %v4047, %v4053
        %v4055 = vcombine.low %v4046, %v4054
        %v4056 = vcombine.low %v3294, %v3301
        %v4058 = vunpack.c.l.s4 1983009808
        %v4059 = vunpack.c.0.s8 %v4058
        %v4060 = vlaneseq
        %v4061 = vshrl.u32 %v4060, 7
        %v4062 = vsub.s32 %v4059, %v4061
        %v4063 = vrot.slane %v4056, %v4062
        %v4064 = vcombine.low %v3317, %v3318
        %v4066 = vunpack.c.l.s4 1983009808
        %v4067 = vunpack.c.0.s8 %v4066
        %v4068 = vlaneseq
        %v4069 = vshrl.u32 %v4068, 7
        %v4070 = vsub.s32 %v4067, %v4069
        %v4071 = vrot.slane %v4064, %v4070
        %v4072 = vcombine.low %v3309, %v3316
        %v4074 = vunpack.c.l.s4 1983009808
        %v4075 = vunpack.c.0.s8 %v4074
        %v4076 = vlaneseq
        %v4077 = vshrl.u32 %v4076, 7
        %v4078 = vsub.s32 %v4075, %v4077
        %v4079 = vrot.slane %v4072, %v4078
        %v4080 = vcombine.low %v3319, %v3320
        %v4082 = vunpack.c.l.s4 1983009808
        %v4083 = vunpack.c.0.s8 %v4082
        %v4084 = vlaneseq
        %v4085 = vshrl.u32 %v4084, 7
        %v4086 = vsub.s32 %v4083, %v4085
        %v4087 = vrot.slane %v4080, %v4086
        %v4088 = vcombine.low %v4063, %v4071
        %v4090 = vunpack.c.l.s4 1934713408
        %v4091 = vunpack.c.0.s8 %v4090
        %v4092 = vlaneseq
        %v4093 = vshrl.u32 %v4092, 7
        %v4094 = vsub.s32 %v4091, %v4093
        %v4095 = vrot.slane %v4088, %v4094
        %v4096 = vcombine.low %v4079, %v4087
        %v4098 = vunpack.c.l.s4 1934713408
        %v4099 = vunpack.c.0.s8 %v4098
        %v4100 = vlaneseq
        %v4101 = vshrl.u32 %v4100, 7
        %v4102 = vsub.s32 %v4099, %v4101
        %v4103 = vrot.slane %v4096, %v4102
        %v4104 = vcombine.low %v4095, %v4103
        %v4105 = vcombine.low %v3343, %v3350
        %v4107 = vunpack.c.l.s4 1983009808
        %v4108 = vunpack.c.0.s8 %v4107
        %v4109 = vlaneseq
        %v4110 = vshrl.u32 %v4109, 7
        %v4111 = vsub.s32 %v4108, %v4110
        %v4112 = vrot.slane %v4105, %v4111
        %v4113 = vcombine.low %v3366, %v3367
        %v4115 = vunpack.c.l.s4 1983009808
        %v4116 = vunpack.c.0.s8 %v4115
        %v4117 = vlaneseq
        %v4118 = vshrl.u32 %v4117, 7
        %v4119 = vsub.s32 %v4116, %v4118
        %v4120 = vrot.slane %v4113, %v4119
        %v4121 = vcombine.low %v3358, %v3365
        %v4123 = vunpack.c.l.s4 1983009808
        %v4124 = vunpack.c.0.s8 %v4123
        %v4125 = vlaneseq
        %v4126 = vshrl.u32 %v4125, 7
        %v4127 = vsub.s32 %v4124, %v4126
        %v4128 = vrot.slane %v4121, %v4127
        %v4129 = vcombine.low %v3368, %v3369
        %v4131 = vunpack.c.l.s4 1983009808
        %v4132 = vunpack.c.0.s8 %v4131
        %v4133 = vlaneseq
        %v4134 = vshrl.u32 %v4133, 7
        %v4135 = vsub.s32 %v4132, %v4134
        %v4136 = vrot.slane %v4129, %v4135
        %v4137 = vcombine.low %v4112, %v4120
        %v4139 = vunpack.c.l.s4 1934713408
        %v4140 = vunpack.c.0.s8 %v4139
        %v4141 = vlaneseq
        %v4142 = vshrl.u32 %v4141, 7
        %v4143 = vsub.s32 %v4140, %v4142
        %v4144 = vrot.slane %v4137, %v4143
        %v4145 = vcombine.low %v4128, %v4136
        %v4147 = vunpack.c.l.s4 1934713408
        %v4148 = vunpack.c.0.s8 %v4147
        %v4149 = vlaneseq
        %v4150 = vshrl.u32 %v4149, 7
        %v4151 = vsub.s32 %v4148, %v4150
        %v4152 = vrot.slane %v4145, %v4151
        %v4153 = vcombine.low %v4144, %v4152
        %v4154 = vcombine.low %v3392, %v3399
        %v4156 = vunpack.c.l.s4 1983009808
        %v4157 = vunpack.c.0.s8 %v4156
        %v4158 = vlaneseq
        %v4159 = vshrl.u32 %v4158, 7
        %v4160 = vsub.s32 %v4157, %v4159
        %v4161 = vrot.slane %v4154, %v4160
        %v4162 = vcombine.low %v3415, %v3416
        %v4164 = vunpack.c.l.s4 1983009808
        %v4165 = vunpack.c.0.s8 %v4164
        %v4166 = vlaneseq
        %v4167 = vshrl.u32 %v4166, 7
        %v4168 = vsub.s32 %v4165, %v4167
        %v4169 = vrot.slane %v4162, %v4168
        %v4170 = vcombine.low %v3407, %v3414
        %v4172 = vunpack.c.l.s4 1983009808
        %v4173 = vunpack.c.0.s8 %v4172
        %v4174 = vlaneseq
        %v4175 = vshrl.u32 %v4174, 7
        %v4176 = vsub.s32 %v4173, %v4175
        %v4177 = vrot.slane %v4170, %v4176
        %v4178 = vcombine.low %v3417, %v3418
        %v4180 = vunpack.c.l.s4 1983009808
        %v4181 = vunpack.c.0.s8 %v4180
        %v4182 = vlaneseq
        %v4183 = vshrl.u32 %v4182, 7
        %v4184 = vsub.s32 %v4181, %v4183
        %v4185 = vrot.slane %v4178, %v4184
        %v4186 = vcombine.low %v4161, %v4169
        %v4188 = vunpack.c.l.s4 1934713408
        %v4189 = vunpack.c.0.s8 %v4188
        %v4190 = vlaneseq
        %v4191 = vshrl.u32 %v4190, 7
        %v4192 = vsub.s32 %v4189, %v4191
        %v4193 = vrot.slane %v4186, %v4192
        %v4194 = vcombine.low %v4177, %v4185
        %v4196 = vunpack.c.l.s4 1934713408
        %v4197 = vunpack.c.0.s8 %v4196
        %v4198 = vlaneseq
        %v4199 = vshrl.u32 %v4198, 7
        %v4200 = vsub.s32 %v4197, %v4199
        %v4201 = vrot.slane %v4194, %v4200
        %v4202 = vcombine.low %v4193, %v4201
        %v4203 = vcombine.low %v3441, %v3448
        %v4205 = vunpack.c.l.s4 1983009808
        %v4206 = vunpack.c.0.s8 %v4205
        %v4207 = vlaneseq
        %v4208 = vshrl.u32 %v4207, 7
        %v4209 = vsub.s32 %v4206, %v4208
        %v4210 = vrot.slane %v4203, %v4209
        %v4211 = vcombine.low %v3464, %v3465
        %v4213 = vunpack.c.l.s4 1983009808
        %v4214 = vunpack.c.0.s8 %v4213
        %v4215 = vlaneseq
        %v4216 = vshrl.u32 %v4215, 7
        %v4217 = vsub.s32 %v4214, %v4216
        %v4218 = vrot.slane %v4211, %v4217
        %v4219 = vcombine.low %v3456, %v3463
        %v4221 = vunpack.c.l.s4 1983009808
        %v4222 = vunpack.c.0.s8 %v4221
        %v4223 = vlaneseq
        %v4224 = vshrl.u32 %v4223, 7
        %v4225 = vsub.s32 %v4222, %v4224
        %v4226 = vrot.slane %v4219, %v4225
        %v4227 = vcombine.low %v3466, %v3467
        %v4229 = vunpack.c.l.s4 1983009808
        %v4230 = vunpack.c.0.s8 %v4229
        %v4231 = vlaneseq
        %v4232 = vshrl.u32 %v4231, 7
        %v4233 = vsub.s32 %v4230, %v4232
        %v4234 = vrot.slane %v4227, %v4233
        %v4235 = vcombine.low %v4210, %v4218
        %v4237 = vunpack.c.l.s4 1934713408
        %v4238 = vunpack.c.0.s8 %v4237
        %v4239 = vlaneseq
        %v4240 = vshrl.u32 %v4239, 7
        %v4241 = vsub.s32 %v4238, %v4240
        %v4242 = vrot.slane %v4235, %v4241
        %v4243 = vcombine.low %v4226, %v4234
        %v4245 = vunpack.c.l.s4 1934713408
        %v4246 = vunpack.c.0.s8 %v4245
        %v4247 = vlaneseq
        %v4248 = vshrl.u32 %v4247, 7
        %v4249 = vsub.s32 %v4246, %v4248
        %v4250 = vrot.slane %v4243, %v4249
        %v4251 = vcombine.low %v4242, %v4250
        %v4252 = vcombine.low %v3490, %v3497
        %v4254 = vunpack.c.l.s4 1983009808
        %v4255 = vunpack.c.0.s8 %v4254
        %v4256 = vlaneseq
        %v4257 = vshrl.u32 %v4256, 7
        %v4258 = vsub.s32 %v4255, %v4257
        %v4259 = vrot.slane %v4252, %v4258
        %v4260 = vcombine.low %v3513, %v3514
        %v4262 = vunpack.c.l.s4 1983009808
        %v4263 = vunpack.c.0.s8 %v4262
        %v4264 = vlaneseq
        %v4265 = vshrl.u32 %v4264, 7
        %v4266 = vsub.s32 %v4263, %v4265
        %v4267 = vrot.slane %v4260, %v4266
        %v4268 = vcombine.low %v3505, %v3512
        %v4270 = vunpack.c.l.s4 1983009808
        %v4271 = vunpack.c.0.s8 %v4270
        %v4272 = vlaneseq
        %v4273 = vshrl.u32 %v4272, 7
        %v4274 = vsub.s32 %v4271, %v4273
        %v4275 = vrot.slane %v4268, %v4274
        %v4276 = vcombine.low %v3515, %v3516
        %v4278 = vunpack.c.l.s4 1983009808
        %v4279 = vunpack.c.0.s8 %v4278
        %v4280 = vlaneseq
        %v4281 = vshrl.u32 %v4280, 7
        %v4282 = vsub.s32 %v4279, %v4281
        %v4283 = vrot.slane %v4276, %v4282
        %v4284 = vcombine.low %v4259, %v4267
        %v4286 = vunpack.c.l.s4 1934713408
        %v4287 = vunpack.c.0.s8 %v4286
        %v4288 = vlaneseq
        %v4289 = vshrl.u32 %v4288, 7
        %v4290 = vsub.s32 %v4287, %v4289
        %v4291 = vrot.slane %v4284, %v4290
        %v4292 = vcombine.low %v4275, %v4283
        %v4294 = vunpack.c.l.s4 1934713408
        %v4295 = vunpack.c.0.s8 %v4294
        %v4296 = vlaneseq
        %v4297 = vshrl.u32 %v4296, 7
        %v4298 = vsub.s32 %v4295, %v4297
        %v4299 = vrot.slane %v4292, %v4298
        %v4300 = vcombine.low %v4291, %v4299
        %v4301 = vcombine.low %v3539, %v3546
        %v4303 = vunpack.c.l.s4 1983009808
        %v4304 = vunpack.c.0.s8 %v4303
        %v4305 = vlaneseq
        %v4306 = vshrl.u32 %v4305, 7
        %v4307 = vsub.s32 %v4304, %v4306
        %v4308 = vrot.slane %v4301, %v4307
        %v4309 = vcombine.low %v3562, %v3563
        %v4311 = vunpack.c.l.s4 1983009808
        %v4312 = vunpack.c.0.s8 %v4311
        %v4313 = vlaneseq
        %v4314 = vshrl.u32 %v4313, 7
        %v4315 = vsub.s32 %v4312, %v4314
        %v4316 = vrot.slane %v4309, %v4315
        %v4317 = vcombine.low %v3554, %v3561
        %v4319 = vunpack.c.l.s4 1983009808
        %v4320 = vunpack.c.0.s8 %v4319
        %v4321 = vlaneseq
        %v4322 = vshrl.u32 %v4321, 7
        %v4323 = vsub.s32 %v4320, %v4322
        %v4324 = vrot.slane %v4317, %v4323
        %v4325 = vcombine.low %v3564, %v3565
        %v4327 = vunpack.c.l.s4 1983009808
        %v4328 = vunpack.c.0.s8 %v4327
        %v4329 = vlaneseq
        %v4330 = vshrl.u32 %v4329, 7
        %v4331 = vsub.s32 %v4328, %v4330
        %v4332 = vrot.slane %v4325, %v4331
        %v4333 = vcombine.low %v4308, %v4316
        %v4335 = vunpack.c.l.s4 1934713408
        %v4336 = vunpack.c.0.s8 %v4335
        %v4337 = vlaneseq
        %v4338 = vshrl.u32 %v4337, 7
        %v4339 = vsub.s32 %v4336, %v4338
        %v4340 = vrot.slane %v4333, %v4339
        %v4341 = vcombine.low %v4324, %v4332
        %v4343 = vunpack.c.l.s4 1934713408
        %v4344 = vunpack.c.0.s8 %v4343
        %v4345 = vlaneseq
        %v4346 = vshrl.u32 %v4345, 7
        %v4347 = vsub.s32 %v4344, %v4346
        %v4348 = vrot.slane %v4341, %v4347
        %v4349 = vcombine.low %v4340, %v4348
        %v4350 = vcombine.low %v3588, %v3595
        %v4352 = vunpack.c.l.s4 1983009808
        %v4353 = vunpack.c.0.s8 %v4352
        %v4354 = vlaneseq
        %v4355 = vshrl.u32 %v4354, 7
        %v4356 = vsub.s32 %v4353, %v4355
        %v4357 = vrot.slane %v4350, %v4356
        %v4358 = vcombine.low %v3611, %v3612
        %v4360 = vunpack.c.l.s4 1983009808
        %v4361 = vunpack.c.0.s8 %v4360
        %v4362 = vlaneseq
        %v4363 = vshrl.u32 %v4362, 7
        %v4364 = vsub.s32 %v4361, %v4363
        %v4365 = vrot.slane %v4358, %v4364
        %v4366 = vcombine.low %v3603, %v3610
        %v4368 = vunpack.c.l.s4 1983009808
        %v4369 = vunpack.c.0.s8 %v4368
        %v4370 = vlaneseq
        %v4371 = vshrl.u32 %v4370, 7
        %v4372 = vsub.s32 %v4369, %v4371
        %v4373 = vrot.slane %v4366, %v4372
        %v4374 = vcombine.low %v3613, %v3614
        %v4376 = vunpack.c.l.s4 1983009808
        %v4377 = vunpack.c.0.s8 %v4376
        %v4378 = vlaneseq
        %v4379 = vshrl.u32 %v4378, 7
        %v4380 = vsub.s32 %v4377, %v4379
        %v4381 = vrot.slane %v4374, %v4380
        %v4382 = vcombine.low %v4357, %v4365
        %v4384 = vunpack.c.l.s4 1934713408
        %v4385 = vunpack.c.0.s8 %v4384
        %v4386 = vlaneseq
        %v4387 = vshrl.u32 %v4386, 7
        %v4388 = vsub.s32 %v4385, %v4387
        %v4389 = vrot.slane %v4382, %v4388
        %v4390 = vcombine.low %v4373, %v4381
        %v4392 = vunpack.c.l.s4 1934713408
        %v4393 = vunpack.c.0.s8 %v4392
        %v4394 = vlaneseq
        %v4395 = vshrl.u32 %v4394, 7
        %v4396 = vsub.s32 %v4393, %v4395
        %v4397 = vrot.slane %v4390, %v4396
        %v4398 = vcombine.low %v4389, %v4397
        %v4399 = vcombine.low %v3637, %v3644
        %v4401 = vunpack.c.l.s4 1983009808
        %v4402 = vunpack.c.0.s8 %v4401
        %v4403 = vlaneseq
        %v4404 = vshrl.u32 %v4403, 7
        %v4405 = vsub.s32 %v4402, %v4404
        %v4406 = vrot.slane %v4399, %v4405
        %v4407 = vcombine.low %v3660, %v3661
        %v4409 = vunpack.c.l.s4 1983009808
        %v4410 = vunpack.c.0.s8 %v4409
        %v4411 = vlaneseq
        %v4412 = vshrl.u32 %v4411, 7
        %v4413 = vsub.s32 %v4410, %v4412
        %v4414 = vrot.slane %v4407, %v4413
        %v4415 = vcombine.low %v3652, %v3659
        %v4417 = vunpack.c.l.s4 1983009808
        %v4418 = vunpack.c.0.s8 %v4417
        %v4419 = vlaneseq
        %v4420 = vshrl.u32 %v4419, 7
        %v4421 = vsub.s32 %v4418, %v4420
        %v4422 = vrot.slane %v4415, %v4421
        %v4423 = vcombine.low %v3662, %v3663
        %v4425 = vunpack.c.l.s4 1983009808
        %v4426 = vunpack.c.0.s8 %v4425
        %v4427 = vlaneseq
        %v4428 = vshrl.u32 %v4427, 7
        %v4429 = vsub.s32 %v4426, %v4428
        %v4430 = vrot.slane %v4423, %v4429
        %v4431 = vcombine.low %v4406, %v4414
        %v4433 = vunpack.c.l.s4 1934713408
        %v4434 = vunpack.c.0.s8 %v4433
        %v4435 = vlaneseq
        %v4436 = vshrl.u32 %v4435, 7
        %v4437 = vsub.s32 %v4434, %v4436
        %v4438 = vrot.slane %v4431, %v4437
        %v4439 = vcombine.low %v4422, %v4430
        %v4441 = vunpack.c.l.s4 1934713408
        %v4442 = vunpack.c.0.s8 %v4441
        %v4443 = vlaneseq
        %v4444 = vshrl.u32 %v4443, 7
        %v4445 = vsub.s32 %v4442, %v4444
        %v4446 = vrot.slane %v4439, %v4445
        %v4447 = vcombine.low %v4438, %v4446
        %v4448 = vcombine.low %v3686, %v3693
        %v4450 = vunpack.c.l.s4 1983009808
        %v4451 = vunpack.c.0.s8 %v4450
        %v4452 = vlaneseq
        %v4453 = vshrl.u32 %v4452, 7
        %v4454 = vsub.s32 %v4451, %v4453
        %v4455 = vrot.slane %v4448, %v4454
        %v4456 = vcombine.low %v3709, %v3710
        %v4458 = vunpack.c.l.s4 1983009808
        %v4459 = vunpack.c.0.s8 %v4458
        %v4460 = vlaneseq
        %v4461 = vshrl.u32 %v4460, 7
        %v4462 = vsub.s32 %v4459, %v4461
        %v4463 = vrot.slane %v4456, %v4462
        %v4464 = vcombine.low %v3701, %v3708
        %v4466 = vunpack.c.l.s4 1983009808
        %v4467 = vunpack.c.0.s8 %v4466
        %v4468 = vlaneseq
        %v4469 = vshrl.u32 %v4468, 7
        %v4470 = vsub.s32 %v4467, %v4469
        %v4471 = vrot.slane %v4464, %v4470
        %v4472 = vcombine.low %v3711, %v3712
        %v4474 = vunpack.c.l.s4 1983009808
        %v4475 = vunpack.c.0.s8 %v4474
        %v4476 = vlaneseq
        %v4477 = vshrl.u32 %v4476, 7
        %v4478 = vsub.s32 %v4475, %v4477
        %v4479 = vrot.slane %v4472, %v4478
        %v4480 = vcombine.low %v4455, %v4463
        %v4482 = vunpack.c.l.s4 1934713408
        %v4483 = vunpack.c.0.s8 %v4482
        %v4484 = vlaneseq
        %v4485 = vshrl.u32 %v4484, 7
        %v4486 = vsub.s32 %v4483, %v4485
        %v4487 = vrot.slane %v4480, %v4486
        %v4488 = vcombine.low %v4471, %v4479
        %v4490 = vunpack.c.l.s4 1934713408
        %v4491 = vunpack.c.0.s8 %v4490
        %v4492 = vlaneseq
        %v4493 = vshrl.u32 %v4492, 7
        %v4494 = vsub.s32 %v4491, %v4493
        %v4495 = vrot.slane %v4488, %v4494
        %v4496 = vcombine.low %v4487, %v4495
        %v4499 = vpack.i.b16 %v3810, %v3761
        %v4500 = vshrl.u32 %v3761, 16
        %v4501 = vshrl.u32 %v3810, 16
        %v4502 = vpack.i.b16 %v4501, %v4500
        %v4505 = vpack.i.b16 %v3908, %v3859
        %v4506 = vshrl.u32 %v3859, 16
        %v4507 = vshrl.u32 %v3908, 16
        %v4508 = vpack.i.b16 %v4507, %v4506
        %v4511 = vpack.i.b16 %v4006, %v3957
        %v4512 = vshrl.u32 %v3957, 16
        %v4513 = vshrl.u32 %v4006, 16
        %v4514 = vpack.i.b16 %v4513, %v4512
        %v4517 = vpack.i.b16 %v4104, %v4055
        %v4518 = vshrl.u32 %v4055, 16
        %v4519 = vshrl.u32 %v4104, 16
        %v4520 = vpack.i.b16 %v4519, %v4518
        %v4523 = vpack.i.b16 %v4202, %v4153
        %v4524 = vshrl.u32 %v4153, 16
        %v4525 = vshrl.u32 %v4202, 16
        %v4526 = vpack.i.b16 %v4525, %v4524
        %v4529 = vpack.i.b16 %v4300, %v4251
        %v4530 = vshrl.u32 %v4251, 16
        %v4531 = vshrl.u32 %v4300, 16
        %v4532 = vpack.i.b16 %v4531, %v4530
        %v4535 = vpack.i.b16 %v4398, %v4349
        %v4536 = vshrl.u32 %v4349, 16
        %v4537 = vshrl.u32 %v4398, 16
        %v4538 = vpack.i.b16 %v4537, %v4536
        %v4541 = vpack.i.b16 %v4496, %v4447
        %v4542 = vshrl.u32 %v4447, 16
        %v4543 = vshrl.u32 %v4496, 16
        %v4544 = vpack.i.b16 %v4543, %v4542
        %v4545 = vunpack.c.l.b16 %v4499
        %v4546 = vunpack.c.h.b16 %v4499
        %v4547 = vunpack.c.l.b16 %v4505
        %v4548 = vunpack.c.h.b16 %v4505
        %v4549 = vunpack.c.l.b16 %v4511
        %v4550 = vunpack.c.h.b16 %v4511
        %v4551 = vunpack.c.l.b16 %v4517
        %v4552 = vunpack.c.h.b16 %v4517
        %v4553 = vunpack.c.l.b16 %v4523
        %v4554 = vunpack.c.h.b16 %v4523
        %v4555 = vunpack.c.l.b16 %v4529
        %v4556 = vunpack.c.h.b16 %v4529
        %v4557 = vunpack.c.l.b16 %v4535
        %v4558 = vunpack.c.h.b16 %v4535
        %v4559 = vunpack.c.l.b16 %v4541
        %v4560 = vunpack.c.h.b16 %v4541
        %v4561 = vunpack.c.l.b16 %v4502
        %v4562 = vunpack.c.h.b16 %v4502
        %v4563 = vunpack.c.l.b16 %v4508
        %v4564 = vunpack.c.h.b16 %v4508
        %v4565 = vunpack.c.l.b16 %v4514
        %v4566 = vunpack.c.h.b16 %v4514
        %v4567 = vunpack.c.l.b16 %v4520
        %v4568 = vunpack.c.h.b16 %v4520
        %v4569 = vunpack.c.l.b16 %v4526
        %v4570 = vunpack.c.h.b16 %v4526
        %v4571 = vunpack.c.l.b16 %v4532
        %v4572 = vunpack.c.h.b16 %v4532
        %v4573 = vunpack.c.l.b16 %v4538
        %v4574 = vunpack.c.h.b16 %v4538
        %v4575 = vunpack.c.l.b16 %v4544
        %v4576 = vunpack.c.h.b16 %v4544
        %v4577 = vpack.c.b16 %v4545, %v4545
        %v4578 = vpack.c.b16 %v4546, %v4546
        %v4579 = vpack.c.b16 %v4547, %v4547
        %v4580 = vpack.c.b16 %v4548, %v4548
        %v4581 = vpack.c.b16 %v4549, %v4549
        %v4582 = vpack.c.b16 %v4550, %v4550
        %v4583 = vpack.c.b16 %v4551, %v4551
        %v4584 = vpack.c.b16 %v4552, %v4552
        %v4585 = vpack.c.b16 %v4553, %v4553
        %v4586 = vpack.c.b16 %v4554, %v4554
        %v4587 = vpack.c.b16 %v4555, %v4555
        %v4588 = vpack.c.b16 %v4556, %v4556
        %v4589 = vpack.c.b16 %v4557, %v4557
        %v4590 = vpack.c.b16 %v4558, %v4558
        %v4591 = vpack.c.b16 %v4559, %v4559
        %v4592 = vpack.c.b16 %v4560, %v4560
        %v4593 = vpack.c.b16 %v4561, %v4561
        %v4594 = vpack.c.b16 %v4562, %v4562
        %v4595 = vpack.c.b16 %v4563, %v4563
        %v4596 = vpack.c.b16 %v4564, %v4564
        %v4597 = vpack.c.b16 %v4565, %v4565
        %v4598 = vpack.c.b16 %v4566, %v4566
        %v4599 = vpack.c.b16 %v4567, %v4567
        %v4600 = vpack.c.b16 %v4568, %v4568
        %v4601 = vpack.c.b16 %v4569, %v4569
        %v4602 = vpack.c.b16 %v4570, %v4570
        %v4603 = vpack.c.b16 %v4571, %v4571
        %v4604 = vpack.c.b16 %v4572, %v4572
        %v4605 = vpack.c.b16 %v4573, %v4573
        %v4606 = vpack.c.b16 %v4574, %v4574
        %v4607 = vpack.c.b16 %v4575, %v4575
        %v4608 = vpack.c.b16 %v4576, %v4576
        %4641 = vst.msk [vmem:[%s309] sm:$0xf] %vm2800, %v4577
        %4642 = vst.msk [vmem:[%s309 + $0x4] sm:$0xf] %vm2800, %v4578
        %4643 = vst.msk [vmem:[%s309 + $0x8] sm:$0xf] %vm2800, %v4579
        %4644 = vst.msk [vmem:[%s309 + $0xc] sm:$0xf] %vm2800, %v4580
        %4645 = vst.msk [vmem:[%s309 + $0x10] sm:$0xf] %vm2800, %v4581
        %4646 = vst.msk [vmem:[%s309 + $0x14] sm:$0xf] %vm2800, %v4582
        %4647 = vst.msk [vmem:[%s309 + $0x18] sm:$0xf] %vm2800, %v4583
        %4648 = vst.msk [vmem:[%s309 + $0x1c] sm:$0xf] %vm2800, %v4584
        %4649 = vst.msk [vmem:[%s309 + $0x20] sm:$0xf] %vm2800, %v4585
        %4650 = vst.msk [vmem:[%s309 + $0x24] sm:$0xf] %vm2800, %v4586
        %4651 = vst.msk [vmem:[%s309 + $0x28] sm:$0xf] %vm2800, %v4587
        %4652 = vst.msk [vmem:[%s309 + $0x2c] sm:$0xf] %vm2800, %v4588
        %4653 = vst.msk [vmem:[%s309 + $0x30] sm:$0xf] %vm2800, %v4589
        %4654 = vst.msk [vmem:[%s309 + $0x34] sm:$0xf] %vm2800, %v4590
        %4655 = vst.msk [vmem:[%s309 + $0x38] sm:$0xf] %vm2800, %v4591
        %4656 = vst.msk [vmem:[%s309 + $0x3c] sm:$0xf] %vm2800, %v4592
        %4657 = vst.msk [vmem:[%s309 + $0x40] sm:$0xf] %vm2800, %v4593
        %4658 = vst.msk [vmem:[%s309 + $0x44] sm:$0xf] %vm2800, %v4594
        %4659 = vst.msk [vmem:[%s309 + $0x48] sm:$0xf] %vm2800, %v4595
        %4660 = vst.msk [vmem:[%s309 + $0x4c] sm:$0xf] %vm2800, %v4596
        %4661 = vst.msk [vmem:[%s309 + $0x50] sm:$0xf] %vm2800, %v4597
        %4662 = vst.msk [vmem:[%s309 + $0x54] sm:$0xf] %vm2800, %v4598
        %4663 = vst.msk [vmem:[%s309 + $0x58] sm:$0xf] %vm2800, %v4599
        %4664 = vst.msk [vmem:[%s309 + $0x5c] sm:$0xf] %vm2800, %v4600
        %4665 = vst.msk [vmem:[%s309 + $0x60] sm:$0xf] %vm2800, %v4601
        %4666 = vst.msk [vmem:[%s309 + $0x64] sm:$0xf] %vm2800, %v4602
        %4667 = vst.msk [vmem:[%s309 + $0x68] sm:$0xf] %vm2800, %v4603
        %4668 = vst.msk [vmem:[%s309 + $0x6c] sm:$0xf] %vm2800, %v4604
        %4669 = vst.msk [vmem:[%s309 + $0x70] sm:$0xf] %vm2800, %v4605
        %4670 = vst.msk [vmem:[%s309 + $0x74] sm:$0xf] %vm2800, %v4606
        %4671 = vst.msk [vmem:[%s309 + $0x78] sm:$0xf] %vm2800, %v4607
        %4672 = vst.msk [vmem:[%s309 + $0x7c] sm:$0xf] %vm2800, %v4608
        %v4673 = vpack.c.bf16 %v927, %v924
        %v4674 = vpack.c.bf16 %v935, %v932
        %v4675 = vpack.c.bf16 %v943, %v940
        %v4676 = vpack.c.bf16 %v951, %v948
        %v4677 = vpack.c.bf16 %v959, %v956
        %v4678 = vpack.c.bf16 %v967, %v964
        %v4679 = vpack.c.bf16 %v975, %v972
        %v4680 = vpack.c.bf16 %v983, %v980
        %4689 = vrot.lane.b32.xlu0 %v4673, 64
        %v4690 = vpop.permute.xlu0 %4689
        %4691 = vrot.lane.b32.xlu0 %v4674, 64
        %v4692 = vpop.permute.xlu0 %4691
        %4693 = vrot.lane.b32.xlu0 %v4675, 64
        %v4694 = vpop.permute.xlu0 %4693
        %4695 = vrot.lane.b32.xlu0 %v4676, 64
        %v4696 = vpop.permute.xlu0 %4695
        %4697 = vrot.lane.b32.xlu0 %v4677, 64
        %v4698 = vpop.permute.xlu0 %4697
        %4699 = vrot.lane.b32.xlu0 %v4678, 64
        %v4700 = vpop.permute.xlu0 %4699
        %4701 = vrot.lane.b32.xlu0 %v4679, 64
        %v4702 = vpop.permute.xlu0 %4701
        %4703 = vrot.lane.b32.xlu0 %v4680, 64
        %v4704 = vpop.permute.xlu0 %4703
        %v4707 = vpack.i.b16 %v4690, %v4673
        %v4709 = vshrl.u32 %v4673, 16
        %v4710 = vshrl.u32 %v4690, 16
        %v4711 = vpack.i.b16 %v4710, %v4709
        %v4715 = vpack.i.b16 %v4692, %v4674
        %v4717 = vshrl.u32 %v4674, 16
        %v4718 = vshrl.u32 %v4692, 16
        %v4719 = vpack.i.b16 %v4718, %v4717
        %v4723 = vpack.i.b16 %v4694, %v4675
        %v4725 = vshrl.u32 %v4675, 16
        %v4726 = vshrl.u32 %v4694, 16
        %v4727 = vpack.i.b16 %v4726, %v4725
        %v4731 = vpack.i.b16 %v4696, %v4676
        %v4733 = vshrl.u32 %v4676, 16
        %v4734 = vshrl.u32 %v4696, 16
        %v4735 = vpack.i.b16 %v4734, %v4733
        %v4739 = vpack.i.b16 %v4698, %v4677
        %v4741 = vshrl.u32 %v4677, 16
        %v4742 = vshrl.u32 %v4698, 16
        %v4743 = vpack.i.b16 %v4742, %v4741
        %v4747 = vpack.i.b16 %v4700, %v4678
        %v4749 = vshrl.u32 %v4678, 16
        %v4750 = vshrl.u32 %v4700, 16
        %v4751 = vpack.i.b16 %v4750, %v4749
        %v4755 = vpack.i.b16 %v4702, %v4679
        %v4757 = vshrl.u32 %v4679, 16
        %v4758 = vshrl.u32 %v4702, 16
        %v4759 = vpack.i.b16 %v4758, %v4757
        %v4763 = vpack.i.b16 %v4704, %v4680
        %v4765 = vshrl.u32 %v4680, 16
        %v4766 = vshrl.u32 %v4704, 16
        %v4767 = vpack.i.b16 %v4766, %v4765
        %v4769 = vcombine.high %v4707, %v1027
        %v4771 = vunpack.c.l.s4 1983009808
        %v4772 = vunpack.c.0.s8 %v4771
        %v4773 = vlaneseq
        %v4774 = vshrl.u32 %v4773, 7
        %v4775 = vsub.s32 %v4772, %v4774
        %v4776 = vrot.slane %v4707, %v4775
        %v4778 = vunpack.c.l.s4 1983009808
        %v4779 = vunpack.c.0.s8 %v4778
        %v4780 = vlaneseq
        %v4781 = vshrl.u32 %v4780, 7
        %v4782 = vsub.s32 %v4779, %v4781
        %v4783 = vrot.slane %v4769, %v4782
        %v4784 = vcombine.high %v4776, 0
        %v4786 = vunpack.c.l.s4 1934713408
        %v4787 = vunpack.c.0.s8 %v4786
        %v4788 = vlaneseq
        %v4789 = vshrl.u32 %v4788, 7
        %v4790 = vsub.s32 %v4787, %v4789
        %v4791 = vrot.slane %v4776, %v4790
        %v4793 = vunpack.c.l.s4 1934713408
        %v4794 = vunpack.c.0.s8 %v4793
        %v4795 = vlaneseq
        %v4796 = vshrl.u32 %v4795, 7
        %v4797 = vsub.s32 %v4794, %v4796
        %v4798 = vrot.slane %v4784, %v4797
        %v4799 = vcombine.high %v4783, 0
        %v4801 = vunpack.c.l.s4 1934713408
        %v4802 = vunpack.c.0.s8 %v4801
        %v4803 = vlaneseq
        %v4804 = vshrl.u32 %v4803, 7
        %v4805 = vsub.s32 %v4802, %v4804
        %v4806 = vrot.slane %v4783, %v4805
        %v4808 = vunpack.c.l.s4 1934713408
        %v4809 = vunpack.c.0.s8 %v4808
        %v4810 = vlaneseq
        %v4811 = vshrl.u32 %v4810, 7
        %v4812 = vsub.s32 %v4809, %v4811
        %v4813 = vrot.slane %v4799, %v4812
        %v4814 = vcombine.high %v4791, 0
        %v4815 = vcombine.high %v4798, 0
        %v4816 = vcombine.high %v4806, 0
        %v4817 = vcombine.high %v4813, 0
        %v4818 = vcombine.high %v4711, %v1030
        %v4820 = vunpack.c.l.s4 1983009808
        %v4821 = vunpack.c.0.s8 %v4820
        %v4822 = vlaneseq
        %v4823 = vshrl.u32 %v4822, 7
        %v4824 = vsub.s32 %v4821, %v4823
        %v4825 = vrot.slane %v4711, %v4824
        %v4827 = vunpack.c.l.s4 1983009808
        %v4828 = vunpack.c.0.s8 %v4827
        %v4829 = vlaneseq
        %v4830 = vshrl.u32 %v4829, 7
        %v4831 = vsub.s32 %v4828, %v4830
        %v4832 = vrot.slane %v4818, %v4831
        %v4833 = vcombine.high %v4825, 0
        %v4835 = vunpack.c.l.s4 1934713408
        %v4836 = vunpack.c.0.s8 %v4835
        %v4837 = vlaneseq
        %v4838 = vshrl.u32 %v4837, 7
        %v4839 = vsub.s32 %v4836, %v4838
        %v4840 = vrot.slane %v4825, %v4839
        %v4842 = vunpack.c.l.s4 1934713408
        %v4843 = vunpack.c.0.s8 %v4842
        %v4844 = vlaneseq
        %v4845 = vshrl.u32 %v4844, 7
        %v4846 = vsub.s32 %v4843, %v4845
        %v4847 = vrot.slane %v4833, %v4846
        %v4848 = vcombine.high %v4832, 0
        %v4850 = vunpack.c.l.s4 1934713408
        %v4851 = vunpack.c.0.s8 %v4850
        %v4852 = vlaneseq
        %v4853 = vshrl.u32 %v4852, 7
        %v4854 = vsub.s32 %v4851, %v4853
        %v4855 = vrot.slane %v4832, %v4854
        %v4857 = vunpack.c.l.s4 1934713408
        %v4858 = vunpack.c.0.s8 %v4857
        %v4859 = vlaneseq
        %v4860 = vshrl.u32 %v4859, 7
        %v4861 = vsub.s32 %v4858, %v4860
        %v4862 = vrot.slane %v4848, %v4861
        %v4863 = vcombine.high %v4840, 0
        %v4864 = vcombine.high %v4847, 0
        %v4865 = vcombine.high %v4855, 0
        %v4866 = vcombine.high %v4862, 0
        %v4867 = vcombine.high %v4715, %v1027
        %v4869 = vunpack.c.l.s4 1983009808
        %v4870 = vunpack.c.0.s8 %v4869
        %v4871 = vlaneseq
        %v4872 = vshrl.u32 %v4871, 7
        %v4873 = vsub.s32 %v4870, %v4872
        %v4874 = vrot.slane %v4715, %v4873
        %v4876 = vunpack.c.l.s4 1983009808
        %v4877 = vunpack.c.0.s8 %v4876
        %v4878 = vlaneseq
        %v4879 = vshrl.u32 %v4878, 7
        %v4880 = vsub.s32 %v4877, %v4879
        %v4881 = vrot.slane %v4867, %v4880
        %v4882 = vcombine.high %v4874, 0
        %v4884 = vunpack.c.l.s4 1934713408
        %v4885 = vunpack.c.0.s8 %v4884
        %v4886 = vlaneseq
        %v4887 = vshrl.u32 %v4886, 7
        %v4888 = vsub.s32 %v4885, %v4887
        %v4889 = vrot.slane %v4874, %v4888
        %v4891 = vunpack.c.l.s4 1934713408
        %v4892 = vunpack.c.0.s8 %v4891
        %v4893 = vlaneseq
        %v4894 = vshrl.u32 %v4893, 7
        %v4895 = vsub.s32 %v4892, %v4894
        %v4896 = vrot.slane %v4882, %v4895
        %v4897 = vcombine.high %v4881, 0
        %v4899 = vunpack.c.l.s4 1934713408
        %v4900 = vunpack.c.0.s8 %v4899
        %v4901 = vlaneseq
        %v4902 = vshrl.u32 %v4901, 7
        %v4903 = vsub.s32 %v4900, %v4902
        %v4904 = vrot.slane %v4881, %v4903
        %v4906 = vunpack.c.l.s4 1934713408
        %v4907 = vunpack.c.0.s8 %v4906
        %v4908 = vlaneseq
        %v4909 = vshrl.u32 %v4908, 7
        %v4910 = vsub.s32 %v4907, %v4909
        %v4911 = vrot.slane %v4897, %v4910
        %v4912 = vcombine.high %v4889, 0
        %v4913 = vcombine.high %v4896, 0
        %v4914 = vcombine.high %v4904, 0
        %v4915 = vcombine.high %v4911, 0
        %v4916 = vcombine.high %v4719, %v1030
        %v4918 = vunpack.c.l.s4 1983009808
        %v4919 = vunpack.c.0.s8 %v4918
        %v4920 = vlaneseq
        %v4921 = vshrl.u32 %v4920, 7
        %v4922 = vsub.s32 %v4919, %v4921
        %v4923 = vrot.slane %v4719, %v4922
        %v4925 = vunpack.c.l.s4 1983009808
        %v4926 = vunpack.c.0.s8 %v4925
        %v4927 = vlaneseq
        %v4928 = vshrl.u32 %v4927, 7
        %v4929 = vsub.s32 %v4926, %v4928
        %v4930 = vrot.slane %v4916, %v4929
        %v4931 = vcombine.high %v4923, 0
        %v4933 = vunpack.c.l.s4 1934713408
        %v4934 = vunpack.c.0.s8 %v4933
        %v4935 = vlaneseq
        %v4936 = vshrl.u32 %v4935, 7
        %v4937 = vsub.s32 %v4934, %v4936
        %v4938 = vrot.slane %v4923, %v4937
        %v4940 = vunpack.c.l.s4 1934713408
        %v4941 = vunpack.c.0.s8 %v4940
        %v4942 = vlaneseq
        %v4943 = vshrl.u32 %v4942, 7
        %v4944 = vsub.s32 %v4941, %v4943
        %v4945 = vrot.slane %v4931, %v4944
        %v4946 = vcombine.high %v4930, 0
        %v4948 = vunpack.c.l.s4 1934713408
        %v4949 = vunpack.c.0.s8 %v4948
        %v4950 = vlaneseq
        %v4951 = vshrl.u32 %v4950, 7
        %v4952 = vsub.s32 %v4949, %v4951
        %v4953 = vrot.slane %v4930, %v4952
        %v4955 = vunpack.c.l.s4 1934713408
        %v4956 = vunpack.c.0.s8 %v4955
        %v4957 = vlaneseq
        %v4958 = vshrl.u32 %v4957, 7
        %v4959 = vsub.s32 %v4956, %v4958
        %v4960 = vrot.slane %v4946, %v4959
        %v4961 = vcombine.high %v4938, 0
        %v4962 = vcombine.high %v4945, 0
        %v4963 = vcombine.high %v4953, 0
        %v4964 = vcombine.high %v4960, 0
        %v4965 = vcombine.high %v4723, %v1027
        %v4967 = vunpack.c.l.s4 1983009808
        %v4968 = vunpack.c.0.s8 %v4967
        %v4969 = vlaneseq
        %v4970 = vshrl.u32 %v4969, 7
        %v4971 = vsub.s32 %v4968, %v4970
        %v4972 = vrot.slane %v4723, %v4971
        %v4974 = vunpack.c.l.s4 1983009808
        %v4975 = vunpack.c.0.s8 %v4974
        %v4976 = vlaneseq
        %v4977 = vshrl.u32 %v4976, 7
        %v4978 = vsub.s32 %v4975, %v4977
        %v4979 = vrot.slane %v4965, %v4978
        %v4980 = vcombine.high %v4972, 0
        %v4982 = vunpack.c.l.s4 1934713408
        %v4983 = vunpack.c.0.s8 %v4982
        %v4984 = vlaneseq
        %v4985 = vshrl.u32 %v4984, 7
        %v4986 = vsub.s32 %v4983, %v4985
        %v4987 = vrot.slane %v4972, %v4986
        %v4989 = vunpack.c.l.s4 1934713408
        %v4990 = vunpack.c.0.s8 %v4989
        %v4991 = vlaneseq
        %v4992 = vshrl.u32 %v4991, 7
        %v4993 = vsub.s32 %v4990, %v4992
        %v4994 = vrot.slane %v4980, %v4993
        %v4995 = vcombine.high %v4979, 0
        %v4997 = vunpack.c.l.s4 1934713408
        %v4998 = vunpack.c.0.s8 %v4997
        %v4999 = vlaneseq
        %v5000 = vshrl.u32 %v4999, 7
        %v5001 = vsub.s32 %v4998, %v5000
        %v5002 = vrot.slane %v4979, %v5001
        %v5004 = vunpack.c.l.s4 1934713408
        %v5005 = vunpack.c.0.s8 %v5004
        %v5006 = vlaneseq
        %v5007 = vshrl.u32 %v5006, 7
        %v5008 = vsub.s32 %v5005, %v5007
        %v5009 = vrot.slane %v4995, %v5008
        %v5010 = vcombine.high %v4987, 0
        %v5011 = vcombine.high %v4994, 0
        %v5012 = vcombine.high %v5002, 0
        %v5013 = vcombine.high %v5009, 0
        %v5014 = vcombine.high %v4727, %v1030
        %v5016 = vunpack.c.l.s4 1983009808
        %v5017 = vunpack.c.0.s8 %v5016
        %v5018 = vlaneseq
        %v5019 = vshrl.u32 %v5018, 7
        %v5020 = vsub.s32 %v5017, %v5019
        %v5021 = vrot.slane %v4727, %v5020
        %v5023 = vunpack.c.l.s4 1983009808
        %v5024 = vunpack.c.0.s8 %v5023
        %v5025 = vlaneseq
        %v5026 = vshrl.u32 %v5025, 7
        %v5027 = vsub.s32 %v5024, %v5026
        %v5028 = vrot.slane %v5014, %v5027
        %v5029 = vcombine.high %v5021, 0
        %v5031 = vunpack.c.l.s4 1934713408
        %v5032 = vunpack.c.0.s8 %v5031
        %v5033 = vlaneseq
        %v5034 = vshrl.u32 %v5033, 7
        %v5035 = vsub.s32 %v5032, %v5034
        %v5036 = vrot.slane %v5021, %v5035
        %v5038 = vunpack.c.l.s4 1934713408
        %v5039 = vunpack.c.0.s8 %v5038
        %v5040 = vlaneseq
        %v5041 = vshrl.u32 %v5040, 7
        %v5042 = vsub.s32 %v5039, %v5041
        %v5043 = vrot.slane %v5029, %v5042
        %v5044 = vcombine.high %v5028, 0
        %v5046 = vunpack.c.l.s4 1934713408
        %v5047 = vunpack.c.0.s8 %v5046
        %v5048 = vlaneseq
        %v5049 = vshrl.u32 %v5048, 7
        %v5050 = vsub.s32 %v5047, %v5049
        %v5051 = vrot.slane %v5028, %v5050
        %v5053 = vunpack.c.l.s4 1934713408
        %v5054 = vunpack.c.0.s8 %v5053
        %v5055 = vlaneseq
        %v5056 = vshrl.u32 %v5055, 7
        %v5057 = vsub.s32 %v5054, %v5056
        %v5058 = vrot.slane %v5044, %v5057
        %v5059 = vcombine.high %v5036, 0
        %v5060 = vcombine.high %v5043, 0
        %v5061 = vcombine.high %v5051, 0
        %v5062 = vcombine.high %v5058, 0
        %v5063 = vcombine.high %v4731, %v1027
        %v5065 = vunpack.c.l.s4 1983009808
        %v5066 = vunpack.c.0.s8 %v5065
        %v5067 = vlaneseq
        %v5068 = vshrl.u32 %v5067, 7
        %v5069 = vsub.s32 %v5066, %v5068
        %v5070 = vrot.slane %v4731, %v5069
        %v5072 = vunpack.c.l.s4 1983009808
        %v5073 = vunpack.c.0.s8 %v5072
        %v5074 = vlaneseq
        %v5075 = vshrl.u32 %v5074, 7
        %v5076 = vsub.s32 %v5073, %v5075
        %v5077 = vrot.slane %v5063, %v5076
        %v5078 = vcombine.high %v5070, 0
        %v5080 = vunpack.c.l.s4 1934713408
        %v5081 = vunpack.c.0.s8 %v5080
        %v5082 = vlaneseq
        %v5083 = vshrl.u32 %v5082, 7
        %v5084 = vsub.s32 %v5081, %v5083
        %v5085 = vrot.slane %v5070, %v5084
        %v5087 = vunpack.c.l.s4 1934713408
        %v5088 = vunpack.c.0.s8 %v5087
        %v5089 = vlaneseq
        %v5090 = vshrl.u32 %v5089, 7
        %v5091 = vsub.s32 %v5088, %v5090
        %v5092 = vrot.slane %v5078, %v5091
        %v5093 = vcombine.high %v5077, 0
        %v5095 = vunpack.c.l.s4 1934713408
        %v5096 = vunpack.c.0.s8 %v5095
        %v5097 = vlaneseq
        %v5098 = vshrl.u32 %v5097, 7
        %v5099 = vsub.s32 %v5096, %v5098
        %v5100 = vrot.slane %v5077, %v5099
        %v5102 = vunpack.c.l.s4 1934713408
        %v5103 = vunpack.c.0.s8 %v5102
        %v5104 = vlaneseq
        %v5105 = vshrl.u32 %v5104, 7
        %v5106 = vsub.s32 %v5103, %v5105
        %v5107 = vrot.slane %v5093, %v5106
        %v5108 = vcombine.high %v5085, 0
        %v5109 = vcombine.high %v5092, 0
        %v5110 = vcombine.high %v5100, 0
        %v5111 = vcombine.high %v5107, 0
        %v5112 = vcombine.high %v4735, %v1030
        %v5114 = vunpack.c.l.s4 1983009808
        %v5115 = vunpack.c.0.s8 %v5114
        %v5116 = vlaneseq
        %v5117 = vshrl.u32 %v5116, 7
        %v5118 = vsub.s32 %v5115, %v5117
        %v5119 = vrot.slane %v4735, %v5118
        %v5121 = vunpack.c.l.s4 1983009808
        %v5122 = vunpack.c.0.s8 %v5121
        %v5123 = vlaneseq
        %v5124 = vshrl.u32 %v5123, 7
        %v5125 = vsub.s32 %v5122, %v5124
        %v5126 = vrot.slane %v5112, %v5125
        %v5127 = vcombine.high %v5119, 0
        %v5129 = vunpack.c.l.s4 1934713408
        %v5130 = vunpack.c.0.s8 %v5129
        %v5131 = vlaneseq
        %v5132 = vshrl.u32 %v5131, 7
        %v5133 = vsub.s32 %v5130, %v5132
        %v5134 = vrot.slane %v5119, %v5133
        %v5136 = vunpack.c.l.s4 1934713408
        %v5137 = vunpack.c.0.s8 %v5136
        %v5138 = vlaneseq
        %v5139 = vshrl.u32 %v5138, 7
        %v5140 = vsub.s32 %v5137, %v5139
        %v5141 = vrot.slane %v5127, %v5140
        %v5142 = vcombine.high %v5126, 0
        %v5144 = vunpack.c.l.s4 1934713408
        %v5145 = vunpack.c.0.s8 %v5144
        %v5146 = vlaneseq
        %v5147 = vshrl.u32 %v5146, 7
        %v5148 = vsub.s32 %v5145, %v5147
        %v5149 = vrot.slane %v5126, %v5148
        %v5151 = vunpack.c.l.s4 1934713408
        %v5152 = vunpack.c.0.s8 %v5151
        %v5153 = vlaneseq
        %v5154 = vshrl.u32 %v5153, 7
        %v5155 = vsub.s32 %v5152, %v5154
        %v5156 = vrot.slane %v5142, %v5155
        %v5157 = vcombine.high %v5134, 0
        %v5158 = vcombine.high %v5141, 0
        %v5159 = vcombine.high %v5149, 0
        %v5160 = vcombine.high %v5156, 0
        %v5161 = vcombine.high %v4739, %v1027
        %v5163 = vunpack.c.l.s4 1983009808
        %v5164 = vunpack.c.0.s8 %v5163
        %v5165 = vlaneseq
        %v5166 = vshrl.u32 %v5165, 7
        %v5167 = vsub.s32 %v5164, %v5166
        %v5168 = vrot.slane %v4739, %v5167
        %v5170 = vunpack.c.l.s4 1983009808
        %v5171 = vunpack.c.0.s8 %v5170
        %v5172 = vlaneseq
        %v5173 = vshrl.u32 %v5172, 7
        %v5174 = vsub.s32 %v5171, %v5173
        %v5175 = vrot.slane %v5161, %v5174
        %v5176 = vcombine.high %v5168, 0
        %v5178 = vunpack.c.l.s4 1934713408
        %v5179 = vunpack.c.0.s8 %v5178
        %v5180 = vlaneseq
        %v5181 = vshrl.u32 %v5180, 7
        %v5182 = vsub.s32 %v5179, %v5181
        %v5183 = vrot.slane %v5168, %v5182
        %v5185 = vunpack.c.l.s4 1934713408
        %v5186 = vunpack.c.0.s8 %v5185
        %v5187 = vlaneseq
        %v5188 = vshrl.u32 %v5187, 7
        %v5189 = vsub.s32 %v5186, %v5188
        %v5190 = vrot.slane %v5176, %v5189
        %v5191 = vcombine.high %v5175, 0
        %v5193 = vunpack.c.l.s4 1934713408
        %v5194 = vunpack.c.0.s8 %v5193
        %v5195 = vlaneseq
        %v5196 = vshrl.u32 %v5195, 7
        %v5197 = vsub.s32 %v5194, %v5196
        %v5198 = vrot.slane %v5175, %v5197
        %v5200 = vunpack.c.l.s4 1934713408
        %v5201 = vunpack.c.0.s8 %v5200
        %v5202 = vlaneseq
        %v5203 = vshrl.u32 %v5202, 7
        %v5204 = vsub.s32 %v5201, %v5203
        %v5205 = vrot.slane %v5191, %v5204
        %v5206 = vcombine.high %v5183, 0
        %v5207 = vcombine.high %v5190, 0
        %v5208 = vcombine.high %v5198, 0
        %v5209 = vcombine.high %v5205, 0
        %v5210 = vcombine.high %v4743, %v1030
        %v5212 = vunpack.c.l.s4 1983009808
        %v5213 = vunpack.c.0.s8 %v5212
        %v5214 = vlaneseq
        %v5215 = vshrl.u32 %v5214, 7
        %v5216 = vsub.s32 %v5213, %v5215
        %v5217 = vrot.slane %v4743, %v5216
        %v5219 = vunpack.c.l.s4 1983009808
        %v5220 = vunpack.c.0.s8 %v5219
        %v5221 = vlaneseq
        %v5222 = vshrl.u32 %v5221, 7
        %v5223 = vsub.s32 %v5220, %v5222
        %v5224 = vrot.slane %v5210, %v5223
        %v5225 = vcombine.high %v5217, 0
        %v5227 = vunpack.c.l.s4 1934713408
        %v5228 = vunpack.c.0.s8 %v5227
        %v5229 = vlaneseq
        %v5230 = vshrl.u32 %v5229, 7
        %v5231 = vsub.s32 %v5228, %v5230
        %v5232 = vrot.slane %v5217, %v5231
        %v5234 = vunpack.c.l.s4 1934713408
        %v5235 = vunpack.c.0.s8 %v5234
        %v5236 = vlaneseq
        %v5237 = vshrl.u32 %v5236, 7
        %v5238 = vsub.s32 %v5235, %v5237
        %v5239 = vrot.slane %v5225, %v5238
        %v5240 = vcombine.high %v5224, 0
        %v5242 = vunpack.c.l.s4 1934713408
        %v5243 = vunpack.c.0.s8 %v5242
        %v5244 = vlaneseq
        %v5245 = vshrl.u32 %v5244, 7
        %v5246 = vsub.s32 %v5243, %v5245
        %v5247 = vrot.slane %v5224, %v5246
        %v5249 = vunpack.c.l.s4 1934713408
        %v5250 = vunpack.c.0.s8 %v5249
        %v5251 = vlaneseq
        %v5252 = vshrl.u32 %v5251, 7
        %v5253 = vsub.s32 %v5250, %v5252
        %v5254 = vrot.slane %v5240, %v5253
        %v5255 = vcombine.high %v5232, 0
        %v5256 = vcombine.high %v5239, 0
        %v5257 = vcombine.high %v5247, 0
        %v5258 = vcombine.high %v5254, 0
        %v5259 = vcombine.high %v4747, %v1027
        %v5261 = vunpack.c.l.s4 1983009808
        %v5262 = vunpack.c.0.s8 %v5261
        %v5263 = vlaneseq
        %v5264 = vshrl.u32 %v5263, 7
        %v5265 = vsub.s32 %v5262, %v5264
        %v5266 = vrot.slane %v4747, %v5265
        %v5268 = vunpack.c.l.s4 1983009808
        %v5269 = vunpack.c.0.s8 %v5268
        %v5270 = vlaneseq
        %v5271 = vshrl.u32 %v5270, 7
        %v5272 = vsub.s32 %v5269, %v5271
        %v5273 = vrot.slane %v5259, %v5272
        %v5274 = vcombine.high %v5266, 0
        %v5276 = vunpack.c.l.s4 1934713408
        %v5277 = vunpack.c.0.s8 %v5276
        %v5278 = vlaneseq
        %v5279 = vshrl.u32 %v5278, 7
        %v5280 = vsub.s32 %v5277, %v5279
        %v5281 = vrot.slane %v5266, %v5280
        %v5283 = vunpack.c.l.s4 1934713408
        %v5284 = vunpack.c.0.s8 %v5283
        %v5285 = vlaneseq
        %v5286 = vshrl.u32 %v5285, 7
        %v5287 = vsub.s32 %v5284, %v5286
        %v5288 = vrot.slane %v5274, %v5287
        %v5289 = vcombine.high %v5273, 0
        %v5291 = vunpack.c.l.s4 1934713408
        %v5292 = vunpack.c.0.s8 %v5291
        %v5293 = vlaneseq
        %v5294 = vshrl.u32 %v5293, 7
        %v5295 = vsub.s32 %v5292, %v5294
        %v5296 = vrot.slane %v5273, %v5295
        %v5298 = vunpack.c.l.s4 1934713408
        %v5299 = vunpack.c.0.s8 %v5298
        %v5300 = vlaneseq
        %v5301 = vshrl.u32 %v5300, 7
        %v5302 = vsub.s32 %v5299, %v5301
        %v5303 = vrot.slane %v5289, %v5302
        %v5304 = vcombine.high %v5281, 0
        %v5305 = vcombine.high %v5288, 0
        %v5306 = vcombine.high %v5296, 0
        %v5307 = vcombine.high %v5303, 0
        %v5308 = vcombine.high %v4751, %v1030
        %v5310 = vunpack.c.l.s4 1983009808
        %v5311 = vunpack.c.0.s8 %v5310
        %v5312 = vlaneseq
        %v5313 = vshrl.u32 %v5312, 7
        %v5314 = vsub.s32 %v5311, %v5313
        %v5315 = vrot.slane %v4751, %v5314
        %v5317 = vunpack.c.l.s4 1983009808
        %v5318 = vunpack.c.0.s8 %v5317
        %v5319 = vlaneseq
        %v5320 = vshrl.u32 %v5319, 7
        %v5321 = vsub.s32 %v5318, %v5320
        %v5322 = vrot.slane %v5308, %v5321
        %v5323 = vcombine.high %v5315, 0
        %v5325 = vunpack.c.l.s4 1934713408
        %v5326 = vunpack.c.0.s8 %v5325
        %v5327 = vlaneseq
        %v5328 = vshrl.u32 %v5327, 7
        %v5329 = vsub.s32 %v5326, %v5328
        %v5330 = vrot.slane %v5315, %v5329
        %v5332 = vunpack.c.l.s4 1934713408
        %v5333 = vunpack.c.0.s8 %v5332
        %v5334 = vlaneseq
        %v5335 = vshrl.u32 %v5334, 7
        %v5336 = vsub.s32 %v5333, %v5335
        %v5337 = vrot.slane %v5323, %v5336
        %v5338 = vcombine.high %v5322, 0
        %v5340 = vunpack.c.l.s4 1934713408
        %v5341 = vunpack.c.0.s8 %v5340
        %v5342 = vlaneseq
        %v5343 = vshrl.u32 %v5342, 7
        %v5344 = vsub.s32 %v5341, %v5343
        %v5345 = vrot.slane %v5322, %v5344
        %v5347 = vunpack.c.l.s4 1934713408
        %v5348 = vunpack.c.0.s8 %v5347
        %v5349 = vlaneseq
        %v5350 = vshrl.u32 %v5349, 7
        %v5351 = vsub.s32 %v5348, %v5350
        %v5352 = vrot.slane %v5338, %v5351
        %v5353 = vcombine.high %v5330, 0
        %v5354 = vcombine.high %v5337, 0
        %v5355 = vcombine.high %v5345, 0
        %v5356 = vcombine.high %v5352, 0
        %v5357 = vcombine.high %v4755, %v1027
        %v5359 = vunpack.c.l.s4 1983009808
        %v5360 = vunpack.c.0.s8 %v5359
        %v5361 = vlaneseq
        %v5362 = vshrl.u32 %v5361, 7
        %v5363 = vsub.s32 %v5360, %v5362
        %v5364 = vrot.slane %v4755, %v5363
        %v5366 = vunpack.c.l.s4 1983009808
        %v5367 = vunpack.c.0.s8 %v5366
        %v5368 = vlaneseq
        %v5369 = vshrl.u32 %v5368, 7
        %v5370 = vsub.s32 %v5367, %v5369
        %v5371 = vrot.slane %v5357, %v5370
        %v5372 = vcombine.high %v5364, 0
        %v5374 = vunpack.c.l.s4 1934713408
        %v5375 = vunpack.c.0.s8 %v5374
        %v5376 = vlaneseq
        %v5377 = vshrl.u32 %v5376, 7
        %v5378 = vsub.s32 %v5375, %v5377
        %v5379 = vrot.slane %v5364, %v5378
        %v5381 = vunpack.c.l.s4 1934713408
        %v5382 = vunpack.c.0.s8 %v5381
        %v5383 = vlaneseq
        %v5384 = vshrl.u32 %v5383, 7
        %v5385 = vsub.s32 %v5382, %v5384
        %v5386 = vrot.slane %v5372, %v5385
        %v5387 = vcombine.high %v5371, 0
        %v5389 = vunpack.c.l.s4 1934713408
        %v5390 = vunpack.c.0.s8 %v5389
        %v5391 = vlaneseq
        %v5392 = vshrl.u32 %v5391, 7
        %v5393 = vsub.s32 %v5390, %v5392
        %v5394 = vrot.slane %v5371, %v5393
        %v5396 = vunpack.c.l.s4 1934713408
        %v5397 = vunpack.c.0.s8 %v5396
        %v5398 = vlaneseq
        %v5399 = vshrl.u32 %v5398, 7
        %v5400 = vsub.s32 %v5397, %v5399
        %v5401 = vrot.slane %v5387, %v5400
        %v5402 = vcombine.high %v5379, 0
        %v5403 = vcombine.high %v5386, 0
        %v5404 = vcombine.high %v5394, 0
        %v5405 = vcombine.high %v5401, 0
        %v5406 = vcombine.high %v4759, %v1030
        %v5408 = vunpack.c.l.s4 1983009808
        %v5409 = vunpack.c.0.s8 %v5408
        %v5410 = vlaneseq
        %v5411 = vshrl.u32 %v5410, 7
        %v5412 = vsub.s32 %v5409, %v5411
        %v5413 = vrot.slane %v4759, %v5412
        %v5415 = vunpack.c.l.s4 1983009808
        %v5416 = vunpack.c.0.s8 %v5415
        %v5417 = vlaneseq
        %v5418 = vshrl.u32 %v5417, 7
        %v5419 = vsub.s32 %v5416, %v5418
        %v5420 = vrot.slane %v5406, %v5419
        %v5421 = vcombine.high %v5413, 0
        %v5423 = vunpack.c.l.s4 1934713408
        %v5424 = vunpack.c.0.s8 %v5423
        %v5425 = vlaneseq
        %v5426 = vshrl.u32 %v5425, 7
        %v5427 = vsub.s32 %v5424, %v5426
        %v5428 = vrot.slane %v5413, %v5427
        %v5430 = vunpack.c.l.s4 1934713408
        %v5431 = vunpack.c.0.s8 %v5430
        %v5432 = vlaneseq
        %v5433 = vshrl.u32 %v5432, 7
        %v5434 = vsub.s32 %v5431, %v5433
        %v5435 = vrot.slane %v5421, %v5434
        %v5436 = vcombine.high %v5420, 0
        %v5438 = vunpack.c.l.s4 1934713408
        %v5439 = vunpack.c.0.s8 %v5438
        %v5440 = vlaneseq
        %v5441 = vshrl.u32 %v5440, 7
        %v5442 = vsub.s32 %v5439, %v5441
        %v5443 = vrot.slane %v5420, %v5442
        %v5445 = vunpack.c.l.s4 1934713408
        %v5446 = vunpack.c.0.s8 %v5445
        %v5447 = vlaneseq
        %v5448 = vshrl.u32 %v5447, 7
        %v5449 = vsub.s32 %v5446, %v5448
        %v5450 = vrot.slane %v5436, %v5449
        %v5451 = vcombine.high %v5428, 0
        %v5452 = vcombine.high %v5435, 0
        %v5453 = vcombine.high %v5443, 0
        %v5454 = vcombine.high %v5450, 0
        %v5455 = vcombine.high %v4763, %v1027
        %v5457 = vunpack.c.l.s4 1983009808
        %v5458 = vunpack.c.0.s8 %v5457
        %v5459 = vlaneseq
        %v5460 = vshrl.u32 %v5459, 7
        %v5461 = vsub.s32 %v5458, %v5460
        %v5462 = vrot.slane %v4763, %v5461
        %v5464 = vunpack.c.l.s4 1983009808
        %v5465 = vunpack.c.0.s8 %v5464
        %v5466 = vlaneseq
        %v5467 = vshrl.u32 %v5466, 7
        %v5468 = vsub.s32 %v5465, %v5467
        %v5469 = vrot.slane %v5455, %v5468
        %v5470 = vcombine.high %v5462, 0
        %v5472 = vunpack.c.l.s4 1934713408
        %v5473 = vunpack.c.0.s8 %v5472
        %v5474 = vlaneseq
        %v5475 = vshrl.u32 %v5474, 7
        %v5476 = vsub.s32 %v5473, %v5475
        %v5477 = vrot.slane %v5462, %v5476
        %v5479 = vunpack.c.l.s4 1934713408
        %v5480 = vunpack.c.0.s8 %v5479
        %v5481 = vlaneseq
        %v5482 = vshrl.u32 %v5481, 7
        %v5483 = vsub.s32 %v5480, %v5482
        %v5484 = vrot.slane %v5470, %v5483
        %v5485 = vcombine.high %v5469, 0
        %v5487 = vunpack.c.l.s4 1934713408
        %v5488 = vunpack.c.0.s8 %v5487
        %v5489 = vlaneseq
        %v5490 = vshrl.u32 %v5489, 7
        %v5491 = vsub.s32 %v5488, %v5490
        %v5492 = vrot.slane %v5469, %v5491
        %v5494 = vunpack.c.l.s4 1934713408
        %v5495 = vunpack.c.0.s8 %v5494
        %v5496 = vlaneseq
        %v5497 = vshrl.u32 %v5496, 7
        %v5498 = vsub.s32 %v5495, %v5497
        %v5499 = vrot.slane %v5485, %v5498
        %v5500 = vcombine.high %v5477, 0
        %v5501 = vcombine.high %v5484, 0
        %v5502 = vcombine.high %v5492, 0
        %v5503 = vcombine.high %v5499, 0
        %v5504 = vcombine.high %v4767, %v1030
        %v5506 = vunpack.c.l.s4 1983009808
        %v5507 = vunpack.c.0.s8 %v5506
        %v5508 = vlaneseq
        %v5509 = vshrl.u32 %v5508, 7
        %v5510 = vsub.s32 %v5507, %v5509
        %v5511 = vrot.slane %v4767, %v5510
        %v5513 = vunpack.c.l.s4 1983009808
        %v5514 = vunpack.c.0.s8 %v5513
        %v5515 = vlaneseq
        %v5516 = vshrl.u32 %v5515, 7
        %v5517 = vsub.s32 %v5514, %v5516
        %v5518 = vrot.slane %v5504, %v5517
        %v5519 = vcombine.high %v5511, 0
        %v5521 = vunpack.c.l.s4 1934713408
        %v5522 = vunpack.c.0.s8 %v5521
        %v5523 = vlaneseq
        %v5524 = vshrl.u32 %v5523, 7
        %v5525 = vsub.s32 %v5522, %v5524
        %v5526 = vrot.slane %v5511, %v5525
        %v5528 = vunpack.c.l.s4 1934713408
        %v5529 = vunpack.c.0.s8 %v5528
        %v5530 = vlaneseq
        %v5531 = vshrl.u32 %v5530, 7
        %v5532 = vsub.s32 %v5529, %v5531
        %v5533 = vrot.slane %v5519, %v5532
        %v5534 = vcombine.high %v5518, 0
        %v5536 = vunpack.c.l.s4 1934713408
        %v5537 = vunpack.c.0.s8 %v5536
        %v5538 = vlaneseq
        %v5539 = vshrl.u32 %v5538, 7
        %v5540 = vsub.s32 %v5537, %v5539
        %v5541 = vrot.slane %v5518, %v5540
        %v5543 = vunpack.c.l.s4 1934713408
        %v5544 = vunpack.c.0.s8 %v5543
        %v5545 = vlaneseq
        %v5546 = vshrl.u32 %v5545, 7
        %v5547 = vsub.s32 %v5544, %v5546
        %v5548 = vrot.slane %v5534, %v5547
        %v5549 = vcombine.high %v5526, 0
        %v5550 = vcombine.high %v5533, 0
        %v5551 = vcombine.high %v5541, 0
        %v5552 = vcombine.high %v5548, 0
        %v5553 = vcombine.low %v4791, %v4798
        %v5555 = vunpack.c.l.s4 1983009808
        %v5556 = vunpack.c.0.s8 %v5555
        %v5557 = vlaneseq
        %v5558 = vshrl.u32 %v5557, 7
        %v5559 = vsub.s32 %v5556, %v5558
        %v5560 = vrot.slane %v5553, %v5559
        %v5561 = vcombine.low %v4814, %v4815
        %v5563 = vunpack.c.l.s4 1983009808
        %v5564 = vunpack.c.0.s8 %v5563
        %v5565 = vlaneseq
        %v5566 = vshrl.u32 %v5565, 7
        %v5567 = vsub.s32 %v5564, %v5566
        %v5568 = vrot.slane %v5561, %v5567
        %v5569 = vcombine.low %v4806, %v4813
        %v5571 = vunpack.c.l.s4 1983009808
        %v5572 = vunpack.c.0.s8 %v5571
        %v5573 = vlaneseq
        %v5574 = vshrl.u32 %v5573, 7
        %v5575 = vsub.s32 %v5572, %v5574
        %v5576 = vrot.slane %v5569, %v5575
        %v5577 = vcombine.low %v4816, %v4817
        %v5579 = vunpack.c.l.s4 1983009808
        %v5580 = vunpack.c.0.s8 %v5579
        %v5581 = vlaneseq
        %v5582 = vshrl.u32 %v5581, 7
        %v5583 = vsub.s32 %v5580, %v5582
        %v5584 = vrot.slane %v5577, %v5583
        %v5585 = vcombine.low %v5560, %v5568
        %v5587 = vunpack.c.l.s4 1934713408
        %v5588 = vunpack.c.0.s8 %v5587
        %v5589 = vlaneseq
        %v5590 = vshrl.u32 %v5589, 7
        %v5591 = vsub.s32 %v5588, %v5590
        %v5592 = vrot.slane %v5585, %v5591
        %v5593 = vcombine.low %v5576, %v5584
        %v5595 = vunpack.c.l.s4 1934713408
        %v5596 = vunpack.c.0.s8 %v5595
        %v5597 = vlaneseq
        %v5598 = vshrl.u32 %v5597, 7
        %v5599 = vsub.s32 %v5596, %v5598
        %v5600 = vrot.slane %v5593, %v5599
        %v5601 = vcombine.low %v5592, %v5600
        %v5602 = vcombine.low %v4840, %v4847
        %v5604 = vunpack.c.l.s4 1983009808
        %v5605 = vunpack.c.0.s8 %v5604
        %v5606 = vlaneseq
        %v5607 = vshrl.u32 %v5606, 7
        %v5608 = vsub.s32 %v5605, %v5607
        %v5609 = vrot.slane %v5602, %v5608
        %v5610 = vcombine.low %v4863, %v4864
        %v5612 = vunpack.c.l.s4 1983009808
        %v5613 = vunpack.c.0.s8 %v5612
        %v5614 = vlaneseq
        %v5615 = vshrl.u32 %v5614, 7
        %v5616 = vsub.s32 %v5613, %v5615
        %v5617 = vrot.slane %v5610, %v5616
        %v5618 = vcombine.low %v4855, %v4862
        %v5620 = vunpack.c.l.s4 1983009808
        %v5621 = vunpack.c.0.s8 %v5620
        %v5622 = vlaneseq
        %v5623 = vshrl.u32 %v5622, 7
        %v5624 = vsub.s32 %v5621, %v5623
        %v5625 = vrot.slane %v5618, %v5624
        %v5626 = vcombine.low %v4865, %v4866
        %v5628 = vunpack.c.l.s4 1983009808
        %v5629 = vunpack.c.0.s8 %v5628
        %v5630 = vlaneseq
        %v5631 = vshrl.u32 %v5630, 7
        %v5632 = vsub.s32 %v5629, %v5631
        %v5633 = vrot.slane %v5626, %v5632
        %v5634 = vcombine.low %v5609, %v5617
        %v5636 = vunpack.c.l.s4 1934713408
        %v5637 = vunpack.c.0.s8 %v5636
        %v5638 = vlaneseq
        %v5639 = vshrl.u32 %v5638, 7
        %v5640 = vsub.s32 %v5637, %v5639
        %v5641 = vrot.slane %v5634, %v5640
        %v5642 = vcombine.low %v5625, %v5633
        %v5644 = vunpack.c.l.s4 1934713408
        %v5645 = vunpack.c.0.s8 %v5644
        %v5646 = vlaneseq
        %v5647 = vshrl.u32 %v5646, 7
        %v5648 = vsub.s32 %v5645, %v5647
        %v5649 = vrot.slane %v5642, %v5648
        %v5650 = vcombine.low %v5641, %v5649
        %v5651 = vcombine.low %v4889, %v4896
        %v5653 = vunpack.c.l.s4 1983009808
        %v5654 = vunpack.c.0.s8 %v5653
        %v5655 = vlaneseq
        %v5656 = vshrl.u32 %v5655, 7
        %v5657 = vsub.s32 %v5654, %v5656
        %v5658 = vrot.slane %v5651, %v5657
        %v5659 = vcombine.low %v4912, %v4913
        %v5661 = vunpack.c.l.s4 1983009808
        %v5662 = vunpack.c.0.s8 %v5661
        %v5663 = vlaneseq
        %v5664 = vshrl.u32 %v5663, 7
        %v5665 = vsub.s32 %v5662, %v5664
        %v5666 = vrot.slane %v5659, %v5665
        %v5667 = vcombine.low %v4904, %v4911
        %v5669 = vunpack.c.l.s4 1983009808
        %v5670 = vunpack.c.0.s8 %v5669
        %v5671 = vlaneseq
        %v5672 = vshrl.u32 %v5671, 7
        %v5673 = vsub.s32 %v5670, %v5672
        %v5674 = vrot.slane %v5667, %v5673
        %v5675 = vcombine.low %v4914, %v4915
        %v5677 = vunpack.c.l.s4 1983009808
        %v5678 = vunpack.c.0.s8 %v5677
        %v5679 = vlaneseq
        %v5680 = vshrl.u32 %v5679, 7
        %v5681 = vsub.s32 %v5678, %v5680
        %v5682 = vrot.slane %v5675, %v5681
        %v5683 = vcombine.low %v5658, %v5666
        %v5685 = vunpack.c.l.s4 1934713408
        %v5686 = vunpack.c.0.s8 %v5685
        %v5687 = vlaneseq
        %v5688 = vshrl.u32 %v5687, 7
        %v5689 = vsub.s32 %v5686, %v5688
        %v5690 = vrot.slane %v5683, %v5689
        %v5691 = vcombine.low %v5674, %v5682
        %v5693 = vunpack.c.l.s4 1934713408
        %v5694 = vunpack.c.0.s8 %v5693
        %v5695 = vlaneseq
        %v5696 = vshrl.u32 %v5695, 7
        %v5697 = vsub.s32 %v5694, %v5696
        %v5698 = vrot.slane %v5691, %v5697
        %v5699 = vcombine.low %v5690, %v5698
        %v5700 = vcombine.low %v4938, %v4945
        %v5702 = vunpack.c.l.s4 1983009808
        %v5703 = vunpack.c.0.s8 %v5702
        %v5704 = vlaneseq
        %v5705 = vshrl.u32 %v5704, 7
        %v5706 = vsub.s32 %v5703, %v5705
        %v5707 = vrot.slane %v5700, %v5706
        %v5708 = vcombine.low %v4961, %v4962
        %v5710 = vunpack.c.l.s4 1983009808
        %v5711 = vunpack.c.0.s8 %v5710
        %v5712 = vlaneseq
        %v5713 = vshrl.u32 %v5712, 7
        %v5714 = vsub.s32 %v5711, %v5713
        %v5715 = vrot.slane %v5708, %v5714
        %v5716 = vcombine.low %v4953, %v4960
        %v5718 = vunpack.c.l.s4 1983009808
        %v5719 = vunpack.c.0.s8 %v5718
        %v5720 = vlaneseq
        %v5721 = vshrl.u32 %v5720, 7
        %v5722 = vsub.s32 %v5719, %v5721
        %v5723 = vrot.slane %v5716, %v5722
        %v5724 = vcombine.low %v4963, %v4964
        %v5726 = vunpack.c.l.s4 1983009808
        %v5727 = vunpack.c.0.s8 %v5726
        %v5728 = vlaneseq
        %v5729 = vshrl.u32 %v5728, 7
        %v5730 = vsub.s32 %v5727, %v5729
        %v5731 = vrot.slane %v5724, %v5730
        %v5732 = vcombine.low %v5707, %v5715
        %v5734 = vunpack.c.l.s4 1934713408
        %v5735 = vunpack.c.0.s8 %v5734
        %v5736 = vlaneseq
        %v5737 = vshrl.u32 %v5736, 7
        %v5738 = vsub.s32 %v5735, %v5737
        %v5739 = vrot.slane %v5732, %v5738
        %v5740 = vcombine.low %v5723, %v5731
        %v5742 = vunpack.c.l.s4 1934713408
        %v5743 = vunpack.c.0.s8 %v5742
        %v5744 = vlaneseq
        %v5745 = vshrl.u32 %v5744, 7
        %v5746 = vsub.s32 %v5743, %v5745
        %v5747 = vrot.slane %v5740, %v5746
        %v5748 = vcombine.low %v5739, %v5747
        %v5749 = vcombine.low %v4987, %v4994
        %v5751 = vunpack.c.l.s4 1983009808
        %v5752 = vunpack.c.0.s8 %v5751
        %v5753 = vlaneseq
        %v5754 = vshrl.u32 %v5753, 7
        %v5755 = vsub.s32 %v5752, %v5754
        %v5756 = vrot.slane %v5749, %v5755
        %v5757 = vcombine.low %v5010, %v5011
        %v5759 = vunpack.c.l.s4 1983009808
        %v5760 = vunpack.c.0.s8 %v5759
        %v5761 = vlaneseq
        %v5762 = vshrl.u32 %v5761, 7
        %v5763 = vsub.s32 %v5760, %v5762
        %v5764 = vrot.slane %v5757, %v5763
        %v5765 = vcombine.low %v5002, %v5009
        %v5767 = vunpack.c.l.s4 1983009808
        %v5768 = vunpack.c.0.s8 %v5767
        %v5769 = vlaneseq
        %v5770 = vshrl.u32 %v5769, 7
        %v5771 = vsub.s32 %v5768, %v5770
        %v5772 = vrot.slane %v5765, %v5771
        %v5773 = vcombine.low %v5012, %v5013
        %v5775 = vunpack.c.l.s4 1983009808
        %v5776 = vunpack.c.0.s8 %v5775
        %v5777 = vlaneseq
        %v5778 = vshrl.u32 %v5777, 7
        %v5779 = vsub.s32 %v5776, %v5778
        %v5780 = vrot.slane %v5773, %v5779
        %v5781 = vcombine.low %v5756, %v5764
        %v5783 = vunpack.c.l.s4 1934713408
        %v5784 = vunpack.c.0.s8 %v5783
        %v5785 = vlaneseq
        %v5786 = vshrl.u32 %v5785, 7
        %v5787 = vsub.s32 %v5784, %v5786
        %v5788 = vrot.slane %v5781, %v5787
        %v5789 = vcombine.low %v5772, %v5780
        %v5791 = vunpack.c.l.s4 1934713408
        %v5792 = vunpack.c.0.s8 %v5791
        %v5793 = vlaneseq
        %v5794 = vshrl.u32 %v5793, 7
        %v5795 = vsub.s32 %v5792, %v5794
        %v5796 = vrot.slane %v5789, %v5795
        %v5797 = vcombine.low %v5788, %v5796
        %v5798 = vcombine.low %v5036, %v5043
        %v5800 = vunpack.c.l.s4 1983009808
        %v5801 = vunpack.c.0.s8 %v5800
        %v5802 = vlaneseq
        %v5803 = vshrl.u32 %v5802, 7
        %v5804 = vsub.s32 %v5801, %v5803
        %v5805 = vrot.slane %v5798, %v5804
        %v5806 = vcombine.low %v5059, %v5060
        %v5808 = vunpack.c.l.s4 1983009808
        %v5809 = vunpack.c.0.s8 %v5808
        %v5810 = vlaneseq
        %v5811 = vshrl.u32 %v5810, 7
        %v5812 = vsub.s32 %v5809, %v5811
        %v5813 = vrot.slane %v5806, %v5812
        %v5814 = vcombine.low %v5051, %v5058
        %v5816 = vunpack.c.l.s4 1983009808
        %v5817 = vunpack.c.0.s8 %v5816
        %v5818 = vlaneseq
        %v5819 = vshrl.u32 %v5818, 7
        %v5820 = vsub.s32 %v5817, %v5819
        %v5821 = vrot.slane %v5814, %v5820
        %v5822 = vcombine.low %v5061, %v5062
        %v5824 = vunpack.c.l.s4 1983009808
        %v5825 = vunpack.c.0.s8 %v5824
        %v5826 = vlaneseq
        %v5827 = vshrl.u32 %v5826, 7
        %v5828 = vsub.s32 %v5825, %v5827
        %v5829 = vrot.slane %v5822, %v5828
        %v5830 = vcombine.low %v5805, %v5813
        %v5832 = vunpack.c.l.s4 1934713408
        %v5833 = vunpack.c.0.s8 %v5832
        %v5834 = vlaneseq
        %v5835 = vshrl.u32 %v5834, 7
        %v5836 = vsub.s32 %v5833, %v5835
        %v5837 = vrot.slane %v5830, %v5836
        %v5838 = vcombine.low %v5821, %v5829
        %v5840 = vunpack.c.l.s4 1934713408
        %v5841 = vunpack.c.0.s8 %v5840
        %v5842 = vlaneseq
        %v5843 = vshrl.u32 %v5842, 7
        %v5844 = vsub.s32 %v5841, %v5843
        %v5845 = vrot.slane %v5838, %v5844
        %v5846 = vcombine.low %v5837, %v5845
        %v5847 = vcombine.low %v5085, %v5092
        %v5849 = vunpack.c.l.s4 1983009808
        %v5850 = vunpack.c.0.s8 %v5849
        %v5851 = vlaneseq
        %v5852 = vshrl.u32 %v5851, 7
        %v5853 = vsub.s32 %v5850, %v5852
        %v5854 = vrot.slane %v5847, %v5853
        %v5855 = vcombine.low %v5108, %v5109
        %v5857 = vunpack.c.l.s4 1983009808
        %v5858 = vunpack.c.0.s8 %v5857
        %v5859 = vlaneseq
        %v5860 = vshrl.u32 %v5859, 7
        %v5861 = vsub.s32 %v5858, %v5860
        %v5862 = vrot.slane %v5855, %v5861
        %v5863 = vcombine.low %v5100, %v5107
        %v5865 = vunpack.c.l.s4 1983009808
        %v5866 = vunpack.c.0.s8 %v5865
        %v5867 = vlaneseq
        %v5868 = vshrl.u32 %v5867, 7
        %v5869 = vsub.s32 %v5866, %v5868
        %v5870 = vrot.slane %v5863, %v5869
        %v5871 = vcombine.low %v5110, %v5111
        %v5873 = vunpack.c.l.s4 1983009808
        %v5874 = vunpack.c.0.s8 %v5873
        %v5875 = vlaneseq
        %v5876 = vshrl.u32 %v5875, 7
        %v5877 = vsub.s32 %v5874, %v5876
        %v5878 = vrot.slane %v5871, %v5877
        %v5879 = vcombine.low %v5854, %v5862
        %v5881 = vunpack.c.l.s4 1934713408
        %v5882 = vunpack.c.0.s8 %v5881
        %v5883 = vlaneseq
        %v5884 = vshrl.u32 %v5883, 7
        %v5885 = vsub.s32 %v5882, %v5884
        %v5886 = vrot.slane %v5879, %v5885
        %v5887 = vcombine.low %v5870, %v5878
        %v5889 = vunpack.c.l.s4 1934713408
        %v5890 = vunpack.c.0.s8 %v5889
        %v5891 = vlaneseq
        %v5892 = vshrl.u32 %v5891, 7
        %v5893 = vsub.s32 %v5890, %v5892
        %v5894 = vrot.slane %v5887, %v5893
        %v5895 = vcombine.low %v5886, %v5894
        %v5896 = vcombine.low %v5134, %v5141
        %v5898 = vunpack.c.l.s4 1983009808
        %v5899 = vunpack.c.0.s8 %v5898
        %v5900 = vlaneseq
        %v5901 = vshrl.u32 %v5900, 7
        %v5902 = vsub.s32 %v5899, %v5901
        %v5903 = vrot.slane %v5896, %v5902
        %v5904 = vcombine.low %v5157, %v5158
        %v5906 = vunpack.c.l.s4 1983009808
        %v5907 = vunpack.c.0.s8 %v5906
        %v5908 = vlaneseq
        %v5909 = vshrl.u32 %v5908, 7
        %v5910 = vsub.s32 %v5907, %v5909
        %v5911 = vrot.slane %v5904, %v5910
        %v5912 = vcombine.low %v5149, %v5156
        %v5914 = vunpack.c.l.s4 1983009808
        %v5915 = vunpack.c.0.s8 %v5914
        %v5916 = vlaneseq
        %v5917 = vshrl.u32 %v5916, 7
        %v5918 = vsub.s32 %v5915, %v5917
        %v5919 = vrot.slane %v5912, %v5918
        %v5920 = vcombine.low %v5159, %v5160
        %v5922 = vunpack.c.l.s4 1983009808
        %v5923 = vunpack.c.0.s8 %v5922
        %v5924 = vlaneseq
        %v5925 = vshrl.u32 %v5924, 7
        %v5926 = vsub.s32 %v5923, %v5925
        %v5927 = vrot.slane %v5920, %v5926
        %v5928 = vcombine.low %v5903, %v5911
        %v5930 = vunpack.c.l.s4 1934713408
        %v5931 = vunpack.c.0.s8 %v5930
        %v5932 = vlaneseq
        %v5933 = vshrl.u32 %v5932, 7
        %v5934 = vsub.s32 %v5931, %v5933
        %v5935 = vrot.slane %v5928, %v5934
        %v5936 = vcombine.low %v5919, %v5927
        %v5938 = vunpack.c.l.s4 1934713408
        %v5939 = vunpack.c.0.s8 %v5938
        %v5940 = vlaneseq
        %v5941 = vshrl.u32 %v5940, 7
        %v5942 = vsub.s32 %v5939, %v5941
        %v5943 = vrot.slane %v5936, %v5942
        %v5944 = vcombine.low %v5935, %v5943
        %v5945 = vcombine.low %v5183, %v5190
        %v5947 = vunpack.c.l.s4 1983009808
        %v5948 = vunpack.c.0.s8 %v5947
        %v5949 = vlaneseq
        %v5950 = vshrl.u32 %v5949, 7
        %v5951 = vsub.s32 %v5948, %v5950
        %v5952 = vrot.slane %v5945, %v5951
        %v5953 = vcombine.low %v5206, %v5207
        %v5955 = vunpack.c.l.s4 1983009808
        %v5956 = vunpack.c.0.s8 %v5955
        %v5957 = vlaneseq
        %v5958 = vshrl.u32 %v5957, 7
        %v5959 = vsub.s32 %v5956, %v5958
        %v5960 = vrot.slane %v5953, %v5959
        %v5961 = vcombine.low %v5198, %v5205
        %v5963 = vunpack.c.l.s4 1983009808
        %v5964 = vunpack.c.0.s8 %v5963
        %v5965 = vlaneseq
        %v5966 = vshrl.u32 %v5965, 7
        %v5967 = vsub.s32 %v5964, %v5966
        %v5968 = vrot.slane %v5961, %v5967
        %v5969 = vcombine.low %v5208, %v5209
        %v5971 = vunpack.c.l.s4 1983009808
        %v5972 = vunpack.c.0.s8 %v5971
        %v5973 = vlaneseq
        %v5974 = vshrl.u32 %v5973, 7
        %v5975 = vsub.s32 %v5972, %v5974
        %v5976 = vrot.slane %v5969, %v5975
        %v5977 = vcombine.low %v5952, %v5960
        %v5979 = vunpack.c.l.s4 1934713408
        %v5980 = vunpack.c.0.s8 %v5979
        %v5981 = vlaneseq
        %v5982 = vshrl.u32 %v5981, 7
        %v5983 = vsub.s32 %v5980, %v5982
        %v5984 = vrot.slane %v5977, %v5983
        %v5985 = vcombine.low %v5968, %v5976
        %v5987 = vunpack.c.l.s4 1934713408
        %v5988 = vunpack.c.0.s8 %v5987
        %v5989 = vlaneseq
        %v5990 = vshrl.u32 %v5989, 7
        %v5991 = vsub.s32 %v5988, %v5990
        %v5992 = vrot.slane %v5985, %v5991
        %v5993 = vcombine.low %v5984, %v5992
        %v5994 = vcombine.low %v5232, %v5239
        %v5996 = vunpack.c.l.s4 1983009808
        %v5997 = vunpack.c.0.s8 %v5996
        %v5998 = vlaneseq
        %v5999 = vshrl.u32 %v5998, 7
        %v6000 = vsub.s32 %v5997, %v5999
        %v6001 = vrot.slane %v5994, %v6000
        %v6002 = vcombine.low %v5255, %v5256
        %v6004 = vunpack.c.l.s4 1983009808
        %v6005 = vunpack.c.0.s8 %v6004
        %v6006 = vlaneseq
        %v6007 = vshrl.u32 %v6006, 7
        %v6008 = vsub.s32 %v6005, %v6007
        %v6009 = vrot.slane %v6002, %v6008
        %v6010 = vcombine.low %v5247, %v5254
        %v6012 = vunpack.c.l.s4 1983009808
        %v6013 = vunpack.c.0.s8 %v6012
        %v6014 = vlaneseq
        %v6015 = vshrl.u32 %v6014, 7
        %v6016 = vsub.s32 %v6013, %v6015
        %v6017 = vrot.slane %v6010, %v6016
        %v6018 = vcombine.low %v5257, %v5258
        %v6020 = vunpack.c.l.s4 1983009808
        %v6021 = vunpack.c.0.s8 %v6020
        %v6022 = vlaneseq
        %v6023 = vshrl.u32 %v6022, 7
        %v6024 = vsub.s32 %v6021, %v6023
        %v6025 = vrot.slane %v6018, %v6024
        %v6026 = vcombine.low %v6001, %v6009
        %v6028 = vunpack.c.l.s4 1934713408
        %v6029 = vunpack.c.0.s8 %v6028
        %v6030 = vlaneseq
        %v6031 = vshrl.u32 %v6030, 7
        %v6032 = vsub.s32 %v6029, %v6031
        %v6033 = vrot.slane %v6026, %v6032
        %v6034 = vcombine.low %v6017, %v6025
        %v6036 = vunpack.c.l.s4 1934713408
        %v6037 = vunpack.c.0.s8 %v6036
        %v6038 = vlaneseq
        %v6039 = vshrl.u32 %v6038, 7
        %v6040 = vsub.s32 %v6037, %v6039
        %v6041 = vrot.slane %v6034, %v6040
        %v6042 = vcombine.low %v6033, %v6041
        %v6043 = vcombine.low %v5281, %v5288
        %v6045 = vunpack.c.l.s4 1983009808
        %v6046 = vunpack.c.0.s8 %v6045
        %v6047 = vlaneseq
        %v6048 = vshrl.u32 %v6047, 7
        %v6049 = vsub.s32 %v6046, %v6048
        %v6050 = vrot.slane %v6043, %v6049
        %v6051 = vcombine.low %v5304, %v5305
        %v6053 = vunpack.c.l.s4 1983009808
        %v6054 = vunpack.c.0.s8 %v6053
        %v6055 = vlaneseq
        %v6056 = vshrl.u32 %v6055, 7
        %v6057 = vsub.s32 %v6054, %v6056
        %v6058 = vrot.slane %v6051, %v6057
        %v6059 = vcombine.low %v5296, %v5303
        %v6061 = vunpack.c.l.s4 1983009808
        %v6062 = vunpack.c.0.s8 %v6061
        %v6063 = vlaneseq
        %v6064 = vshrl.u32 %v6063, 7
        %v6065 = vsub.s32 %v6062, %v6064
        %v6066 = vrot.slane %v6059, %v6065
        %v6067 = vcombine.low %v5306, %v5307
        %v6069 = vunpack.c.l.s4 1983009808
        %v6070 = vunpack.c.0.s8 %v6069
        %v6071 = vlaneseq
        %v6072 = vshrl.u32 %v6071, 7
        %v6073 = vsub.s32 %v6070, %v6072
        %v6074 = vrot.slane %v6067, %v6073
        %v6075 = vcombine.low %v6050, %v6058
        %v6077 = vunpack.c.l.s4 1934713408
        %v6078 = vunpack.c.0.s8 %v6077
        %v6079 = vlaneseq
        %v6080 = vshrl.u32 %v6079, 7
        %v6081 = vsub.s32 %v6078, %v6080
        %v6082 = vrot.slane %v6075, %v6081
        %v6083 = vcombine.low %v6066, %v6074
        %v6085 = vunpack.c.l.s4 1934713408
        %v6086 = vunpack.c.0.s8 %v6085
        %v6087 = vlaneseq
        %v6088 = vshrl.u32 %v6087, 7
        %v6089 = vsub.s32 %v6086, %v6088
        %v6090 = vrot.slane %v6083, %v6089
        %v6091 = vcombine.low %v6082, %v6090
        %v6092 = vcombine.low %v5330, %v5337
        %v6094 = vunpack.c.l.s4 1983009808
        %v6095 = vunpack.c.0.s8 %v6094
        %v6096 = vlaneseq
        %v6097 = vshrl.u32 %v6096, 7
        %v6098 = vsub.s32 %v6095, %v6097
        %v6099 = vrot.slane %v6092, %v6098
        %v6100 = vcombine.low %v5353, %v5354
        %v6102 = vunpack.c.l.s4 1983009808
        %v6103 = vunpack.c.0.s8 %v6102
        %v6104 = vlaneseq
        %v6105 = vshrl.u32 %v6104, 7
        %v6106 = vsub.s32 %v6103, %v6105
        %v6107 = vrot.slane %v6100, %v6106
        %v6108 = vcombine.low %v5345, %v5352
        %v6110 = vunpack.c.l.s4 1983009808
        %v6111 = vunpack.c.0.s8 %v6110
        %v6112 = vlaneseq
        %v6113 = vshrl.u32 %v6112, 7
        %v6114 = vsub.s32 %v6111, %v6113
        %v6115 = vrot.slane %v6108, %v6114
        %v6116 = vcombine.low %v5355, %v5356
        %v6118 = vunpack.c.l.s4 1983009808
        %v6119 = vunpack.c.0.s8 %v6118
        %v6120 = vlaneseq
        %v6121 = vshrl.u32 %v6120, 7
        %v6122 = vsub.s32 %v6119, %v6121
        %v6123 = vrot.slane %v6116, %v6122
        %v6124 = vcombine.low %v6099, %v6107
        %v6126 = vunpack.c.l.s4 1934713408
        %v6127 = vunpack.c.0.s8 %v6126
        %v6128 = vlaneseq
        %v6129 = vshrl.u32 %v6128, 7
        %v6130 = vsub.s32 %v6127, %v6129
        %v6131 = vrot.slane %v6124, %v6130
        %v6132 = vcombine.low %v6115, %v6123
        %v6134 = vunpack.c.l.s4 1934713408
        %v6135 = vunpack.c.0.s8 %v6134
        %v6136 = vlaneseq
        %v6137 = vshrl.u32 %v6136, 7
        %v6138 = vsub.s32 %v6135, %v6137
        %v6139 = vrot.slane %v6132, %v6138
        %v6140 = vcombine.low %v6131, %v6139
        %v6141 = vcombine.low %v5379, %v5386
        %v6143 = vunpack.c.l.s4 1983009808
        %v6144 = vunpack.c.0.s8 %v6143
        %v6145 = vlaneseq
        %v6146 = vshrl.u32 %v6145, 7
        %v6147 = vsub.s32 %v6144, %v6146
        %v6148 = vrot.slane %v6141, %v6147
        %v6149 = vcombine.low %v5402, %v5403
        %v6151 = vunpack.c.l.s4 1983009808
        %v6152 = vunpack.c.0.s8 %v6151
        %v6153 = vlaneseq
        %v6154 = vshrl.u32 %v6153, 7
        %v6155 = vsub.s32 %v6152, %v6154
        %v6156 = vrot.slane %v6149, %v6155
        %v6157 = vcombine.low %v5394, %v5401
        %v6159 = vunpack.c.l.s4 1983009808
        %v6160 = vunpack.c.0.s8 %v6159
        %v6161 = vlaneseq
        %v6162 = vshrl.u32 %v6161, 7
        %v6163 = vsub.s32 %v6160, %v6162
        %v6164 = vrot.slane %v6157, %v6163
        %v6165 = vcombine.low %v5404, %v5405
        %v6167 = vunpack.c.l.s4 1983009808
        %v6168 = vunpack.c.0.s8 %v6167
        %v6169 = vlaneseq
        %v6170 = vshrl.u32 %v6169, 7
        %v6171 = vsub.s32 %v6168, %v6170
        %v6172 = vrot.slane %v6165, %v6171
        %v6173 = vcombine.low %v6148, %v6156
        %v6175 = vunpack.c.l.s4 1934713408
        %v6176 = vunpack.c.0.s8 %v6175
        %v6177 = vlaneseq
        %v6178 = vshrl.u32 %v6177, 7
        %v6179 = vsub.s32 %v6176, %v6178
        %v6180 = vrot.slane %v6173, %v6179
        %v6181 = vcombine.low %v6164, %v6172
        %v6183 = vunpack.c.l.s4 1934713408
        %v6184 = vunpack.c.0.s8 %v6183
        %v6185 = vlaneseq
        %v6186 = vshrl.u32 %v6185, 7
        %v6187 = vsub.s32 %v6184, %v6186
        %v6188 = vrot.slane %v6181, %v6187
        %v6189 = vcombine.low %v6180, %v6188
        %v6190 = vcombine.low %v5428, %v5435
        %v6192 = vunpack.c.l.s4 1983009808
        %v6193 = vunpack.c.0.s8 %v6192
        %v6194 = vlaneseq
        %v6195 = vshrl.u32 %v6194, 7
        %v6196 = vsub.s32 %v6193, %v6195
        %v6197 = vrot.slane %v6190, %v6196
        %v6198 = vcombine.low %v5451, %v5452
        %v6200 = vunpack.c.l.s4 1983009808
        %v6201 = vunpack.c.0.s8 %v6200
        %v6202 = vlaneseq
        %v6203 = vshrl.u32 %v6202, 7
        %v6204 = vsub.s32 %v6201, %v6203
        %v6205 = vrot.slane %v6198, %v6204
        %v6206 = vcombine.low %v5443, %v5450
        %v6208 = vunpack.c.l.s4 1983009808
        %v6209 = vunpack.c.0.s8 %v6208
        %v6210 = vlaneseq
        %v6211 = vshrl.u32 %v6210, 7
        %v6212 = vsub.s32 %v6209, %v6211
        %v6213 = vrot.slane %v6206, %v6212
        %v6214 = vcombine.low %v5453, %v5454
        %v6216 = vunpack.c.l.s4 1983009808
        %v6217 = vunpack.c.0.s8 %v6216
        %v6218 = vlaneseq
        %v6219 = vshrl.u32 %v6218, 7
        %v6220 = vsub.s32 %v6217, %v6219
        %v6221 = vrot.slane %v6214, %v6220
        %v6222 = vcombine.low %v6197, %v6205
        %v6224 = vunpack.c.l.s4 1934713408
        %v6225 = vunpack.c.0.s8 %v6224
        %v6226 = vlaneseq
        %v6227 = vshrl.u32 %v6226, 7
        %v6228 = vsub.s32 %v6225, %v6227
        %v6229 = vrot.slane %v6222, %v6228
        %v6230 = vcombine.low %v6213, %v6221
        %v6232 = vunpack.c.l.s4 1934713408
        %v6233 = vunpack.c.0.s8 %v6232
        %v6234 = vlaneseq
        %v6235 = vshrl.u32 %v6234, 7
        %v6236 = vsub.s32 %v6233, %v6235
        %v6237 = vrot.slane %v6230, %v6236
        %v6238 = vcombine.low %v6229, %v6237
        %v6239 = vcombine.low %v5477, %v5484
        %v6241 = vunpack.c.l.s4 1983009808
        %v6242 = vunpack.c.0.s8 %v6241
        %v6243 = vlaneseq
        %v6244 = vshrl.u32 %v6243, 7
        %v6245 = vsub.s32 %v6242, %v6244
        %v6246 = vrot.slane %v6239, %v6245
        %v6247 = vcombine.low %v5500, %v5501
        %v6249 = vunpack.c.l.s4 1983009808
        %v6250 = vunpack.c.0.s8 %v6249
        %v6251 = vlaneseq
        %v6252 = vshrl.u32 %v6251, 7
        %v6253 = vsub.s32 %v6250, %v6252
        %v6254 = vrot.slane %v6247, %v6253
        %v6255 = vcombine.low %v5492, %v5499
        %v6257 = vunpack.c.l.s4 1983009808
        %v6258 = vunpack.c.0.s8 %v6257
        %v6259 = vlaneseq
        %v6260 = vshrl.u32 %v6259, 7
        %v6261 = vsub.s32 %v6258, %v6260
        %v6262 = vrot.slane %v6255, %v6261
        %v6263 = vcombine.low %v5502, %v5503
        %v6265 = vunpack.c.l.s4 1983009808
        %v6266 = vunpack.c.0.s8 %v6265
        %v6267 = vlaneseq
        %v6268 = vshrl.u32 %v6267, 7
        %v6269 = vsub.s32 %v6266, %v6268
        %v6270 = vrot.slane %v6263, %v6269
        %v6271 = vcombine.low %v6246, %v6254
        %v6273 = vunpack.c.l.s4 1934713408
        %v6274 = vunpack.c.0.s8 %v6273
        %v6275 = vlaneseq
        %v6276 = vshrl.u32 %v6275, 7
        %v6277 = vsub.s32 %v6274, %v6276
        %v6278 = vrot.slane %v6271, %v6277
        %v6279 = vcombine.low %v6262, %v6270
        %v6281 = vunpack.c.l.s4 1934713408
        %v6282 = vunpack.c.0.s8 %v6281
        %v6283 = vlaneseq
        %v6284 = vshrl.u32 %v6283, 7
        %v6285 = vsub.s32 %v6282, %v6284
        %v6286 = vrot.slane %v6279, %v6285
        %v6287 = vcombine.low %v6278, %v6286
        %v6288 = vcombine.low %v5526, %v5533
        %v6290 = vunpack.c.l.s4 1983009808
        %v6291 = vunpack.c.0.s8 %v6290
        %v6292 = vlaneseq
        %v6293 = vshrl.u32 %v6292, 7
        %v6294 = vsub.s32 %v6291, %v6293
        %v6295 = vrot.slane %v6288, %v6294
        %v6296 = vcombine.low %v5549, %v5550
        %v6298 = vunpack.c.l.s4 1983009808
        %v6299 = vunpack.c.0.s8 %v6298
        %v6300 = vlaneseq
        %v6301 = vshrl.u32 %v6300, 7
        %v6302 = vsub.s32 %v6299, %v6301
        %v6303 = vrot.slane %v6296, %v6302
        %v6304 = vcombine.low %v5541, %v5548
        %v6306 = vunpack.c.l.s4 1983009808
        %v6307 = vunpack.c.0.s8 %v6306
        %v6308 = vlaneseq
        %v6309 = vshrl.u32 %v6308, 7
        %v6310 = vsub.s32 %v6307, %v6309
        %v6311 = vrot.slane %v6304, %v6310
        %v6312 = vcombine.low %v5551, %v5552
        %v6314 = vunpack.c.l.s4 1983009808
        %v6315 = vunpack.c.0.s8 %v6314
        %v6316 = vlaneseq
        %v6317 = vshrl.u32 %v6316, 7
        %v6318 = vsub.s32 %v6315, %v6317
        %v6319 = vrot.slane %v6312, %v6318
        %v6320 = vcombine.low %v6295, %v6303
        %v6322 = vunpack.c.l.s4 1934713408
        %v6323 = vunpack.c.0.s8 %v6322
        %v6324 = vlaneseq
        %v6325 = vshrl.u32 %v6324, 7
        %v6326 = vsub.s32 %v6323, %v6325
        %v6327 = vrot.slane %v6320, %v6326
        %v6328 = vcombine.low %v6311, %v6319
        %v6330 = vunpack.c.l.s4 1934713408
        %v6331 = vunpack.c.0.s8 %v6330
        %v6332 = vlaneseq
        %v6333 = vshrl.u32 %v6332, 7
        %v6334 = vsub.s32 %v6331, %v6333
        %v6335 = vrot.slane %v6328, %v6334
        %v6336 = vcombine.low %v6327, %v6335
        %v6339 = vpack.i.b16 %v5650, %v5601
        %v6340 = vshrl.u32 %v5601, 16
        %v6341 = vshrl.u32 %v5650, 16
        %v6342 = vpack.i.b16 %v6341, %v6340
        %v6345 = vpack.i.b16 %v5748, %v5699
        %v6346 = vshrl.u32 %v5699, 16
        %v6347 = vshrl.u32 %v5748, 16
        %v6348 = vpack.i.b16 %v6347, %v6346
        %v6351 = vpack.i.b16 %v5846, %v5797
        %v6352 = vshrl.u32 %v5797, 16
        %v6353 = vshrl.u32 %v5846, 16
        %v6354 = vpack.i.b16 %v6353, %v6352
        %v6357 = vpack.i.b16 %v5944, %v5895
        %v6358 = vshrl.u32 %v5895, 16
        %v6359 = vshrl.u32 %v5944, 16
        %v6360 = vpack.i.b16 %v6359, %v6358
        %v6363 = vpack.i.b16 %v6042, %v5993
        %v6364 = vshrl.u32 %v5993, 16
        %v6365 = vshrl.u32 %v6042, 16
        %v6366 = vpack.i.b16 %v6365, %v6364
        %v6369 = vpack.i.b16 %v6140, %v6091
        %v6370 = vshrl.u32 %v6091, 16
        %v6371 = vshrl.u32 %v6140, 16
        %v6372 = vpack.i.b16 %v6371, %v6370
        %v6375 = vpack.i.b16 %v6238, %v6189
        %v6376 = vshrl.u32 %v6189, 16
        %v6377 = vshrl.u32 %v6238, 16
        %v6378 = vpack.i.b16 %v6377, %v6376
        %v6381 = vpack.i.b16 %v6336, %v6287
        %v6382 = vshrl.u32 %v6287, 16
        %v6383 = vshrl.u32 %v6336, 16
        %v6384 = vpack.i.b16 %v6383, %v6382
        %v6385 = vunpack.c.l.b16 %v6339
        %v6386 = vunpack.c.h.b16 %v6339
        %v6387 = vunpack.c.l.b16 %v6345
        %v6388 = vunpack.c.h.b16 %v6345
        %v6389 = vunpack.c.l.b16 %v6351
        %v6390 = vunpack.c.h.b16 %v6351
        %v6391 = vunpack.c.l.b16 %v6357
        %v6392 = vunpack.c.h.b16 %v6357
        %v6393 = vunpack.c.l.b16 %v6363
        %v6394 = vunpack.c.h.b16 %v6363
        %v6395 = vunpack.c.l.b16 %v6369
        %v6396 = vunpack.c.h.b16 %v6369
        %v6397 = vunpack.c.l.b16 %v6375
        %v6398 = vunpack.c.h.b16 %v6375
        %v6399 = vunpack.c.l.b16 %v6381
        %v6400 = vunpack.c.h.b16 %v6381
        %v6401 = vunpack.c.l.b16 %v6342
        %v6402 = vunpack.c.h.b16 %v6342
        %v6403 = vunpack.c.l.b16 %v6348
        %v6404 = vunpack.c.h.b16 %v6348
        %v6405 = vunpack.c.l.b16 %v6354
        %v6406 = vunpack.c.h.b16 %v6354
        %v6407 = vunpack.c.l.b16 %v6360
        %v6408 = vunpack.c.h.b16 %v6360
        %v6409 = vunpack.c.l.b16 %v6366
        %v6410 = vunpack.c.h.b16 %v6366
        %v6411 = vunpack.c.l.b16 %v6372
        %v6412 = vunpack.c.h.b16 %v6372
        %v6413 = vunpack.c.l.b16 %v6378
        %v6414 = vunpack.c.h.b16 %v6378
        %v6415 = vunpack.c.l.b16 %v6384
        %v6416 = vunpack.c.h.b16 %v6384
        %v6417 = vpack.c.b16 %v6385, %v6385
        %v6418 = vpack.c.b16 %v6386, %v6386
        %v6419 = vpack.c.b16 %v6387, %v6387
        %v6420 = vpack.c.b16 %v6388, %v6388
        %v6421 = vpack.c.b16 %v6389, %v6389
        %v6422 = vpack.c.b16 %v6390, %v6390
        %v6423 = vpack.c.b16 %v6391, %v6391
        %v6424 = vpack.c.b16 %v6392, %v6392
        %v6425 = vpack.c.b16 %v6393, %v6393
        %v6426 = vpack.c.b16 %v6394, %v6394
        %v6427 = vpack.c.b16 %v6395, %v6395
        %v6428 = vpack.c.b16 %v6396, %v6396
        %v6429 = vpack.c.b16 %v6397, %v6397
        %v6430 = vpack.c.b16 %v6398, %v6398
        %v6431 = vpack.c.b16 %v6399, %v6399
        %v6432 = vpack.c.b16 %v6400, %v6400
        %v6433 = vpack.c.b16 %v6401, %v6401
        %v6434 = vpack.c.b16 %v6402, %v6402
        %v6435 = vpack.c.b16 %v6403, %v6403
        %v6436 = vpack.c.b16 %v6404, %v6404
        %v6437 = vpack.c.b16 %v6405, %v6405
        %v6438 = vpack.c.b16 %v6406, %v6406
        %v6439 = vpack.c.b16 %v6407, %v6407
        %v6440 = vpack.c.b16 %v6408, %v6408
        %v6441 = vpack.c.b16 %v6409, %v6409
        %v6442 = vpack.c.b16 %v6410, %v6410
        %v6443 = vpack.c.b16 %v6411, %v6411
        %v6444 = vpack.c.b16 %v6412, %v6412
        %v6445 = vpack.c.b16 %v6413, %v6413
        %v6446 = vpack.c.b16 %v6414, %v6414
        %v6447 = vpack.c.b16 %v6415, %v6415
        %v6448 = vpack.c.b16 %v6416, %v6416
        %6481 = vst.msk [vmem:[%s315] sm:$0xf] %vm2800, %v6417
        %6482 = vst.msk [vmem:[%s315 + $0x4] sm:$0xf] %vm2800, %v6418
        %6483 = vst.msk [vmem:[%s315 + $0x8] sm:$0xf] %vm2800, %v6419
        %6484 = vst.msk [vmem:[%s315 + $0xc] sm:$0xf] %vm2800, %v6420
        %6485 = vst.msk [vmem:[%s315 + $0x10] sm:$0xf] %vm2800, %v6421
        %6486 = vst.msk [vmem:[%s315 + $0x14] sm:$0xf] %vm2800, %v6422
        %6487 = vst.msk [vmem:[%s315 + $0x18] sm:$0xf] %vm2800, %v6423
        %6488 = vst.msk [vmem:[%s315 + $0x1c] sm:$0xf] %vm2800, %v6424
        %6489 = vst.msk [vmem:[%s315 + $0x20] sm:$0xf] %vm2800, %v6425
        %6490 = vst.msk [vmem:[%s315 + $0x24] sm:$0xf] %vm2800, %v6426
        %6491 = vst.msk [vmem:[%s315 + $0x28] sm:$0xf] %vm2800, %v6427
        %6492 = vst.msk [vmem:[%s315 + $0x2c] sm:$0xf] %vm2800, %v6428
        %6493 = vst.msk [vmem:[%s315 + $0x30] sm:$0xf] %vm2800, %v6429
        %6494 = vst.msk [vmem:[%s315 + $0x34] sm:$0xf] %vm2800, %v6430
        %6495 = vst.msk [vmem:[%s315 + $0x38] sm:$0xf] %vm2800, %v6431
        %6496 = vst.msk [vmem:[%s315 + $0x3c] sm:$0xf] %vm2800, %v6432
        %6497 = vst.msk [vmem:[%s315 + $0x40] sm:$0xf] %vm2800, %v6433
        %6498 = vst.msk [vmem:[%s315 + $0x44] sm:$0xf] %vm2800, %v6434
        %6499 = vst.msk [vmem:[%s315 + $0x48] sm:$0xf] %vm2800, %v6435
        %6500 = vst.msk [vmem:[%s315 + $0x4c] sm:$0xf] %vm2800, %v6436
        %6501 = vst.msk [vmem:[%s315 + $0x50] sm:$0xf] %vm2800, %v6437
        %6502 = vst.msk [vmem:[%s315 + $0x54] sm:$0xf] %vm2800, %v6438
        %6503 = vst.msk [vmem:[%s315 + $0x58] sm:$0xf] %vm2800, %v6439
        %6504 = vst.msk [vmem:[%s315 + $0x5c] sm:$0xf] %vm2800, %v6440
        %6505 = vst.msk [vmem:[%s315 + $0x60] sm:$0xf] %vm2800, %v6441
        %6506 = vst.msk [vmem:[%s315 + $0x64] sm:$0xf] %vm2800, %v6442
        %6507 = vst.msk [vmem:[%s315 + $0x68] sm:$0xf] %vm2800, %v6443
        %6508 = vst.msk [vmem:[%s315 + $0x6c] sm:$0xf] %vm2800, %v6444
        %6509 = vst.msk [vmem:[%s315 + $0x70] sm:$0xf] %vm2800, %v6445
        %6510 = vst.msk [vmem:[%s315 + $0x74] sm:$0xf] %vm2800, %v6446
        %6511 = vst.msk [vmem:[%s315 + $0x78] sm:$0xf] %vm2800, %v6447
        %6512 = vst.msk [vmem:[%s315 + $0x7c] sm:$0xf] %vm2800, %v6448
        %s6513 = sand.u32 %s135, 1
        %s6514 = sand.u32 %s135, 1
        %s6515 = smul.addr %s6514, 128
        %s6516 = scalar_lea.vmem [#allocation6], %s6515
        %s6517 = sand.u32 %s163, 1
        %s6518 = sand.u32 %s163, 1
        %s6519 = smul.addr %s6518, 128
        %s6520 = scalar_lea.vmem [#allocation7], %s6519
        %s6521 = sand.u32 %s191, 1
        %s6522 = sand.u32 %s191, 1
        %s6523 = smul.addr %s6522, 128
        %s6524 = scalar_lea.vmem [#allocation8], %s6523
        // Predicated region
        $region45: #{tpu_custom_call.1} parent=35 // pred_check
          %p6525 = pneg %p145
        $region46: #{tpu_custom_call.1} parent=35 // pred_check_branch
          %6527 = sbr.rel (%p6525) target = $region48
        $region47: #{tpu_custom_call.1} parent=35 // pred_region
          %s6528 = smul.u32 16, %s27
          %s6529 = smul.addr %s26, 64
          %s6530 = sadd.s32 %s6528, %s6529
          %s6531 = smul.addr %s6530, 4
          %s6532 = scalar_lea.vmem %s4, %s6531
          // Predicated region
          $region49: #{tpu_custom_call.1} parent=47 // pred_check
            _
          $region50: #{tpu_custom_call.1} parent=47 // pred_check_branch
            %6534 = sbr.rel (0) target = $region52
          $region51: #{tpu_custom_call.1} parent=47 // pred_region
            // Predicated region
            $region53: #{tpu_custom_call.1} parent=51 // pred_check
              _
            $region54: #{tpu_custom_call.1} parent=51 // pred_check_branch
              %6536 = sbr.rel target = $region56
            $region55: #{tpu_custom_call.1} parent=51 // pred_region
              // Predicated region
              $region68: #{tpu_custom_call.1} parent=55 // pred_check
                _
              $region69: #{tpu_custom_call.1} parent=55 // pred_check_branch
                %6614 = sbr.rel (0) target = $region71
              $region70: #{tpu_custom_call.1} parent=55 // pred_region
                loop: start=0, step=1, limit=1
                $region72: #{tpu_custom_call.1} parent=70 // loop_pre_header
                  _
                $region73: #{tpu_custom_call.1} parent=70 // loop_header
                  %s6616 = sphi 0, %s6620
                  %p6617 = scmp.ge.s32.totalorder %s6616, 1
                  %s6621 = sphi %s6516, %s6516
                  %s6622 = sphi %s6532, %s6532
                $region74: #{tpu_custom_call.1} parent=70 // loop_header_branch
                  %6619 = sbr.rel (%p6617) target = $region78
                $region75: #{tpu_custom_call.1} parent=70 // loop_body
                  _
                $region76: #{tpu_custom_call.1} parent=70 // loop_footer
                  %s6620 = sadd.s32 1, %s6616
                $region77: #{tpu_custom_call.1} parent=70 // loop_footer_branch
                  %6615 = sbr.rel target = $region73
                $region78: #{tpu_custom_call.1} parent=70 // loop_exit
                  _
                %s6624 = ssub.s32 16, 1
                loop: start=0, step=1, limit=1
                $region79: #{tpu_custom_call.1} parent=70 // loop_pre_header
                  _
                $region80: #{tpu_custom_call.1} parent=70 // loop_header
                  %s6626 = sphi 0, %s6630
                  %p6627 = scmp.ge.s32.totalorder %s6626, 1
                  %s6631 = sphi %s6516, %s6516
                  %s6632 = sphi %s6532, %s6532
                $region81: #{tpu_custom_call.1} parent=70 // loop_header_branch
                  %6629 = sbr.rel (%p6627) target = $region85
                $region82: #{tpu_custom_call.1} parent=70 // loop_body
                  %v6633 = vld [vmem:[%s6631] sm:%s6624]
                  %6634 = vst [vmem:[%s6632] sm:%s6624] %v6633
                  %v6635 = vld [vmem:[%s6631 + $0x4] sm:%s6624]
                  %6636 = vst [vmem:[%s6632 + $0x4] sm:%s6624] %v6635
                  %v6637 = vld [vmem:[%s6631 + $0x8] sm:%s6624]
                  %6638 = vst [vmem:[%s6632 + $0x8] sm:%s6624] %v6637
                  %v6639 = vld [vmem:[%s6631 + $0xc] sm:%s6624]
                  %6640 = vst [vmem:[%s6632 + $0xc] sm:%s6624] %v6639
                  %v6641 = vld [vmem:[%s6631 + $0x10] sm:%s6624]
                  %6642 = vst [vmem:[%s6632 + $0x10] sm:%s6624] %v6641
                  %v6643 = vld [vmem:[%s6631 + $0x14] sm:%s6624]
                  %6644 = vst [vmem:[%s6632 + $0x14] sm:%s6624] %v6643
                  %v6645 = vld [vmem:[%s6631 + $0x18] sm:%s6624]
                  %6646 = vst [vmem:[%s6632 + $0x18] sm:%s6624] %v6645
                  %v6647 = vld [vmem:[%s6631 + $0x1c] sm:%s6624]
                  %6648 = vst [vmem:[%s6632 + $0x1c] sm:%s6624] %v6647
                  %v6649 = vld [vmem:[%s6631 + $0x20] sm:%s6624]
                  %6650 = vst [vmem:[%s6632 + $0x20] sm:%s6624] %v6649
                  %v6651 = vld [vmem:[%s6631 + $0x24] sm:%s6624]
                  %6652 = vst [vmem:[%s6632 + $0x24] sm:%s6624] %v6651
                  %v6653 = vld [vmem:[%s6631 + $0x28] sm:%s6624]
                  %6654 = vst [vmem:[%s6632 + $0x28] sm:%s6624] %v6653
                  %v6655 = vld [vmem:[%s6631 + $0x2c] sm:%s6624]
                  %6656 = vst [vmem:[%s6632 + $0x2c] sm:%s6624] %v6655
                  %v6657 = vld [vmem:[%s6631 + $0x30] sm:%s6624]
                  %6658 = vst [vmem:[%s6632 + $0x30] sm:%s6624] %v6657
                  %v6659 = vld [vmem:[%s6631 + $0x34] sm:%s6624]
                  %6660 = vst [vmem:[%s6632 + $0x34] sm:%s6624] %v6659
                  %v6661 = vld [vmem:[%s6631 + $0x38] sm:%s6624]
                  %6662 = vst [vmem:[%s6632 + $0x38] sm:%s6624] %v6661
                  %v6663 = vld [vmem:[%s6631 + $0x3c] sm:%s6624]
                  %6664 = vst [vmem:[%s6632 + $0x3c] sm:%s6624] %v6663
                  %v6665 = vld [vmem:[%s6631 + $0x40] sm:%s6624]
                  %6666 = vst [vmem:[%s6632 + $0x80] sm:%s6624] %v6665
                  %v6667 = vld [vmem:[%s6631 + $0x44] sm:%s6624]
                  %6668 = vst [vmem:[%s6632 + $0x84] sm:%s6624] %v6667
                  %v6669 = vld [vmem:[%s6631 + $0x48] sm:%s6624]
                  %6670 = vst [vmem:[%s6632 + $0x88] sm:%s6624] %v6669
                  %v6671 = vld [vmem:[%s6631 + $0x4c] sm:%s6624]
                  %6672 = vst [vmem:[%s6632 + $0x8c] sm:%s6624] %v6671
                  %v6673 = vld [vmem:[%s6631 + $0x50] sm:%s6624]
                  %6674 = vst [vmem:[%s6632 + $0x90] sm:%s6624] %v6673
                  %v6675 = vld [vmem:[%s6631 + $0x54] sm:%s6624]
                  %6676 = vst [vmem:[%s6632 + $0x94] sm:%s6624] %v6675
                  %v6677 = vld [vmem:[%s6631 + $0x58] sm:%s6624]
                  %6678 = vst [vmem:[%s6632 + $0x98] sm:%s6624] %v6677
                  %v6679 = vld [vmem:[%s6631 + $0x5c] sm:%s6624]
                  %6680 = vst [vmem:[%s6632 + $0x9c] sm:%s6624] %v6679
                  %v6681 = vld [vmem:[%s6631 + $0x60] sm:%s6624]
                  %6682 = vst [vmem:[%s6632 + $0xa0] sm:%s6624] %v6681
                  %v6683 = vld [vmem:[%s6631 + $0x64] sm:%s6624]
                  %6684 = vst [vmem:[%s6632 + $0xa4] sm:%s6624] %v6683
                  %v6685 = vld [vmem:[%s6631 + $0x68] sm:%s6624]
                  %6686 = vst [vmem:[%s6632 + $0xa8] sm:%s6624] %v6685
                  %v6687 = vld [vmem:[%s6631 + $0x6c] sm:%s6624]
                  %6688 = vst [vmem:[%s6632 + $0xac] sm:%s6624] %v6687
                  %v6689 = vld [vmem:[%s6631 + $0x70] sm:%s6624]
                  %6690 = vst [vmem:[%s6632 + $0xb0] sm:%s6624] %v6689
                  %v6691 = vld [vmem:[%s6631 + $0x74] sm:%s6624]
                  %6692 = vst [vmem:[%s6632 + $0xb4] sm:%s6624] %v6691
                  %v6693 = vld [vmem:[%s6631 + $0x78] sm:%s6624]
                  %6694 = vst [vmem:[%s6632 + $0xb8] sm:%s6624] %v6693
                  %v6695 = vld [vmem:[%s6631 + $0x7c] sm:%s6624]
                  %6696 = vst [vmem:[%s6632 + $0xbc] sm:%s6624] %v6695
                $region83: #{tpu_custom_call.1} parent=70 // loop_footer
                  %s6630 = sadd.s32 1, %s6626
                $region84: #{tpu_custom_call.1} parent=70 // loop_footer_branch
                  %6625 = sbr.rel target = $region80
                $region85: #{tpu_custom_call.1} parent=70 // loop_exit
                  _
              $region71: #{tpu_custom_call.1} parent=55 // pred_fallthru
                _
            $region56: #{tpu_custom_call.1} parent=51 // pred_fallthru
              _
            // Predicated region
            $region57: #{tpu_custom_call.1} parent=51 // pred_check
              _
            $region58: #{tpu_custom_call.1} parent=51 // pred_check_branch
              %6538 = sbr.rel (0) target = $region60
            $region59: #{tpu_custom_call.1} parent=51 // pred_region
              %s6540 = ssub.s32 16, 1
              loop: start=0, step=1, limit=1
              $region61: #{tpu_custom_call.1} parent=59 // loop_pre_header
                _
              $region62: #{tpu_custom_call.1} parent=59 // loop_header
                %s6542 = sphi 0, %s6546
                %p6543 = scmp.ge.s32.totalorder %s6542, 1
                %s6547 = sphi %s6516, %s6516
                %s6548 = sphi %s6532, %s6532
              $region63: #{tpu_custom_call.1} parent=59 // loop_header_branch
                %6545 = sbr.rel (%p6543) target = $region67
              $region64: #{tpu_custom_call.1} parent=59 // loop_body
                %v6549 = vld [vmem:[%s6547] sm:%s6540]
                %6550 = vst [vmem:[%s6548] sm:%s6540] %v6549
                %v6551 = vld [vmem:[%s6547 + $0x4] sm:%s6540]
                %6552 = vst [vmem:[%s6548 + $0x4] sm:%s6540] %v6551
                %v6553 = vld [vmem:[%s6547 + $0x8] sm:%s6540]
                %6554 = vst [vmem:[%s6548 + $0x8] sm:%s6540] %v6553
                %v6555 = vld [vmem:[%s6547 + $0xc] sm:%s6540]
                %6556 = vst [vmem:[%s6548 + $0xc] sm:%s6540] %v6555
                %v6557 = vld [vmem:[%s6547 + $0x10] sm:%s6540]
                %6558 = vst [vmem:[%s6548 + $0x10] sm:%s6540] %v6557
                %v6559 = vld [vmem:[%s6547 + $0x14] sm:%s6540]
                %6560 = vst [vmem:[%s6548 + $0x14] sm:%s6540] %v6559
                %v6561 = vld [vmem:[%s6547 + $0x18] sm:%s6540]
                %6562 = vst [vmem:[%s6548 + $0x18] sm:%s6540] %v6561
                %v6563 = vld [vmem:[%s6547 + $0x1c] sm:%s6540]
                %6564 = vst [vmem:[%s6548 + $0x1c] sm:%s6540] %v6563
                %v6565 = vld [vmem:[%s6547 + $0x20] sm:%s6540]
                %6566 = vst [vmem:[%s6548 + $0x20] sm:%s6540] %v6565
                %v6567 = vld [vmem:[%s6547 + $0x24] sm:%s6540]
                %6568 = vst [vmem:[%s6548 + $0x24] sm:%s6540] %v6567
                %v6569 = vld [vmem:[%s6547 + $0x28] sm:%s6540]
                %6570 = vst [vmem:[%s6548 + $0x28] sm:%s6540] %v6569
                %v6571 = vld [vmem:[%s6547 + $0x2c] sm:%s6540]
                %6572 = vst [vmem:[%s6548 + $0x2c] sm:%s6540] %v6571
                %v6573 = vld [vmem:[%s6547 + $0x30] sm:%s6540]
                %6574 = vst [vmem:[%s6548 + $0x30] sm:%s6540] %v6573
                %v6575 = vld [vmem:[%s6547 + $0x34] sm:%s6540]
                %6576 = vst [vmem:[%s6548 + $0x34] sm:%s6540] %v6575
                %v6577 = vld [vmem:[%s6547 + $0x38] sm:%s6540]
                %6578 = vst [vmem:[%s6548 + $0x38] sm:%s6540] %v6577
                %v6579 = vld [vmem:[%s6547 + $0x3c] sm:%s6540]
                %6580 = vst [vmem:[%s6548 + $0x3c] sm:%s6540] %v6579
                %v6581 = vld [vmem:[%s6547 + $0x40] sm:%s6540]
                %6582 = vst [vmem:[%s6548 + $0x80] sm:%s6540] %v6581
                %v6583 = vld [vmem:[%s6547 + $0x44] sm:%s6540]
                %6584 = vst [vmem:[%s6548 + $0x84] sm:%s6540] %v6583
                %v6585 = vld [vmem:[%s6547 + $0x48] sm:%s6540]
                %6586 = vst [vmem:[%s6548 + $0x88] sm:%s6540] %v6585
                %v6587 = vld [vmem:[%s6547 + $0x4c] sm:%s6540]
                %6588 = vst [vmem:[%s6548 + $0x8c] sm:%s6540] %v6587
                %v6589 = vld [vmem:[%s6547 + $0x50] sm:%s6540]
                %6590 = vst [vmem:[%s6548 + $0x90] sm:%s6540] %v6589
                %v6591 = vld [vmem:[%s6547 + $0x54] sm:%s6540]
                %6592 = vst [vmem:[%s6548 + $0x94] sm:%s6540] %v6591
                %v6593 = vld [vmem:[%s6547 + $0x58] sm:%s6540]
                %6594 = vst [vmem:[%s6548 + $0x98] sm:%s6540] %v6593
                %v6595 = vld [vmem:[%s6547 + $0x5c] sm:%s6540]
                %6596 = vst [vmem:[%s6548 + $0x9c] sm:%s6540] %v6595
                %v6597 = vld [vmem:[%s6547 + $0x60] sm:%s6540]
                %6598 = vst [vmem:[%s6548 + $0xa0] sm:%s6540] %v6597
                %v6599 = vld [vmem:[%s6547 + $0x64] sm:%s6540]
                %6600 = vst [vmem:[%s6548 + $0xa4] sm:%s6540] %v6599
                %v6601 = vld [vmem:[%s6547 + $0x68] sm:%s6540]
                %6602 = vst [vmem:[%s6548 + $0xa8] sm:%s6540] %v6601
                %v6603 = vld [vmem:[%s6547 + $0x6c] sm:%s6540]
                %6604 = vst [vmem:[%s6548 + $0xac] sm:%s6540] %v6603
                %v6605 = vld [vmem:[%s6547 + $0x70] sm:%s6540]
                %6606 = vst [vmem:[%s6548 + $0xb0] sm:%s6540] %v6605
                %v6607 = vld [vmem:[%s6547 + $0x74] sm:%s6540]
                %6608 = vst [vmem:[%s6548 + $0xb4] sm:%s6540] %v6607
                %v6609 = vld [vmem:[%s6547 + $0x78] sm:%s6540]
                %6610 = vst [vmem:[%s6548 + $0xb8] sm:%s6540] %v6609
                %v6611 = vld [vmem:[%s6547 + $0x7c] sm:%s6540]
                %6612 = vst [vmem:[%s6548 + $0xbc] sm:%s6540] %v6611
              $region65: #{tpu_custom_call.1} parent=59 // loop_footer
                %s6546 = sadd.s32 1, %s6542
              $region66: #{tpu_custom_call.1} parent=59 // loop_footer_branch
                %6541 = sbr.rel target = $region62
              $region67: #{tpu_custom_call.1} parent=59 // loop_exit
                _
            $region60: #{tpu_custom_call.1} parent=51 // pred_fallthru
              _
          $region52: #{tpu_custom_call.1} parent=47 // pred_fallthru
            _
          %6697 = vnop
        $region48: #{tpu_custom_call.1} parent=35 // pred_fallthru
          _
        // Predicated region
        $region86: #{tpu_custom_call.1} parent=35 // pred_check
          %p6698 = pneg %p173
        $region87: #{tpu_custom_call.1} parent=35 // pred_check_branch
          %6700 = sbr.rel (%p6698) target = $region89
        $region88: #{tpu_custom_call.1} parent=35 // pred_region
          %s6701 = smul.u32 16, %s27
          %s6702 = smul.addr %s26, 64
          %s6703 = sadd.s32 %s6701, %s6702
          %s6704 = smul.addr %s6703, 4
          %s6705 = scalar_lea.vmem %s5, %s6704
          // Predicated region
          $region90: #{tpu_custom_call.1} parent=88 // pred_check
            _
          $region91: #{tpu_custom_call.1} parent=88 // pred_check_branch
            %6707 = sbr.rel (0) target = $region93
          $region92: #{tpu_custom_call.1} parent=88 // pred_region
            // Predicated region
            $region94: #{tpu_custom_call.1} parent=92 // pred_check
              _
            $region95: #{tpu_custom_call.1} parent=92 // pred_check_branch
              %6709 = sbr.rel target = $region97
            $region96: #{tpu_custom_call.1} parent=92 // pred_region
              // Predicated region
              $region109: #{tpu_custom_call.1} parent=96 // pred_check
                _
              $region110: #{tpu_custom_call.1} parent=96 // pred_check_branch
                %6787 = sbr.rel (0) target = $region112
              $region111: #{tpu_custom_call.1} parent=96 // pred_region
                loop: start=0, step=1, limit=1
                $region113: #{tpu_custom_call.1} parent=111 // loop_pre_header
                  _
                $region114: #{tpu_custom_call.1} parent=111 // loop_header
                  %s6789 = sphi 0, %s6793
                  %p6790 = scmp.ge.s32.totalorder %s6789, 1
                  %s6794 = sphi %s6520, %s6520
                  %s6795 = sphi %s6705, %s6705
                $region115: #{tpu_custom_call.1} parent=111 // loop_header_branch
                  %6792 = sbr.rel (%p6790) target = $region119
                $region116: #{tpu_custom_call.1} parent=111 // loop_body
                  _
                $region117: #{tpu_custom_call.1} parent=111 // loop_footer
                  %s6793 = sadd.s32 1, %s6789
                $region118: #{tpu_custom_call.1} parent=111 // loop_footer_branch
                  %6788 = sbr.rel target = $region114
                $region119: #{tpu_custom_call.1} parent=111 // loop_exit
                  _
                %s6797 = ssub.s32 16, 1
                loop: start=0, step=1, limit=1
                $region120: #{tpu_custom_call.1} parent=111 // loop_pre_header
                  _
                $region121: #{tpu_custom_call.1} parent=111 // loop_header
                  %s6799 = sphi 0, %s6803
                  %p6800 = scmp.ge.s32.totalorder %s6799, 1
                  %s6804 = sphi %s6520, %s6520
                  %s6805 = sphi %s6705, %s6705
                $region122: #{tpu_custom_call.1} parent=111 // loop_header_branch
                  %6802 = sbr.rel (%p6800) target = $region126
                $region123: #{tpu_custom_call.1} parent=111 // loop_body
                  %v6806 = vld [vmem:[%s6804] sm:%s6797]
                  %6807 = vst [vmem:[%s6805] sm:%s6797] %v6806
                  %v6808 = vld [vmem:[%s6804 + $0x4] sm:%s6797]
                  %6809 = vst [vmem:[%s6805 + $0x4] sm:%s6797] %v6808
                  %v6810 = vld [vmem:[%s6804 + $0x8] sm:%s6797]
                  %6811 = vst [vmem:[%s6805 + $0x8] sm:%s6797] %v6810
                  %v6812 = vld [vmem:[%s6804 + $0xc] sm:%s6797]
                  %6813 = vst [vmem:[%s6805 + $0xc] sm:%s6797] %v6812
                  %v6814 = vld [vmem:[%s6804 + $0x10] sm:%s6797]
                  %6815 = vst [vmem:[%s6805 + $0x10] sm:%s6797] %v6814
                  %v6816 = vld [vmem:[%s6804 + $0x14] sm:%s6797]
                  %6817 = vst [vmem:[%s6805 + $0x14] sm:%s6797] %v6816
                  %v6818 = vld [vmem:[%s6804 + $0x18] sm:%s6797]
                  %6819 = vst [vmem:[%s6805 + $0x18] sm:%s6797] %v6818
                  %v6820 = vld [vmem:[%s6804 + $0x1c] sm:%s6797]
                  %6821 = vst [vmem:[%s6805 + $0x1c] sm:%s6797] %v6820
                  %v6822 = vld [vmem:[%s6804 + $0x20] sm:%s6797]
                  %6823 = vst [vmem:[%s6805 + $0x20] sm:%s6797] %v6822
                  %v6824 = vld [vmem:[%s6804 + $0x24] sm:%s6797]
                  %6825 = vst [vmem:[%s6805 + $0x24] sm:%s6797] %v6824
                  %v6826 = vld [vmem:[%s6804 + $0x28] sm:%s6797]
                  %6827 = vst [vmem:[%s6805 + $0x28] sm:%s6797] %v6826
                  %v6828 = vld [vmem:[%s6804 + $0x2c] sm:%s6797]
                  %6829 = vst [vmem:[%s6805 + $0x2c] sm:%s6797] %v6828
                  %v6830 = vld [vmem:[%s6804 + $0x30] sm:%s6797]
                  %6831 = vst [vmem:[%s6805 + $0x30] sm:%s6797] %v6830
                  %v6832 = vld [vmem:[%s6804 + $0x34] sm:%s6797]
                  %6833 = vst [vmem:[%s6805 + $0x34] sm:%s6797] %v6832
                  %v6834 = vld [vmem:[%s6804 + $0x38] sm:%s6797]
                  %6835 = vst [vmem:[%s6805 + $0x38] sm:%s6797] %v6834
                  %v6836 = vld [vmem:[%s6804 + $0x3c] sm:%s6797]
                  %6837 = vst [vmem:[%s6805 + $0x3c] sm:%s6797] %v6836
                  %v6838 = vld [vmem:[%s6804 + $0x40] sm:%s6797]
                  %6839 = vst [vmem:[%s6805 + $0x80] sm:%s6797] %v6838
                  %v6840 = vld [vmem:[%s6804 + $0x44] sm:%s6797]
                  %6841 = vst [vmem:[%s6805 + $0x84] sm:%s6797] %v6840
                  %v6842 = vld [vmem:[%s6804 + $0x48] sm:%s6797]
                  %6843 = vst [vmem:[%s6805 + $0x88] sm:%s6797] %v6842
                  %v6844 = vld [vmem:[%s6804 + $0x4c] sm:%s6797]
                  %6845 = vst [vmem:[%s6805 + $0x8c] sm:%s6797] %v6844
                  %v6846 = vld [vmem:[%s6804 + $0x50] sm:%s6797]
                  %6847 = vst [vmem:[%s6805 + $0x90] sm:%s6797] %v6846
                  %v6848 = vld [vmem:[%s6804 + $0x54] sm:%s6797]
                  %6849 = vst [vmem:[%s6805 + $0x94] sm:%s6797] %v6848
                  %v6850 = vld [vmem:[%s6804 + $0x58] sm:%s6797]
                  %6851 = vst [vmem:[%s6805 + $0x98] sm:%s6797] %v6850
                  %v6852 = vld [vmem:[%s6804 + $0x5c] sm:%s6797]
                  %6853 = vst [vmem:[%s6805 + $0x9c] sm:%s6797] %v6852
                  %v6854 = vld [vmem:[%s6804 + $0x60] sm:%s6797]
                  %6855 = vst [vmem:[%s6805 + $0xa0] sm:%s6797] %v6854
                  %v6856 = vld [vmem:[%s6804 + $0x64] sm:%s6797]
                  %6857 = vst [vmem:[%s6805 + $0xa4] sm:%s6797] %v6856
                  %v6858 = vld [vmem:[%s6804 + $0x68] sm:%s6797]
                  %6859 = vst [vmem:[%s6805 + $0xa8] sm:%s6797] %v6858
                  %v6860 = vld [vmem:[%s6804 + $0x6c] sm:%s6797]
                  %6861 = vst [vmem:[%s6805 + $0xac] sm:%s6797] %v6860
                  %v6862 = vld [vmem:[%s6804 + $0x70] sm:%s6797]
                  %6863 = vst [vmem:[%s6805 + $0xb0] sm:%s6797] %v6862
                  %v6864 = vld [vmem:[%s6804 + $0x74] sm:%s6797]
                  %6865 = vst [vmem:[%s6805 + $0xb4] sm:%s6797] %v6864
                  %v6866 = vld [vmem:[%s6804 + $0x78] sm:%s6797]
                  %6867 = vst [vmem:[%s6805 + $0xb8] sm:%s6797] %v6866
                  %v6868 = vld [vmem:[%s6804 + $0x7c] sm:%s6797]
                  %6869 = vst [vmem:[%s6805 + $0xbc] sm:%s6797] %v6868
                $region124: #{tpu_custom_call.1} parent=111 // loop_footer
                  %s6803 = sadd.s32 1, %s6799
                $region125: #{tpu_custom_call.1} parent=111 // loop_footer_branch
                  %6798 = sbr.rel target = $region121
                $region126: #{tpu_custom_call.1} parent=111 // loop_exit
                  _
              $region112: #{tpu_custom_call.1} parent=96 // pred_fallthru
                _
            $region97: #{tpu_custom_call.1} parent=92 // pred_fallthru
              _
            // Predicated region
            $region98: #{tpu_custom_call.1} parent=92 // pred_check
              _
            $region99: #{tpu_custom_call.1} parent=92 // pred_check_branch
              %6711 = sbr.rel (0) target = $region101
            $region100: #{tpu_custom_call.1} parent=92 // pred_region
              %s6713 = ssub.s32 16, 1
              loop: start=0, step=1, limit=1
              $region102: #{tpu_custom_call.1} parent=100 // loop_pre_header
                _
              $region103: #{tpu_custom_call.1} parent=100 // loop_header
                %s6715 = sphi 0, %s6719
                %p6716 = scmp.ge.s32.totalorder %s6715, 1
                %s6720 = sphi %s6520, %s6520
                %s6721 = sphi %s6705, %s6705
              $region104: #{tpu_custom_call.1} parent=100 // loop_header_branch
                %6718 = sbr.rel (%p6716) target = $region108
              $region105: #{tpu_custom_call.1} parent=100 // loop_body
                %v6722 = vld [vmem:[%s6720] sm:%s6713]
                %6723 = vst [vmem:[%s6721] sm:%s6713] %v6722
                %v6724 = vld [vmem:[%s6720 + $0x4] sm:%s6713]
                %6725 = vst [vmem:[%s6721 + $0x4] sm:%s6713] %v6724
                %v6726 = vld [vmem:[%s6720 + $0x8] sm:%s6713]
                %6727 = vst [vmem:[%s6721 + $0x8] sm:%s6713] %v6726
                %v6728 = vld [vmem:[%s6720 + $0xc] sm:%s6713]
                %6729 = vst [vmem:[%s6721 + $0xc] sm:%s6713] %v6728
                %v6730 = vld [vmem:[%s6720 + $0x10] sm:%s6713]
                %6731 = vst [vmem:[%s6721 + $0x10] sm:%s6713] %v6730
                %v6732 = vld [vmem:[%s6720 + $0x14] sm:%s6713]
                %6733 = vst [vmem:[%s6721 + $0x14] sm:%s6713] %v6732
                %v6734 = vld [vmem:[%s6720 + $0x18] sm:%s6713]
                %6735 = vst [vmem:[%s6721 + $0x18] sm:%s6713] %v6734
                %v6736 = vld [vmem:[%s6720 + $0x1c] sm:%s6713]
                %6737 = vst [vmem:[%s6721 + $0x1c] sm:%s6713] %v6736
                %v6738 = vld [vmem:[%s6720 + $0x20] sm:%s6713]
                %6739 = vst [vmem:[%s6721 + $0x20] sm:%s6713] %v6738
                %v6740 = vld [vmem:[%s6720 + $0x24] sm:%s6713]
                %6741 = vst [vmem:[%s6721 + $0x24] sm:%s6713] %v6740
                %v6742 = vld [vmem:[%s6720 + $0x28] sm:%s6713]
                %6743 = vst [vmem:[%s6721 + $0x28] sm:%s6713] %v6742
                %v6744 = vld [vmem:[%s6720 + $0x2c] sm:%s6713]
                %6745 = vst [vmem:[%s6721 + $0x2c] sm:%s6713] %v6744
                %v6746 = vld [vmem:[%s6720 + $0x30] sm:%s6713]
                %6747 = vst [vmem:[%s6721 + $0x30] sm:%s6713] %v6746
                %v6748 = vld [vmem:[%s6720 + $0x34] sm:%s6713]
                %6749 = vst [vmem:[%s6721 + $0x34] sm:%s6713] %v6748
                %v6750 = vld [vmem:[%s6720 + $0x38] sm:%s6713]
                %6751 = vst [vmem:[%s6721 + $0x38] sm:%s6713] %v6750
                %v6752 = vld [vmem:[%s6720 + $0x3c] sm:%s6713]
                %6753 = vst [vmem:[%s6721 + $0x3c] sm:%s6713] %v6752
                %v6754 = vld [vmem:[%s6720 + $0x40] sm:%s6713]
                %6755 = vst [vmem:[%s6721 + $0x80] sm:%s6713] %v6754
                %v6756 = vld [vmem:[%s6720 + $0x44] sm:%s6713]
                %6757 = vst [vmem:[%s6721 + $0x84] sm:%s6713] %v6756
                %v6758 = vld [vmem:[%s6720 + $0x48] sm:%s6713]
                %6759 = vst [vmem:[%s6721 + $0x88] sm:%s6713] %v6758
                %v6760 = vld [vmem:[%s6720 + $0x4c] sm:%s6713]
                %6761 = vst [vmem:[%s6721 + $0x8c] sm:%s6713] %v6760
                %v6762 = vld [vmem:[%s6720 + $0x50] sm:%s6713]
                %6763 = vst [vmem:[%s6721 + $0x90] sm:%s6713] %v6762
                %v6764 = vld [vmem:[%s6720 + $0x54] sm:%s6713]
                %6765 = vst [vmem:[%s6721 + $0x94] sm:%s6713] %v6764
                %v6766 = vld [vmem:[%s6720 + $0x58] sm:%s6713]
                %6767 = vst [vmem:[%s6721 + $0x98] sm:%s6713] %v6766
                %v6768 = vld [vmem:[%s6720 + $0x5c] sm:%s6713]
                %6769 = vst [vmem:[%s6721 + $0x9c] sm:%s6713] %v6768
                %v6770 = vld [vmem:[%s6720 + $0x60] sm:%s6713]
                %6771 = vst [vmem:[%s6721 + $0xa0] sm:%s6713] %v6770
                %v6772 = vld [vmem:[%s6720 + $0x64] sm:%s6713]
                %6773 = vst [vmem:[%s6721 + $0xa4] sm:%s6713] %v6772
                %v6774 = vld [vmem:[%s6720 + $0x68] sm:%s6713]
                %6775 = vst [vmem:[%s6721 + $0xa8] sm:%s6713] %v6774
                %v6776 = vld [vmem:[%s6720 + $0x6c] sm:%s6713]
                %6777 = vst [vmem:[%s6721 + $0xac] sm:%s6713] %v6776
                %v6778 = vld [vmem:[%s6720 + $0x70] sm:%s6713]
                %6779 = vst [vmem:[%s6721 + $0xb0] sm:%s6713] %v6778
                %v6780 = vld [vmem:[%s6720 + $0x74] sm:%s6713]
                %6781 = vst [vmem:[%s6721 + $0xb4] sm:%s6713] %v6780
                %v6782 = vld [vmem:[%s6720 + $0x78] sm:%s6713]
                %6783 = vst [vmem:[%s6721 + $0xb8] sm:%s6713] %v6782
                %v6784 = vld [vmem:[%s6720 + $0x7c] sm:%s6713]
                %6785 = vst [vmem:[%s6721 + $0xbc] sm:%s6713] %v6784
              $region106: #{tpu_custom_call.1} parent=100 // loop_footer
                %s6719 = sadd.s32 1, %s6715
              $region107: #{tpu_custom_call.1} parent=100 // loop_footer_branch
                %6714 = sbr.rel target = $region103
              $region108: #{tpu_custom_call.1} parent=100 // loop_exit
                _
            $region101: #{tpu_custom_call.1} parent=92 // pred_fallthru
              _
          $region93: #{tpu_custom_call.1} parent=88 // pred_fallthru
            _
          %6870 = vnop
        $region89: #{tpu_custom_call.1} parent=35 // pred_fallthru
          _
        // Predicated region
        $region127: #{tpu_custom_call.1} parent=35 // pred_check
          %p6871 = pneg %p201
        $region128: #{tpu_custom_call.1} parent=35 // pred_check_branch
          %6873 = sbr.rel (%p6871) target = $region130
        $region129: #{tpu_custom_call.1} parent=35 // pred_region
          %s6874 = smul.u32 16, %s27
          %s6875 = smul.addr %s26, 64
          %s6876 = sadd.s32 %s6874, %s6875
          %s6877 = smul.addr %s6876, 4
          %s6878 = scalar_lea.vmem %s6, %s6877
          // Predicated region
          $region131: #{tpu_custom_call.1} parent=129 // pred_check
            _
          $region132: #{tpu_custom_call.1} parent=129 // pred_check_branch
            %6880 = sbr.rel (0) target = $region134
          $region133: #{tpu_custom_call.1} parent=129 // pred_region
            // Predicated region
            $region135: #{tpu_custom_call.1} parent=133 // pred_check
              _
            $region136: #{tpu_custom_call.1} parent=133 // pred_check_branch
              %6882 = sbr.rel target = $region138
            $region137: #{tpu_custom_call.1} parent=133 // pred_region
              // Predicated region
              $region150: #{tpu_custom_call.1} parent=137 // pred_check
                _
              $region151: #{tpu_custom_call.1} parent=137 // pred_check_branch
                %6960 = sbr.rel (0) target = $region153
              $region152: #{tpu_custom_call.1} parent=137 // pred_region
                loop: start=0, step=1, limit=1
                $region154: #{tpu_custom_call.1} parent=152 // loop_pre_header
                  _
                $region155: #{tpu_custom_call.1} parent=152 // loop_header
                  %s6962 = sphi 0, %s6966
                  %p6963 = scmp.ge.s32.totalorder %s6962, 1
                  %s6967 = sphi %s6524, %s6524
                  %s6968 = sphi %s6878, %s6878
                $region156: #{tpu_custom_call.1} parent=152 // loop_header_branch
                  %6965 = sbr.rel (%p6963) target = $region160
                $region157: #{tpu_custom_call.1} parent=152 // loop_body
                  _
                $region158: #{tpu_custom_call.1} parent=152 // loop_footer
                  %s6966 = sadd.s32 1, %s6962
                $region159: #{tpu_custom_call.1} parent=152 // loop_footer_branch
                  %6961 = sbr.rel target = $region155
                $region160: #{tpu_custom_call.1} parent=152 // loop_exit
                  _
                %s6970 = ssub.s32 16, 1
                loop: start=0, step=1, limit=1
                $region161: #{tpu_custom_call.1} parent=152 // loop_pre_header
                  _
                $region162: #{tpu_custom_call.1} parent=152 // loop_header
                  %s6972 = sphi 0, %s6976
                  %p6973 = scmp.ge.s32.totalorder %s6972, 1
                  %s6977 = sphi %s6524, %s6524
                  %s6978 = sphi %s6878, %s6878
                $region163: #{tpu_custom_call.1} parent=152 // loop_header_branch
                  %6975 = sbr.rel (%p6973) target = $region167
                $region164: #{tpu_custom_call.1} parent=152 // loop_body
                  %v6979 = vld [vmem:[%s6977] sm:%s6970]
                  %6980 = vst [vmem:[%s6978] sm:%s6970] %v6979
                  %v6981 = vld [vmem:[%s6977 + $0x4] sm:%s6970]
                  %6982 = vst [vmem:[%s6978 + $0x4] sm:%s6970] %v6981
                  %v6983 = vld [vmem:[%s6977 + $0x8] sm:%s6970]
                  %6984 = vst [vmem:[%s6978 + $0x8] sm:%s6970] %v6983
                  %v6985 = vld [vmem:[%s6977 + $0xc] sm:%s6970]
                  %6986 = vst [vmem:[%s6978 + $0xc] sm:%s6970] %v6985
                  %v6987 = vld [vmem:[%s6977 + $0x10] sm:%s6970]
                  %6988 = vst [vmem:[%s6978 + $0x10] sm:%s6970] %v6987
                  %v6989 = vld [vmem:[%s6977 + $0x14] sm:%s6970]
                  %6990 = vst [vmem:[%s6978 + $0x14] sm:%s6970] %v6989
                  %v6991 = vld [vmem:[%s6977 + $0x18] sm:%s6970]
                  %6992 = vst [vmem:[%s6978 + $0x18] sm:%s6970] %v6991
                  %v6993 = vld [vmem:[%s6977 + $0x1c] sm:%s6970]
                  %6994 = vst [vmem:[%s6978 + $0x1c] sm:%s6970] %v6993
                  %v6995 = vld [vmem:[%s6977 + $0x20] sm:%s6970]
                  %6996 = vst [vmem:[%s6978 + $0x20] sm:%s6970] %v6995
                  %v6997 = vld [vmem:[%s6977 + $0x24] sm:%s6970]
                  %6998 = vst [vmem:[%s6978 + $0x24] sm:%s6970] %v6997
                  %v6999 = vld [vmem:[%s6977 + $0x28] sm:%s6970]
                  %7000 = vst [vmem:[%s6978 + $0x28] sm:%s6970] %v6999
                  %v7001 = vld [vmem:[%s6977 + $0x2c] sm:%s6970]
                  %7002 = vst [vmem:[%s6978 + $0x2c] sm:%s6970] %v7001
                  %v7003 = vld [vmem:[%s6977 + $0x30] sm:%s6970]
                  %7004 = vst [vmem:[%s6978 + $0x30] sm:%s6970] %v7003
                  %v7005 = vld [vmem:[%s6977 + $0x34] sm:%s6970]
                  %7006 = vst [vmem:[%s6978 + $0x34] sm:%s6970] %v7005
                  %v7007 = vld [vmem:[%s6977 + $0x38] sm:%s6970]
                  %7008 = vst [vmem:[%s6978 + $0x38] sm:%s6970] %v7007
                  %v7009 = vld [vmem:[%s6977 + $0x3c] sm:%s6970]
                  %7010 = vst [vmem:[%s6978 + $0x3c] sm:%s6970] %v7009
                  %v7011 = vld [vmem:[%s6977 + $0x40] sm:%s6970]
                  %7012 = vst [vmem:[%s6978 + $0x80] sm:%s6970] %v7011
                  %v7013 = vld [vmem:[%s6977 + $0x44] sm:%s6970]
                  %7014 = vst [vmem:[%s6978 + $0x84] sm:%s6970] %v7013
                  %v7015 = vld [vmem:[%s6977 + $0x48] sm:%s6970]
                  %7016 = vst [vmem:[%s6978 + $0x88] sm:%s6970] %v7015
                  %v7017 = vld [vmem:[%s6977 + $0x4c] sm:%s6970]
                  %7018 = vst [vmem:[%s6978 + $0x8c] sm:%s6970] %v7017
                  %v7019 = vld [vmem:[%s6977 + $0x50] sm:%s6970]
                  %7020 = vst [vmem:[%s6978 + $0x90] sm:%s6970] %v7019
                  %v7021 = vld [vmem:[%s6977 + $0x54] sm:%s6970]
                  %7022 = vst [vmem:[%s6978 + $0x94] sm:%s6970] %v7021
                  %v7023 = vld [vmem:[%s6977 + $0x58] sm:%s6970]
                  %7024 = vst [vmem:[%s6978 + $0x98] sm:%s6970] %v7023
                  %v7025 = vld [vmem:[%s6977 + $0x5c] sm:%s6970]
                  %7026 = vst [vmem:[%s6978 + $0x9c] sm:%s6970] %v7025
                  %v7027 = vld [vmem:[%s6977 + $0x60] sm:%s6970]
                  %7028 = vst [vmem:[%s6978 + $0xa0] sm:%s6970] %v7027
                  %v7029 = vld [vmem:[%s6977 + $0x64] sm:%s6970]
                  %7030 = vst [vmem:[%s6978 + $0xa4] sm:%s6970] %v7029
                  %v7031 = vld [vmem:[%s6977 + $0x68] sm:%s6970]
                  %7032 = vst [vmem:[%s6978 + $0xa8] sm:%s6970] %v7031
                  %v7033 = vld [vmem:[%s6977 + $0x6c] sm:%s6970]
                  %7034 = vst [vmem:[%s6978 + $0xac] sm:%s6970] %v7033
                  %v7035 = vld [vmem:[%s6977 + $0x70] sm:%s6970]
                  %7036 = vst [vmem:[%s6978 + $0xb0] sm:%s6970] %v7035
                  %v7037 = vld [vmem:[%s6977 + $0x74] sm:%s6970]
                  %7038 = vst [vmem:[%s6978 + $0xb4] sm:%s6970] %v7037
                  %v7039 = vld [vmem:[%s6977 + $0x78] sm:%s6970]
                  %7040 = vst [vmem:[%s6978 + $0xb8] sm:%s6970] %v7039
                  %v7041 = vld [vmem:[%s6977 + $0x7c] sm:%s6970]
                  %7042 = vst [vmem:[%s6978 + $0xbc] sm:%s6970] %v7041
                $region165: #{tpu_custom_call.1} parent=152 // loop_footer
                  %s6976 = sadd.s32 1, %s6972
                $region166: #{tpu_custom_call.1} parent=152 // loop_footer_branch
                  %6971 = sbr.rel target = $region162
                $region167: #{tpu_custom_call.1} parent=152 // loop_exit
                  _
              $region153: #{tpu_custom_call.1} parent=137 // pred_fallthru
                _
            $region138: #{tpu_custom_call.1} parent=133 // pred_fallthru
              _
            // Predicated region
            $region139: #{tpu_custom_call.1} parent=133 // pred_check
              _
            $region140: #{tpu_custom_call.1} parent=133 // pred_check_branch
              %6884 = sbr.rel (0) target = $region142
            $region141: #{tpu_custom_call.1} parent=133 // pred_region
              %s6886 = ssub.s32 16, 1
              loop: start=0, step=1, limit=1
              $region143: #{tpu_custom_call.1} parent=141 // loop_pre_header
                _
              $region144: #{tpu_custom_call.1} parent=141 // loop_header
                %s6888 = sphi 0, %s6892
                %p6889 = scmp.ge.s32.totalorder %s6888, 1
                %s6893 = sphi %s6524, %s6524
                %s6894 = sphi %s6878, %s6878
              $region145: #{tpu_custom_call.1} parent=141 // loop_header_branch
                %6891 = sbr.rel (%p6889) target = $region149
              $region146: #{tpu_custom_call.1} parent=141 // loop_body
                %v6895 = vld [vmem:[%s6893] sm:%s6886]
                %6896 = vst [vmem:[%s6894] sm:%s6886] %v6895
                %v6897 = vld [vmem:[%s6893 + $0x4] sm:%s6886]
                %6898 = vst [vmem:[%s6894 + $0x4] sm:%s6886] %v6897
                %v6899 = vld [vmem:[%s6893 + $0x8] sm:%s6886]
                %6900 = vst [vmem:[%s6894 + $0x8] sm:%s6886] %v6899
                %v6901 = vld [vmem:[%s6893 + $0xc] sm:%s6886]
                %6902 = vst [vmem:[%s6894 + $0xc] sm:%s6886] %v6901
                %v6903 = vld [vmem:[%s6893 + $0x10] sm:%s6886]
                %6904 = vst [vmem:[%s6894 + $0x10] sm:%s6886] %v6903
                %v6905 = vld [vmem:[%s6893 + $0x14] sm:%s6886]
                %6906 = vst [vmem:[%s6894 + $0x14] sm:%s6886] %v6905
                %v6907 = vld [vmem:[%s6893 + $0x18] sm:%s6886]
                %6908 = vst [vmem:[%s6894 + $0x18] sm:%s6886] %v6907
                %v6909 = vld [vmem:[%s6893 + $0x1c] sm:%s6886]
                %6910 = vst [vmem:[%s6894 + $0x1c] sm:%s6886] %v6909
                %v6911 = vld [vmem:[%s6893 + $0x20] sm:%s6886]
                %6912 = vst [vmem:[%s6894 + $0x20] sm:%s6886] %v6911
                %v6913 = vld [vmem:[%s6893 + $0x24] sm:%s6886]
                %6914 = vst [vmem:[%s6894 + $0x24] sm:%s6886] %v6913
                %v6915 = vld [vmem:[%s6893 + $0x28] sm:%s6886]
                %6916 = vst [vmem:[%s6894 + $0x28] sm:%s6886] %v6915
                %v6917 = vld [vmem:[%s6893 + $0x2c] sm:%s6886]
                %6918 = vst [vmem:[%s6894 + $0x2c] sm:%s6886] %v6917
                %v6919 = vld [vmem:[%s6893 + $0x30] sm:%s6886]
                %6920 = vst [vmem:[%s6894 + $0x30] sm:%s6886] %v6919
                %v6921 = vld [vmem:[%s6893 + $0x34] sm:%s6886]
                %6922 = vst [vmem:[%s6894 + $0x34] sm:%s6886] %v6921
                %v6923 = vld [vmem:[%s6893 + $0x38] sm:%s6886]
                %6924 = vst [vmem:[%s6894 + $0x38] sm:%s6886] %v6923
                %v6925 = vld [vmem:[%s6893 + $0x3c] sm:%s6886]
                %6926 = vst [vmem:[%s6894 + $0x3c] sm:%s6886] %v6925
                %v6927 = vld [vmem:[%s6893 + $0x40] sm:%s6886]
                %6928 = vst [vmem:[%s6894 + $0x80] sm:%s6886] %v6927
                %v6929 = vld [vmem:[%s6893 + $0x44] sm:%s6886]
                %6930 = vst [vmem:[%s6894 + $0x84] sm:%s6886] %v6929
                %v6931 = vld [vmem:[%s6893 + $0x48] sm:%s6886]
                %6932 = vst [vmem:[%s6894 + $0x88] sm:%s6886] %v6931
                %v6933 = vld [vmem:[%s6893 + $0x4c] sm:%s6886]
                %6934 = vst [vmem:[%s6894 + $0x8c] sm:%s6886] %v6933
                %v6935 = vld [vmem:[%s6893 + $0x50] sm:%s6886]
                %6936 = vst [vmem:[%s6894 + $0x90] sm:%s6886] %v6935
                %v6937 = vld [vmem:[%s6893 + $0x54] sm:%s6886]
                %6938 = vst [vmem:[%s6894 + $0x94] sm:%s6886] %v6937
                %v6939 = vld [vmem:[%s6893 + $0x58] sm:%s6886]
                %6940 = vst [vmem:[%s6894 + $0x98] sm:%s6886] %v6939
                %v6941 = vld [vmem:[%s6893 + $0x5c] sm:%s6886]
                %6942 = vst [vmem:[%s6894 + $0x9c] sm:%s6886] %v6941
                %v6943 = vld [vmem:[%s6893 + $0x60] sm:%s6886]
                %6944 = vst [vmem:[%s6894 + $0xa0] sm:%s6886] %v6943
                %v6945 = vld [vmem:[%s6893 + $0x64] sm:%s6886]
                %6946 = vst [vmem:[%s6894 + $0xa4] sm:%s6886] %v6945
                %v6947 = vld [vmem:[%s6893 + $0x68] sm:%s6886]
                %6948 = vst [vmem:[%s6894 + $0xa8] sm:%s6886] %v6947
                %v6949 = vld [vmem:[%s6893 + $0x6c] sm:%s6886]
                %6950 = vst [vmem:[%s6894 + $0xac] sm:%s6886] %v6949
                %v6951 = vld [vmem:[%s6893 + $0x70] sm:%s6886]
                %6952 = vst [vmem:[%s6894 + $0xb0] sm:%s6886] %v6951
                %v6953 = vld [vmem:[%s6893 + $0x74] sm:%s6886]
                %6954 = vst [vmem:[%s6894 + $0xb4] sm:%s6886] %v6953
                %v6955 = vld [vmem:[%s6893 + $0x78] sm:%s6886]
                %6956 = vst [vmem:[%s6894 + $0xb8] sm:%s6886] %v6955
                %v6957 = vld [vmem:[%s6893 + $0x7c] sm:%s6886]
                %6958 = vst [vmem:[%s6894 + $0xbc] sm:%s6886] %v6957
              $region147: #{tpu_custom_call.1} parent=141 // loop_footer
                %s6892 = sadd.s32 1, %s6888
              $region148: #{tpu_custom_call.1} parent=141 // loop_footer_branch
                %6887 = sbr.rel target = $region144
              $region149: #{tpu_custom_call.1} parent=141 // loop_exit
                _
            $region142: #{tpu_custom_call.1} parent=133 // pred_fallthru
              _
          $region134: #{tpu_custom_call.1} parent=129 // pred_fallthru
            _
          %7043 = vnop
        $region130: #{tpu_custom_call.1} parent=35 // pred_fallthru
          _
      $region36: #{tpu_custom_call.1} parent=5 // pred_fallthru
        _
      %p7044 = scmp.le.s32.totalorder 2, %s17
      // Predicated region
      $region168: #{tpu_custom_call.1} parent=5 // pred_check
        %p7045 = pneg %p7044
      $region169: #{tpu_custom_call.1} parent=5 // pred_check_branch
        %7047 = sbr.rel (%p7045) target = $region171
      $region170: #{tpu_custom_call.1} parent=5 // pred_region
        %s7048 = ssub.s32 %s17, 2
        // Predicated region
        $region172: #{tpu_custom_call.1} parent=170 // pred_check
          %p7049 = pneg %p151
        $region173: #{tpu_custom_call.1} parent=170 // pred_check_branch
          %7051 = sbr.rel (%p7049) target = $region175
        $region174: #{tpu_custom_call.1} parent=170 // pred_region
          %s7052 = sand.u32 %s136, 1
          %s7053 = sand.u32 %s136, 1
          %s7054 = smul.addr %s7053, 128
          %s7055 = scalar_lea.vmem [#allocation6], %s7054
        $region175: #{tpu_custom_call.1} parent=170 // pred_fallthru
          _
        // Predicated region
        $region176: #{tpu_custom_call.1} parent=170 // pred_check
          %p7056 = pneg %p179
        $region177: #{tpu_custom_call.1} parent=170 // pred_check_branch
          %7058 = sbr.rel (%p7056) target = $region179
        $region178: #{tpu_custom_call.1} parent=170 // pred_region
          %s7059 = sand.u32 %s164, 1
          %s7060 = sand.u32 %s164, 1
          %s7061 = smul.addr %s7060, 128
          %s7062 = scalar_lea.vmem [#allocation7], %s7061
        $region179: #{tpu_custom_call.1} parent=170 // pred_fallthru
          _
        // Predicated region
        $region180: #{tpu_custom_call.1} parent=170 // pred_check
          %p7063 = pneg %p207
        $region181: #{tpu_custom_call.1} parent=170 // pred_check_branch
          %7065 = sbr.rel (%p7063) target = $region183
        $region182: #{tpu_custom_call.1} parent=170 // pred_region
          %s7066 = sand.u32 %s192, 1
          %s7067 = sand.u32 %s192, 1
          %s7068 = smul.addr %s7067, 128
          %s7069 = scalar_lea.vmem [#allocation8], %s7068
        $region183: #{tpu_custom_call.1} parent=170 // pred_fallthru
          _
      $region171: #{tpu_custom_call.1} parent=5 // pred_fallthru
        _
    $region6: #{tpu_custom_call.1} parent=1 // loop_footer
      %s21 = sadd.s32 1, %s17
    $region7: #{tpu_custom_call.1} parent=1 // loop_footer_branch
      %16 = sbr.rel target = $region3
    $region8: #{tpu_custom_call.1} parent=1 // loop_exit
      _
    %7070 = vsyncpa [#allocation3], 1
    %s7071 = scalar_lea.sflag [#allocation3], 1
    %7072 = vsyncpa %s7071, 1
    %7073 = vsyncpa [#allocation5], 1

</llo_original>
